<compile_context>
chip_gen: v7x
topology: tpu7x:2x2x1
jax: 0.10.0
libtpu: 0.0.40
codegen_flags: <defaults>
</compile_context>

<pallas_src>
import jax
import jax.numpy as jnp
from jax import lax
from jax.experimental import pallas as pl
from jax.experimental.pallas import tpu as pltpu


# ---------------------------------------------------------------------------
# Wrapper-side weight preprocessing (tiny, built once per parameter set).
# ---------------------------------------------------------------------------
def _toeplitz2d(w_hwio, h_in, w_in, h_out, w_out):
    """Expand a (kh, kw, Cin, Cout) valid-conv weight into a dense matrix.

    Row index    = h  * (w_in  * Cin ) + w  * Cin  + ci   (flat NHWC input)
    Column index = oh * (w_out * Cout) + ow * Cout + co   (flat NHWC output)
    M[row, col]  = w[kh, kw, ci, co]  iff  h == oh + kh and w == ow + kw.

    Structurally-zero entries trade redundant MACs for a single lane-dense
    MXU matmul per conv -- the right trade for small feature maps.
    """
    kh_sz, kw_sz, cin, cout = w_hwio.shape
    dtype = w_hwio.dtype
    t = jnp.zeros((h_in, w_in, cin, h_out, w_out, cout), dtype)
    for kh in range(kh_sz):
        band_h = jnp.eye(h_in, h_out, k=-kh, dtype=dtype)       # h == oh + kh
        for kw in range(kw_sz):
            band_w = jnp.eye(w_in, w_out, k=-kw, dtype=dtype)   # w == ow + kw
            t = t + (band_h[:, None, None, :, None, None]
                     * band_w[None, :, None, None, :, None]
                     * w_hwio[kh, kw][None, None, :, None, None, :])
    return t.reshape(h_in * w_in * cin, h_out * w_out * cout)


# ---------------------------------------------------------------------------
# Kernel: two fused conv+bias+ReLU stages as flat MXU matmuls.
# ---------------------------------------------------------------------------
def _res_conv_block_kernel(res_ref, x_ref, t0r_ref, t0x_ref, b0_ref,
                           t1_ref, b1_ref, o_ref):
    # res_ref (B, H*W*Cr) | x_ref (B, H*W*Cx)            -- compute dtype
    # t0r (H*W*Cr, N0), t0x (H*W*Cx, N0), t1 (N0, N1)    -- compute dtype
    # b0 (1, N0), b1 (1, N1)                             -- float32
    # o_ref (B, N1)                                      -- float32
    h0 = jnp.dot(res_ref[...], t0r_ref[...],
                 preferred_element_type=jnp.float32)
    h0 = h0 + jnp.dot(x_ref[...], t0x_ref[...],
                      preferred_element_type=jnp.float32)
    h0 = jnp.maximum(h0 + b0_ref[...], 0.0)              # f32 bias + ReLU
    h1 = jnp.dot(h0.astype(t1_ref.dtype), t1_ref[...],
                 preferred_element_type=jnp.float32)
    h1 = jnp.maximum(h1 + b1_ref[...], 0.0)
    o_ref[...] = h1.astype(o_ref.dtype)


# ---------------------------------------------------------------------------
# Generation-aware batch tiling.
# ---------------------------------------------------------------------------
def _tensorcores_per_chip():
    """Perf heuristic only (any answer is functionally correct)."""
    try:
        kind = jax.devices()[0].device_kind.lower()
    except Exception:
        return 1
    if "lite" in kind or "v5e" in kind or "v6" in kind:
        return 1                      # v5e / v6e: 1 TensorCore per chip
    if "v4" in kind or "v5" in kind or "7" in kind:
        return 2                      # v4 / v5p megacore, v7x: 2 TCs
    return 1


def _pick_batch_tile(n, bytes_per_image_blocks, bytes_per_image_temps, *,
                     num_cores, vmem_budget_bytes):
    """Largest batch tile B (divisor of n) that fits the VMEM budget.

    Only the pallas-managed input/output blocks are double-buffered; the
    kernel temporaries (h0/h1) are single-instance.  On 1-TC chips a single
    grid step (B = n) minimizes fixed per-step overhead; on 2-TC chips keep
    >= num_cores "parallel" steps but only while the (B, K) batch block stays
    sublane-aligned (B % 8 == 0) or full (B == n).
    """
    def fits(b):
        return (2 * b * bytes_per_image_blocks
                + b * bytes_per_image_temps) <= vmem_budget_bytes

    divisors = [d for d in range(1, n + 1) if n % d == 0]
    if num_cores > 1:
        cand = [b for b in divisors
                if (b % 8 == 0 or b == n) and n // b >= num_cores and fits(b)]
        if cand:
            return max(cand)
    cand = [b for b in divisors if fits(b)]
    return max(cand) if cand else 1


# ---------------------------------------------------------------------------
# Public entry points.
# ---------------------------------------------------------------------------
def res_conv_block_nhwc(x_nhwc, res_nhwc, w0, b0, w1, b1, *,
                        compute_dtype=jnp.bfloat16, batch_tile=None):
    """ResConvBlock forward, NHWC in / NHWC out (UNet-native layout).

    x_nhwc: (N, H, W, Cx), res_nhwc: (N, Hr, Wr, Cr);
    w0: (3, 3, Cr+Cx, Cmid), b0: (Cmid,); w1: (3, 3, Cmid, Cout), b1: (Cout,).
    """
    N, H, W, Cx = x_nhwc.shape
    _, Hr, Wr, Cr = res_nhwc.shape
    Cin = Cr + Cx
    assert w0.shape[:3] == (3, 3, Cin), (w0.shape, Cin)
    Cmid, Cout = w0.shape[3], w1.shape[3]
    Ho0, Wo0 = H - 2, W - 2
    Ho1, Wo1 = Ho0 - 2, Wo0 - 2
    out_dtype = x_nhwc.dtype

    # torchvision center_crop semantics.
    top = int(round((Hr - H) / 2.0))
    left = int(round((Wr - W) / 2.0))
    res_crop = res_nhwc[:, top:top + H, left:left + W, :]

    # Flat lane-dense slabs; the channel concat is never materialized.
    r2d = res_crop.reshape(N, H * W * Cr).astype(compute_dtype)
    x2d = x_nhwc.reshape(N, H * W * Cx).astype(compute_dtype)

    # Full 2-D Toeplitz weights (built once, wrapper-side, tiny at this size).
    K0r, K0x = H * W * Cr, H * W * Cx
    N0 = Ho0 * Wo0 * Cmid
    N1 = Ho1 * Wo1 * Cout
    t0r = _toeplitz2d(w0[:, :, :Cr, :], H, W, Ho0, Wo0).astype(compute_dtype)
    t0x = _toeplitz2d(w0[:, :, Cr:, :], H, W, Ho0, Wo0).astype(compute_dtype)
    t1 = _toeplitz2d(w1, Ho0, Wo0, Ho1, Wo1).astype(compute_dtype)
    b0f = jnp.tile(b0.astype(jnp.float32), Ho0 * Wo0).reshape(1, N0)
    b1f = jnp.tile(b1.astype(jnp.float32), Ho1 * Wo1).reshape(1, N1)

    # Generation-aware batch tile & VMEM limits.
    num_cores = _tensorcores_per_chip()
    if num_cores > 1:            # v7x: 64 MiB physical VMEM per TC
        vmem_budget, vmem_limit = 20 << 20, 32 << 20
    else:                        # v5e / v6e: 128 MiB physical VMEM
        vmem_budget, vmem_limit = 48 << 20, 64 << 20
    cd = jnp.dtype(compute_dtype).itemsize
    blocks_per_image = cd * (K0r + K0x) + 4 * N1          # in/out blocks (2x-buffered)
    temps_per_image = 4 * N0 + cd * N0 + 4 * N1           # h0(f32)+h0(cd)+h1(f32)
    weight_bytes = cd * ((K0r + K0x) * N0 + N0 * N1) + 4 * (N0 + N1)
    vmem_budget = max(vmem_budget - 2 * weight_bytes, 1 << 20)
    B = batch_tile if batch_tile is not None else _pick_batch_tile(
        N, blocks_per_image, temps_per_image,
        num_cores=num_cores, vmem_budget_bytes=vmem_budget)
    assert N % B == 0, (N, B)
    grid = (N // B,)

    cost = pl.CostEstimate(
        flops=2 * N * ((K0r + K0x) * N0 + N0 * N1),
        transcendentals=0,
        bytes_accessed=N * blocks_per_image + weight_bytes,
    )

    # NOTE: the constant weight/bias operands could be single-buffered via
    # pipeline_mode=pl.Buffered(1); left at the default (grid is 1-2 steps at
    # these sizes, so the redundant double-buffer costs almost nothing).
    out2d = pl.pallas_call(
        _res_conv_block_kernel,
        out_shape=jax.ShapeDtypeStruct((N, N1), out_dtype),
        grid_spec=pltpu.PrefetchScalarGridSpec(
            num_scalar_prefetch=0,
            grid=grid,
            in_specs=[
                pl.BlockSpec((B, K0r), lambda n: (n, 0)),
                pl.BlockSpec((B, K0x), lambda n: (n, 0)),
                pl.BlockSpec((K0r, N0), lambda n: (0, 0)),
                pl.BlockSpec((K0x, N0), lambda n: (0, 0)),
                pl.BlockSpec((1, N0), lambda n: (0, 0)),
                pl.BlockSpec((N0, N1), lambda n: (0, 0)),
                pl.BlockSpec((1, N1), lambda n: (0, 0)),
            ],
            out_specs=pl.BlockSpec((B, N1), lambda n: (n, 0)),
        ),
        compiler_params=pltpu.CompilerParams(
            dimension_semantics=("parallel",),
            vmem_limit_bytes=vmem_limit,
        ),
        cost_estimate=cost,
    )(r2d, x2d, t0r, t0x, b0f, t1, b1f)

    return out2d.reshape(N, Ho1, Wo1, Cout)


def res_conv_block_nchw(x_nchw, res_nchw, w0, b0, w1, b1, **kw):
    """PyTorch-layout drop-in (adds NCHW<->NHWC layout glue around the kernel).

    Prefer res_conv_block_nhwc and keep the whole UNet in NHWC: each transpose
    here is a full extra HBM read+write of the activation.
    """
    x = jnp.transpose(x_nchw, (0, 2, 3, 1))
    r = jnp.transpose(res_nchw, (0, 2, 3, 1))
    out = res_conv_block_nhwc(x, r, w0, b0, w1, b1, **kw)
    return jnp.transpose(out, (0, 3, 1, 2))


# ---------------------------------------------------------------------------
# Pure-JAX reference (lax.conv) for correctness checking.
# ---------------------------------------------------------------------------
def _reference_forward_nhwc(x, res, w0, b0, w1, b1):
    H, W = x.shape[1:3]
    Hr, Wr = res.shape[1:3]
    top = int(round((Hr - H) / 2.0))
    left = int(round((Wr - W) / 2.0))
    rc = res[:, top:top + H, left:left + W, :]
    z = jnp.concatenate([rc, x], axis=-1)
    dn = ("NHWC", "HWIO", "NHWC")
    z = lax.conv_general_dilated(z, w0, (1, 1), "VALID", dimension_numbers=dn)
    z = jnp.maximum(z + b0, 0.0)
    z = lax.conv_general_dilated(z, w1, (1, 1), "VALID", dimension_numbers=dn)
    z = jnp.maximum(z + b1, 0.0)
    return z


if __name__ == "__main__":
    key = jax.random.PRNGKey(0)
    k_x, k_r, k_w0, k_b0, k_w1, k_b1 = jax.random.split(key, 6)

    # ResConvBlock(in_channels=4, out_channels=4):
    # decoder feature x has 2 channels, encoder skip res has 2 -> concat = 4.
    N, Cx, Cr = 2, 2, 2
    Cin, Cout = Cx + Cr, 4
    H, W = 16, 16            # decoder feature map
    Hr, Wr = 20, 20          # encoder skip (center-cropped to 16x16)

    x = jax.random.normal(k_x, (N, H, W, Cx), jnp.float32)
    res = jax.random.normal(k_r, (N, Hr, Wr, Cr), jnp.float32)
    w0 = jax.random.normal(k_w0, (3, 3, Cin, Cout), jnp.float32) * 0.1
    b0 = jax.random.normal(k_b0, (Cout,), jnp.float32) * 0.1
    w1 = jax.random.normal(k_w1, (3, 3, Cout, Cout), jnp.float32) * 0.1
    b1 = jax.random.normal(k_b1, (Cout,), jnp.float32) * 0.1

    ref = _reference_forward_nhwc(x, res, w0, b0, w1, b1)

    # f32 path: exact parity with the PyTorch / torchvision reference.
    out_f32 = jax.block_until_ready(
        res_conv_block_nhwc(x, res, w0, b0, w1, b1,
                            compute_dtype=jnp.float32))
    assert out_f32.shape == (N, H - 4, W - 4, Cout), out_f32.shape
    assert jnp.allclose(out_f32, ref, atol=1e-4, rtol=1e-4), "f32 mismatch"

    # bf16-operand / f32-accumulation path (production setting): loose tol.
    out_bf16 = jax.block_until_ready(
        res_conv_block_nhwc(x, res, w0, b0, w1, b1,
                            compute_dtype=jnp.bfloat16))
    assert jnp.allclose(out_bf16.astype(jnp.float32), ref,
                        atol=8e-2, rtol=8e-2), "bf16 mismatch"

    # NCHW drop-in wrapper (PyTorch layout) parity check.
    out_nchw = jax.block_until_ready(
        res_conv_block_nchw(jnp.transpose(x, (0, 3, 1, 2)),
                            jnp.transpose(res, (0, 3, 1, 2)),
                            w0, b0, w1, b1, compute_dtype=jnp.float32))
    assert jnp.allclose(out_nchw, jnp.transpose(ref, (0, 3, 1, 2)),
                        atol=1e-4, rtol=1e-4), "nchw wrapper mismatch"

    print("KERNEL_OK")
</pallas_src>

<mosaic_0001>
module attributes {stable_mosaic.version = 11 : i64} {
  func.func @_res_conv_block_kernel(%arg0: i32, %arg1: memref<2x512xf32, #tpu.memory_space<vmem>>, %arg2: memref<2x512xf32, #tpu.memory_space<vmem>>, %arg3: memref<512x784xf32, #tpu.memory_space<vmem>>, %arg4: memref<512x784xf32, #tpu.memory_space<vmem>>, %arg5: memref<1x784xf32, #tpu.memory_space<vmem>>, %arg6: memref<784x576xf32, #tpu.memory_space<vmem>>, %arg7: memref<1x576xf32, #tpu.memory_space<vmem>>, %arg8: memref<2x576xf32, #tpu.memory_space<vmem>>) attributes {dimension_semantics = [#tpu.dimension_semantics<parallel>], iteration_bounds = array<i64: 1>, scalar_prefetch = 0 : i64, scratch_operands = 0 : i64, tpu.core_type = #tpu.core_type<tc>, window_params = [{transform_indices = @transform_0, window_bounds = array<i64: 2, 512>}, {transform_indices = @transform_1, window_bounds = array<i64: 2, 512>}, {pipeline_mode = #tpu.pipeline_mode<synchronous>, transform_indices = @transform_2, window_bounds = array<i64: 512, 784>}, {pipeline_mode = #tpu.pipeline_mode<synchronous>, transform_indices = @transform_3, window_bounds = array<i64: 512, 784>}, {pipeline_mode = #tpu.pipeline_mode<synchronous>, transform_indices = @transform_4, window_bounds = array<i64: 1, 784>}, {pipeline_mode = #tpu.pipeline_mode<synchronous>, transform_indices = @transform_5, window_bounds = array<i64: 784, 576>}, {pipeline_mode = #tpu.pipeline_mode<synchronous>, transform_indices = @transform_6, window_bounds = array<i64: 1, 576>}, {transform_indices = @transform_7, window_bounds = array<i64: 2, 576>}]} {
    %c0 = arith.constant 0 : index
    %c0_0 = arith.constant 0 : index
    %0 = vector.load %arg1[%c0, %c0_0] : memref<2x512xf32, #tpu.memory_space<vmem>>, vector<2x512xf32>
    %c0_1 = arith.constant 0 : index
    %c0_2 = arith.constant 0 : index
    %1 = vector.load %arg3[%c0_1, %c0_2] : memref<512x784xf32, #tpu.memory_space<vmem>>, vector<512x784xf32>
    %cst = arith.constant dense<0.000000e+00> : vector<2x784xf32>
    %2 = tpu.matmul %0, %1, %cst {dimension_numbers = #tpu.dot_dimension_numbers<[1], [0], [0], [1], [0, 0, 1, 1], [], []>} : vector<2x512xf32>, vector<512x784xf32>, vector<2x784xf32> -> vector<2x784xf32>
    %c0_3 = arith.constant 0 : index
    %c0_4 = arith.constant 0 : index
    %3 = vector.load %arg2[%c0_3, %c0_4] : memref<2x512xf32, #tpu.memory_space<vmem>>, vector<2x512xf32>
    %c0_5 = arith.constant 0 : index
    %c0_6 = arith.constant 0 : index
    %4 = vector.load %arg4[%c0_5, %c0_6] : memref<512x784xf32, #tpu.memory_space<vmem>>, vector<512x784xf32>
    %cst_7 = arith.constant dense<0.000000e+00> : vector<2x784xf32>
    %5 = tpu.matmul %3, %4, %cst_7 {dimension_numbers = #tpu.dot_dimension_numbers<[1], [0], [0], [1], [0, 0, 1, 1], [], []>} : vector<2x512xf32>, vector<512x784xf32>, vector<2x784xf32> -> vector<2x784xf32>
    %6 = arith.addf %2, %5 : vector<2x784xf32>
    %c0_8 = arith.constant 0 : index
    %c0_9 = arith.constant 0 : index
    %7 = vector.load %arg5[%c0_8, %c0_9] : memref<1x784xf32, #tpu.memory_space<vmem>>, vector<1x784xf32>
    %8 = vector.broadcast %7 : vector<1x784xf32> to vector<2x784xf32>
    %9 = arith.addf %6, %8 : vector<2x784xf32>
    %cst_10 = arith.constant 0.000000e+00 : f32
    %10 = vector.broadcast %cst_10 : f32 to vector<2x784xf32>
    %11 = arith.maximumf %9, %10 : vector<2x784xf32>
    %c0_11 = arith.constant 0 : index
    %c0_12 = arith.constant 0 : index
    %12 = vector.load %arg6[%c0_11, %c0_12] : memref<784x576xf32, #tpu.memory_space<vmem>>, vector<784x576xf32>
    %cst_13 = arith.constant dense<0.000000e+00> : vector<2x576xf32>
    %13 = tpu.matmul %11, %12, %cst_13 {dimension_numbers = #tpu.dot_dimension_numbers<[1], [0], [0], [1], [0, 0, 1, 1], [], []>} : vector<2x784xf32>, vector<784x576xf32>, vector<2x576xf32> -> vector<2x576xf32>
    %c0_14 = arith.constant 0 : index
    %c0_15 = arith.constant 0 : index
    %14 = vector.load %arg7[%c0_14, %c0_15] : memref<1x576xf32, #tpu.memory_space<vmem>>, vector<1x576xf32>
    %15 = vector.broadcast %14 : vector<1x576xf32> to vector<2x576xf32>
    %16 = arith.addf %13, %15 : vector<2x576xf32>
    %cst_16 = arith.constant 0.000000e+00 : f32
    %17 = vector.broadcast %cst_16 : f32 to vector<2x576xf32>
    %18 = arith.maximumf %16, %17 : vector<2x576xf32>
    %c0_17 = arith.constant 0 : index
    %c0_18 = arith.constant 0 : index
    %19 = vector.load %arg8[%c0_17, %c0_18] : memref<2x576xf32, #tpu.memory_space<vmem>>, vector<2x576xf32>
    tpu.vector_store %arg8[%c0_17, %c0_18], %18 {strides = array<i32>} : memref<2x576xf32, #tpu.memory_space<vmem>>, vector<2x576xf32>,
    return
  }
  func.func @transform_0(%arg0: i32) -> (i32, i32) {
    %c0_i32 = arith.constant 0 : i32
    %c0_i32_0 = arith.constant 0 : i32
    return %arg0, %c0_i32 : i32, i32
  }
  func.func @transform_1(%arg0: i32) -> (i32, i32) {
    %c0_i32 = arith.constant 0 : i32
    %c0_i32_0 = arith.constant 0 : i32
    return %arg0, %c0_i32 : i32, i32
  }
  func.func @transform_2(%arg0: i32) -> (i32, i32) {
    %c0_i32 = arith.constant 0 : i32
    %c0_i32_0 = arith.constant 0 : i32
    %c0_i32_1 = arith.constant 0 : i32
    return %c0_i32, %c0_i32_0 : i32, i32
  }
  func.func @transform_3(%arg0: i32) -> (i32, i32) {
    %c0_i32 = arith.constant 0 : i32
    %c0_i32_0 = arith.constant 0 : i32
    %c0_i32_1 = arith.constant 0 : i32
    return %c0_i32, %c0_i32_0 : i32, i32
  }
  func.func @transform_4(%arg0: i32) -> (i32, i32) {
    %c0_i32 = arith.constant 0 : i32
    %c0_i32_0 = arith.constant 0 : i32
    %c0_i32_1 = arith.constant 0 : i32
    return %c0_i32, %c0_i32_0 : i32, i32
  }
  func.func @transform_5(%arg0: i32) -> (i32, i32) {
    %c0_i32 = arith.constant 0 : i32
    %c0_i32_0 = arith.constant 0 : i32
    %c0_i32_1 = arith.constant 0 : i32
    return %c0_i32, %c0_i32_0 : i32, i32
  }
  func.func @transform_6(%arg0: i32) -> (i32, i32) {
    %c0_i32 = arith.constant 0 : i32
    %c0_i32_0 = arith.constant 0 : i32
    %c0_i32_1 = arith.constant 0 : i32
    return %c0_i32, %c0_i32_0 : i32, i32
  }
  func.func @transform_7(%arg0: i32) -> (i32, i32) {
    %c0_i32 = arith.constant 0 : i32
    %c0_i32_0 = arith.constant 0 : i32
    return %arg0, %c0_i32 : i32, i32
  }
}

</mosaic_0001>

<llo_original>
// kernel: tpu_custom_call.1
$region0: #{tpu_custom_call.1}
  #allocation0 [shape = 'u32[]', space=smem, size = 0x4, offset = 0x4, fixed_abs, tag = 'smem constant byte address 0x4 - core index']
  #allocation1 [shape = 'u32[144,128]{1,0:T(1,128)}', space=vmem, size = 0x12000, scoped, tag = 'internal scratch']
  %s0 = inlined_call_operand.hbm [shape: f32[2,512], index: 0, kind: input, shape index: {}]
  %s1 = inlined_call_operand.hbm [shape: f32[2,512], index: 1, kind: input, shape index: {}]
  %s2 = inlined_call_operand.hbm [shape: f32[512,784], index: 2, kind: input, shape index: {}]
  %s3 = inlined_call_operand.hbm [shape: f32[512,784], index: 3, kind: input, shape index: {}]
  %s4 = inlined_call_operand.hbm [shape: f32[1,784], index: 4, kind: input, shape index: {}]
  %s5 = inlined_call_operand.hbm [shape: f32[784,576], index: 5, kind: input, shape index: {}]
  %s6 = inlined_call_operand.hbm [shape: f32[1,576], index: 6, kind: input, shape index: {}]
  %s7 = inlined_call_operand.hbm [shape: f32[2,576], index: 7, kind: output, shape index: {}]
  %s8 = sld [smem:[#allocation0]]
  $region66: #{tpu_custom_call.1} parent=0
    _
  %s10 = ssub.s32 1, %s8
  %s11 = scalar_select 0, %s10, %s8
  $region1: #{tpu_custom_call.1} parent=0
    #allocation2 [shape = 'u8[4096]{0}', space=vmem, size = 0x1000, scoped, tag = 'input window, operand 0, single buffered']
    #allocation3 [shape = 's32[1]{0}', space=sflag, size = 0x4, scoped, tag = 'scoped memory for tpu_custom_call.1']
    #allocation4 [shape = 's32[1]{0}', space=sflag, size = 0x4, scoped, tag = 'scoped memory for tpu_custom_call.1']
    #allocation5 [shape = 'u8[4096]{0}', space=vmem, size = 0x1000, scoped, tag = 'input window, operand 1, single buffered']
    #allocation6 [shape = 's32[1]{0}', space=sflag, size = 0x4, scoped, tag = 'scoped memory for tpu_custom_call.1']
    #allocation7 [shape = 'u8[1835008]{0}', space=vmem, size = 0x1c0000, scoped, tag = 'input window, operand 2, single buffered']
    #allocation8 [shape = 'u8[1835008]{0}', space=vmem, size = 0x1c0000, scoped, tag = 'input window, operand 3, single buffered']
    #allocation9 [shape = 's32[1]{0}', space=sflag, size = 0x4, scoped, tag = 'scoped memory for tpu_custom_call.1']
    #allocation10 [shape = 'u8[3584]{0}', space=vmem, size = 0x1000, scoped, tag = 'input window, operand 4, single buffered']
    #allocation11 [shape = 'u8[2007040]{0}', space=vmem, size = 0x1ea000, scoped, tag = 'input window, operand 5, single buffered']
    #allocation12 [shape = 's32[1]{0}', space=sflag, size = 0x4, scoped, tag = 'scoped memory for tpu_custom_call.1']
    #allocation13 [shape = 'u8[2560]{0}', space=vmem, size = 0xc00, scoped, tag = 'input window, operand 6, single buffered']
    #allocation14 [shape = 'u8[5120]{0}', space=vmem, size = 0x1400, scoped, tag = 'output window, operand 0, single buffered']
    %12 = vsyncpa [#allocation3], 0
    %13 = vsyncpa [#allocation6], 0
    %14 = vsyncpa [#allocation9], 0
    %15 = vsyncpa [#allocation12], 0
    %16 = vsyncpa [#allocation4], 0
    // Predicated region
    $region2: #{tpu_custom_call.1} parent=1 // pred_check
      _
    $region3: #{tpu_custom_call.1} parent=1 // pred_check_branch
      %18 = sbr.rel (0) target = $region5
    $region4: #{tpu_custom_call.1} parent=1 // pred_region
      %s20 = ssub.s32 128, 128
      %21 = vsyncadd [#allocation3], %s20
      %s23 = sshll.u32 [#allocation2], 4
      %s24 = int_to_ptr.vmem [resolvable:$true] %s23
      %26 = dma.hbm_to_vmem [thread:$0]  %s0, 128, %s24, [#allocation3]
    $region5: #{tpu_custom_call.1} parent=1 // pred_fallthru
      _
    // Predicated region
    $region6: #{tpu_custom_call.1} parent=1 // pred_check
      _
    $region7: #{tpu_custom_call.1} parent=1 // pred_check_branch
      %28 = sbr.rel (0) target = $region9
    $region8: #{tpu_custom_call.1} parent=1 // pred_region
      %s30 = ssub.s32 128, 128
      %31 = vsyncadd [#allocation6], %s30
      %s33 = sshll.u32 [#allocation5], 4
      %s34 = int_to_ptr.vmem [resolvable:$true] %s33
      %36 = dma.hbm_to_vmem [thread:$0]  %s1, 128, %s34, [#allocation6]
    $region9: #{tpu_custom_call.1} parent=1 // pred_fallthru
      _
    // Predicated region
    $region10: #{tpu_custom_call.1} parent=1 // pred_check
      _
    $region11: #{tpu_custom_call.1} parent=1 // pred_check_branch
      %38 = sbr.rel (0) target = $region13
    $region12: #{tpu_custom_call.1} parent=1 // pred_region
      %s40 = ssub.s32 57344, 57344
      %41 = vsyncadd [#allocation6], %s40
      %s42 = sshll.u32 [#allocation7], 4
      %s43 = int_to_ptr.vmem [resolvable:$true] %s42
      %48 = dma.hbm_to_vmem [thread:$0]  %s2, 57344, %s43, [#allocation6], 896, 896, 56
    $region13: #{tpu_custom_call.1} parent=1 // pred_fallthru
      _
    // Predicated region
    $region14: #{tpu_custom_call.1} parent=1 // pred_check
      _
    $region15: #{tpu_custom_call.1} parent=1 // pred_check_branch
      %50 = sbr.rel (0) target = $region17
    $region16: #{tpu_custom_call.1} parent=1 // pred_region
      %s52 = ssub.s32 57344, 57344
      %53 = vsyncadd [#allocation9], %s52
      %s54 = sshll.u32 [#allocation8], 4
      %s55 = int_to_ptr.vmem [resolvable:$true] %s54
      %60 = dma.hbm_to_vmem [thread:$0]  %s3, 57344, %s55, [#allocation9], 896, 896, 56
    $region17: #{tpu_custom_call.1} parent=1 // pred_fallthru
      _
    // Predicated region
    $region18: #{tpu_custom_call.1} parent=1 // pred_check
      _
    $region19: #{tpu_custom_call.1} parent=1 // pred_check_branch
      %62 = sbr.rel (0) target = $region21
    $region20: #{tpu_custom_call.1} parent=1 // pred_region
      %s64 = ssub.s32 112, 112
      %65 = vsyncadd [#allocation9], %s64
      %s67 = sshll.u32 [#allocation10], 4
      %s68 = int_to_ptr.vmem [resolvable:$true] %s67
      %70 = dma.hbm_to_vmem [thread:$0]  %s4, 112, %s68, [#allocation9]
    $region21: #{tpu_custom_call.1} parent=1 // pred_fallthru
      _
    // Predicated region
    $region22: #{tpu_custom_call.1} parent=1 // pred_check
      _
    $region23: #{tpu_custom_call.1} parent=1 // pred_check_branch
      %72 = sbr.rel (0) target = $region25
    $region24: #{tpu_custom_call.1} parent=1 // pred_region
      %s74 = ssub.s32 62720, 62720
      %75 = vsyncadd [#allocation12], %s74
      %s76 = sshll.u32 [#allocation11], 4
      %s77 = int_to_ptr.vmem [resolvable:$true] %s76
      %82 = dma.hbm_to_vmem [thread:$0]  %s5, 62720, %s77, [#allocation12], 640, 640, 40
    $region25: #{tpu_custom_call.1} parent=1 // pred_fallthru
      _
    // Predicated region
    $region26: #{tpu_custom_call.1} parent=1 // pred_check
      _
    $region27: #{tpu_custom_call.1} parent=1 // pred_check_branch
      %84 = sbr.rel (0) target = $region29
    $region28: #{tpu_custom_call.1} parent=1 // pred_region
      %s86 = ssub.s32 80, 80
      %87 = vsyncadd [#allocation12], %s86
      %s89 = sshll.u32 [#allocation13], 4
      %s90 = int_to_ptr.vmem [resolvable:$true] %s89
      %92 = dma.hbm_to_vmem [thread:$0]  %s6, 80, %s90, [#allocation12]
    $region29: #{tpu_custom_call.1} parent=1 // pred_fallthru
      _
    // Predicated region
    $region30: #{tpu_custom_call.1} parent=1 // pred_check
      _
    $region31: #{tpu_custom_call.1} parent=1 // pred_check_branch
      %94 = sbr.rel (0) target = $region33
    $region32: #{tpu_custom_call.1} parent=1 // pred_region
      %95 = dma.done [#allocation3], 128
    $region33: #{tpu_custom_call.1} parent=1 // pred_fallthru
      _
    // Predicated region
    $region34: #{tpu_custom_call.1} parent=1 // pred_check
      _
    $region35: #{tpu_custom_call.1} parent=1 // pred_check_branch
      %97 = sbr.rel (0) target = $region37
    $region36: #{tpu_custom_call.1} parent=1 // pred_region
      %98 = dma.done [#allocation6], 128
    $region37: #{tpu_custom_call.1} parent=1 // pred_fallthru
      _
    // Predicated region
    $region38: #{tpu_custom_call.1} parent=1 // pred_check
      _
    $region39: #{tpu_custom_call.1} parent=1 // pred_check_branch
      %100 = sbr.rel (0) target = $region41
    $region40: #{tpu_custom_call.1} parent=1 // pred_region
      %101 = dma.done [#allocation6], 57344
    $region41: #{tpu_custom_call.1} parent=1 // pred_fallthru
      _
    // Predicated region
    $region42: #{tpu_custom_call.1} parent=1 // pred_check
      _
    $region43: #{tpu_custom_call.1} parent=1 // pred_check_branch
      %103 = sbr.rel (0) target = $region45
    $region44: #{tpu_custom_call.1} parent=1 // pred_region
      %104 = dma.done [#allocation9], 57344
    $region45: #{tpu_custom_call.1} parent=1 // pred_fallthru
      _
    // Predicated region
    $region46: #{tpu_custom_call.1} parent=1 // pred_check
      _
    $region47: #{tpu_custom_call.1} parent=1 // pred_check_branch
      %106 = sbr.rel (0) target = $region49
    $region48: #{tpu_custom_call.1} parent=1 // pred_region
      %107 = dma.done [#allocation9], 112
    $region49: #{tpu_custom_call.1} parent=1 // pred_fallthru
      _
    // Predicated region
    $region50: #{tpu_custom_call.1} parent=1 // pred_check
      _
    $region51: #{tpu_custom_call.1} parent=1 // pred_check_branch
      %109 = sbr.rel (0) target = $region53
    $region52: #{tpu_custom_call.1} parent=1 // pred_region
      %110 = dma.done [#allocation12], 62720
    $region53: #{tpu_custom_call.1} parent=1 // pred_fallthru
      _
    // Predicated region
    $region54: #{tpu_custom_call.1} parent=1 // pred_check
      _
    $region55: #{tpu_custom_call.1} parent=1 // pred_check_branch
      %112 = sbr.rel (0) target = $region57
    $region56: #{tpu_custom_call.1} parent=1 // pred_region
      %113 = dma.done [#allocation12], 80
    $region57: #{tpu_custom_call.1} parent=1 // pred_fallthru
      _
    %v114 = vld [vmem:[#allocation2] sm:$0xff]
    %v115 = vld [vmem:[#allocation7] sm:$0xff]
    %v116 = vld [vmem:[#allocation7 + $0x8] sm:$0xff]
    %v117 = vld [vmem:[#allocation7 + $0x10] sm:$0xff]
    %v118 = vld [vmem:[#allocation7 + $0x18] sm:$0xff]
    %v119 = vld [vmem:[#allocation7 + $0x20] sm:$0xff]
    %v120 = vld [vmem:[#allocation7 + $0x28] sm:$0xff]
    %v121 = vld [vmem:[#allocation7 + $0x30] sm:$0xff]
    %v122 = vld [vmem:[#allocation7 + $0x38] sm:$0xff]
    %v123 = vld [vmem:[#allocation7 + $0x40] sm:$0xff]
    %v124 = vld [vmem:[#allocation7 + $0x48] sm:$0xff]
    %v125 = vld [vmem:[#allocation7 + $0x50] sm:$0xff]
    %v126 = vld [vmem:[#allocation7 + $0x58] sm:$0xff]
    %v127 = vld [vmem:[#allocation7 + $0x60] sm:$0xff]
    %v128 = vld [vmem:[#allocation7 + $0x68] sm:$0xff]
    %v129 = vld [vmem:[#allocation7 + $0x70] sm:$0xff]
    %v130 = vld [vmem:[#allocation7 + $0x78] sm:$0xff]
    %v131 = vld [vmem:[#allocation7 + $0x80] sm:$0xff]
    %v132 = vld [vmem:[#allocation7 + $0x88] sm:$0xff]
    %v133 = vld [vmem:[#allocation7 + $0x90] sm:$0xff]
    %v134 = vld [vmem:[#allocation7 + $0x98] sm:$0xff]
    %v135 = vld [vmem:[#allocation7 + $0xa0] sm:$0xff]
    %v136 = vld [vmem:[#allocation7 + $0xa8] sm:$0xff]
    %v137 = vld [vmem:[#allocation7 + $0xb0] sm:$0xff]
    %v138 = vld [vmem:[#allocation7 + $0xb8] sm:$0xff]
    %v139 = vld [vmem:[#allocation7 + $0xc0] sm:$0xff]
    %v140 = vld [vmem:[#allocation7 + $0xc8] sm:$0xff]
    %v141 = vld [vmem:[#allocation7 + $0xd0] sm:$0xff]
    %v142 = vld [vmem:[#allocation7 + $0xd8] sm:$0xff]
    %v143 = vld [vmem:[#allocation7 + $0xe0] sm:$0xff]
    %v144 = vld [vmem:[#allocation7 + $0xe8] sm:$0xff]
    %v145 = vld [vmem:[#allocation7 + $0xf0] sm:$0xff]
    %v146 = vld [vmem:[#allocation7 + $0xf8] sm:$0xff]
    %v147 = vld [vmem:[#allocation7 + $0x100] sm:$0xff]
    %v148 = vld [vmem:[#allocation7 + $0x108] sm:$0xff]
    %v149 = vld [vmem:[#allocation7 + $0x110] sm:$0xff]
    %v150 = vld [vmem:[#allocation7 + $0x118] sm:$0xff]
    %v151 = vld [vmem:[#allocation7 + $0x120] sm:$0xff]
    %v152 = vld [vmem:[#allocation7 + $0x128] sm:$0xff]
    %v153 = vld [vmem:[#allocation7 + $0x130] sm:$0xff]
    %v154 = vld [vmem:[#allocation7 + $0x138] sm:$0xff]
    %v155 = vld [vmem:[#allocation7 + $0x140] sm:$0xff]
    %v156 = vld [vmem:[#allocation7 + $0x148] sm:$0xff]
    %v157 = vld [vmem:[#allocation7 + $0x150] sm:$0xff]
    %v158 = vld [vmem:[#allocation7 + $0x158] sm:$0xff]
    %v159 = vld [vmem:[#allocation7 + $0x160] sm:$0xff]
    %v160 = vld [vmem:[#allocation7 + $0x168] sm:$0xff]
    %v161 = vld [vmem:[#allocation7 + $0x170] sm:$0xff]
    %v162 = vld [vmem:[#allocation7 + $0x178] sm:$0xff]
    %v163 = vld [vmem:[#allocation7 + $0x180] sm:$0xff]
    %v164 = vld [vmem:[#allocation7 + $0x188] sm:$0xff]
    %v165 = vld [vmem:[#allocation7 + $0x190] sm:$0xff]
    %v166 = vld [vmem:[#allocation7 + $0x198] sm:$0xff]
    %v167 = vld [vmem:[#allocation7 + $0x1a0] sm:$0xff]
    %v168 = vld [vmem:[#allocation7 + $0x1a8] sm:$0xff]
    %v169 = vld [vmem:[#allocation7 + $0x1b0] sm:$0xff]
    %v170 = vld [vmem:[#allocation7 + $0x1b8] sm:$0xff]
    %v171 = vld [vmem:[#allocation7 + $0x1c0] sm:$0xff]
    %v172 = vld [vmem:[#allocation7 + $0x1c8] sm:$0xff]
    %v173 = vld [vmem:[#allocation7 + $0x1d0] sm:$0xff]
    %v174 = vld [vmem:[#allocation7 + $0x1d8] sm:$0xff]
    %v175 = vld [vmem:[#allocation7 + $0x1e0] sm:$0xff]
    %v176 = vld [vmem:[#allocation7 + $0x1e8] sm:$0xff]
    %v177 = vld [vmem:[#allocation7 + $0x1f0] sm:$0xff]
    %v178 = vld [vmem:[#allocation7 + $0x1f8] sm:$0xff]
    %v179 = vld [vmem:[#allocation7 + $0x200] sm:$0xff]
    %v180 = vld [vmem:[#allocation7 + $0x208] sm:$0xff]
    %v181 = vld [vmem:[#allocation7 + $0x210] sm:$0xff]
    %v182 = vld [vmem:[#allocation7 + $0x218] sm:$0xff]
    %v183 = vld [vmem:[#allocation7 + $0x220] sm:$0xff]
    %v184 = vld [vmem:[#allocation7 + $0x228] sm:$0xff]
    %v185 = vld [vmem:[#allocation7 + $0x230] sm:$0xff]
    %v186 = vld [vmem:[#allocation7 + $0x238] sm:$0xff]
    %v187 = vld [vmem:[#allocation7 + $0x240] sm:$0xff]
    %v188 = vld [vmem:[#allocation7 + $0x248] sm:$0xff]
    %v189 = vld [vmem:[#allocation7 + $0x250] sm:$0xff]
    %v190 = vld [vmem:[#allocation7 + $0x258] sm:$0xff]
    %v191 = vld [vmem:[#allocation7 + $0x260] sm:$0xff]
    %v192 = vld [vmem:[#allocation7 + $0x268] sm:$0xff]
    %v193 = vld [vmem:[#allocation7 + $0x270] sm:$0xff]
    %v194 = vld [vmem:[#allocation7 + $0x278] sm:$0xff]
    %v195 = vld [vmem:[#allocation7 + $0x280] sm:$0xff]
    %v196 = vld [vmem:[#allocation7 + $0x288] sm:$0xff]
    %v197 = vld [vmem:[#allocation7 + $0x290] sm:$0xff]
    %v198 = vld [vmem:[#allocation7 + $0x298] sm:$0xff]
    %v199 = vld [vmem:[#allocation7 + $0x2a0] sm:$0xff]
    %v200 = vld [vmem:[#allocation7 + $0x2a8] sm:$0xff]
    %v201 = vld [vmem:[#allocation7 + $0x2b0] sm:$0xff]
    %v202 = vld [vmem:[#allocation7 + $0x2b8] sm:$0xff]
    %v203 = vld [vmem:[#allocation7 + $0x2c0] sm:$0xff]
    %v204 = vld [vmem:[#allocation7 + $0x2c8] sm:$0xff]
    %v205 = vld [vmem:[#allocation7 + $0x2d0] sm:$0xff]
    %v206 = vld [vmem:[#allocation7 + $0x2d8] sm:$0xff]
    %v207 = vld [vmem:[#allocation7 + $0x2e0] sm:$0xff]
    %v208 = vld [vmem:[#allocation7 + $0x2e8] sm:$0xff]
    %v209 = vld [vmem:[#allocation7 + $0x2f0] sm:$0xff]
    %v210 = vld [vmem:[#allocation7 + $0x2f8] sm:$0xff]
    %v211 = vld [vmem:[#allocation7 + $0x300] sm:$0xff]
    %v212 = vld [vmem:[#allocation7 + $0x308] sm:$0xff]
    %v213 = vld [vmem:[#allocation7 + $0x310] sm:$0xff]
    %v214 = vld [vmem:[#allocation7 + $0x318] sm:$0xff]
    %v215 = vld [vmem:[#allocation7 + $0x320] sm:$0xff]
    %v216 = vld [vmem:[#allocation7 + $0x328] sm:$0xff]
    %v217 = vld [vmem:[#allocation7 + $0x330] sm:$0xff]
    %v218 = vld [vmem:[#allocation7 + $0x338] sm:$0xff]
    %v219 = vld [vmem:[#allocation7 + $0x340] sm:$0xff]
    %v220 = vld [vmem:[#allocation7 + $0x348] sm:$0xff]
    %v221 = vld [vmem:[#allocation7 + $0x350] sm:$0xff]
    %v222 = vld [vmem:[#allocation7 + $0x358] sm:$0xff]
    %v223 = vld [vmem:[#allocation7 + $0x360] sm:$0xff]
    %v224 = vld [vmem:[#allocation7 + $0x368] sm:$0xff]
    %v225 = vld [vmem:[#allocation7 + $0x370] sm:$0xff]
    %v226 = vld [vmem:[#allocation7 + $0x378] sm:$0xff]
    %v227 = vld [vmem:[#allocation7 + $0x380] sm:$0xff]
    %v228 = vld [vmem:[#allocation7 + $0x388] sm:$0xff]
    %v229 = vld [vmem:[#allocation7 + $0x390] sm:$0xff]
    %v230 = vld [vmem:[#allocation7 + $0x398] sm:$0xff]
    %v231 = vld [vmem:[#allocation7 + $0x3a0] sm:$0xff]
    %v232 = vld [vmem:[#allocation7 + $0x3a8] sm:$0xff]
    %v233 = vld [vmem:[#allocation7 + $0x3b0] sm:$0xff]
    %v234 = vld [vmem:[#allocation7 + $0x3b8] sm:$0xff]
    %v235 = vld [vmem:[#allocation7 + $0x3c0] sm:$0xff]
    %v236 = vld [vmem:[#allocation7 + $0x3c8] sm:$0xff]
    %v237 = vld [vmem:[#allocation7 + $0x3d0] sm:$0xff]
    %v238 = vld [vmem:[#allocation7 + $0x3d8] sm:$0xff]
    %v239 = vld [vmem:[#allocation7 + $0x3e0] sm:$0xff]
    %v240 = vld [vmem:[#allocation7 + $0x3e8] sm:$0xff]
    %v241 = vld [vmem:[#allocation7 + $0x3f0] sm:$0xff]
    %v242 = vld [vmem:[#allocation7 + $0x3f8] sm:$0xff]
    %v243 = vld [vmem:[#allocation7 + $0x400] sm:$0xff]
    %v244 = vld [vmem:[#allocation7 + $0x408] sm:$0xff]
    %v245 = vld [vmem:[#allocation7 + $0x410] sm:$0xff]
    %v246 = vld [vmem:[#allocation7 + $0x418] sm:$0xff]
    %v247 = vld [vmem:[#allocation7 + $0x420] sm:$0xff]
    %v248 = vld [vmem:[#allocation7 + $0x428] sm:$0xff]
    %v249 = vld [vmem:[#allocation7 + $0x430] sm:$0xff]
    %v250 = vld [vmem:[#allocation7 + $0x438] sm:$0xff]
    %v251 = vld [vmem:[#allocation7 + $0x440] sm:$0xff]
    %v252 = vld [vmem:[#allocation7 + $0x448] sm:$0xff]
    %v253 = vld [vmem:[#allocation7 + $0x450] sm:$0xff]
    %v254 = vld [vmem:[#allocation7 + $0x458] sm:$0xff]
    %v255 = vld [vmem:[#allocation7 + $0x460] sm:$0xff]
    %v256 = vld [vmem:[#allocation7 + $0x468] sm:$0xff]
    %v257 = vld [vmem:[#allocation7 + $0x470] sm:$0xff]
    %v258 = vld [vmem:[#allocation7 + $0x478] sm:$0xff]
    %v259 = vld [vmem:[#allocation7 + $0x480] sm:$0xff]
    %v260 = vld [vmem:[#allocation7 + $0x488] sm:$0xff]
    %v261 = vld [vmem:[#allocation7 + $0x490] sm:$0xff]
    %v262 = vld [vmem:[#allocation7 + $0x498] sm:$0xff]
    %v263 = vld [vmem:[#allocation7 + $0x4a0] sm:$0xff]
    %v264 = vld [vmem:[#allocation7 + $0x4a8] sm:$0xff]
    %v265 = vld [vmem:[#allocation7 + $0x4b0] sm:$0xff]
    %v266 = vld [vmem:[#allocation7 + $0x4b8] sm:$0xff]
    %v267 = vld [vmem:[#allocation7 + $0x4c0] sm:$0xff]
    %v268 = vld [vmem:[#allocation7 + $0x4c8] sm:$0xff]
    %v269 = vld [vmem:[#allocation7 + $0x4d0] sm:$0xff]
    %v270 = vld [vmem:[#allocation7 + $0x4d8] sm:$0xff]
    %v271 = vld [vmem:[#allocation7 + $0x4e0] sm:$0xff]
    %v272 = vld [vmem:[#allocation7 + $0x4e8] sm:$0xff]
    %v273 = vld [vmem:[#allocation7 + $0x4f0] sm:$0xff]
    %v274 = vld [vmem:[#allocation7 + $0x4f8] sm:$0xff]
    %v275 = vld [vmem:[#allocation7 + $0x500] sm:$0xff]
    %v276 = vld [vmem:[#allocation7 + $0x508] sm:$0xff]
    %v277 = vld [vmem:[#allocation7 + $0x510] sm:$0xff]
    %v278 = vld [vmem:[#allocation7 + $0x518] sm:$0xff]
    %v279 = vld [vmem:[#allocation7 + $0x520] sm:$0xff]
    %v280 = vld [vmem:[#allocation7 + $0x528] sm:$0xff]
    %v281 = vld [vmem:[#allocation7 + $0x530] sm:$0xff]
    %v282 = vld [vmem:[#allocation7 + $0x538] sm:$0xff]
    %v283 = vld [vmem:[#allocation7 + $0x540] sm:$0xff]
    %v284 = vld [vmem:[#allocation7 + $0x548] sm:$0xff]
    %v285 = vld [vmem:[#allocation7 + $0x550] sm:$0xff]
    %v286 = vld [vmem:[#allocation7 + $0x558] sm:$0xff]
    %v287 = vld [vmem:[#allocation7 + $0x560] sm:$0xff]
    %v288 = vld [vmem:[#allocation7 + $0x568] sm:$0xff]
    %v289 = vld [vmem:[#allocation7 + $0x570] sm:$0xff]
    %v290 = vld [vmem:[#allocation7 + $0x578] sm:$0xff]
    %v291 = vld [vmem:[#allocation7 + $0x580] sm:$0xff]
    %v292 = vld [vmem:[#allocation7 + $0x588] sm:$0xff]
    %v293 = vld [vmem:[#allocation7 + $0x590] sm:$0xff]
    %v294 = vld [vmem:[#allocation7 + $0x598] sm:$0xff]
    %v295 = vld [vmem:[#allocation7 + $0x5a0] sm:$0xff]
    %v296 = vld [vmem:[#allocation7 + $0x5a8] sm:$0xff]
    %v297 = vld [vmem:[#allocation7 + $0x5b0] sm:$0xff]
    %v298 = vld [vmem:[#allocation7 + $0x5b8] sm:$0xff]
    %v299 = vld [vmem:[#allocation7 + $0x5c0] sm:$0xff]
    %v300 = vld [vmem:[#allocation7 + $0x5c8] sm:$0xff]
    %v301 = vld [vmem:[#allocation7 + $0x5d0] sm:$0xff]
    %v302 = vld [vmem:[#allocation7 + $0x5d8] sm:$0xff]
    %v303 = vld [vmem:[#allocation7 + $0x5e0] sm:$0xff]
    %v304 = vld [vmem:[#allocation7 + $0x5e8] sm:$0xff]
    %v305 = vld [vmem:[#allocation7 + $0x5f0] sm:$0xff]
    %v306 = vld [vmem:[#allocation7 + $0x5f8] sm:$0xff]
    %v307 = vld [vmem:[#allocation7 + $0x600] sm:$0xff]
    %v308 = vld [vmem:[#allocation7 + $0x608] sm:$0xff]
    %v309 = vld [vmem:[#allocation7 + $0x610] sm:$0xff]
    %v310 = vld [vmem:[#allocation7 + $0x618] sm:$0xff]
    %v311 = vld [vmem:[#allocation7 + $0x620] sm:$0xff]
    %v312 = vld [vmem:[#allocation7 + $0x628] sm:$0xff]
    %v313 = vld [vmem:[#allocation7 + $0x630] sm:$0xff]
    %v314 = vld [vmem:[#allocation7 + $0x638] sm:$0xff]
    %v315 = vld [vmem:[#allocation7 + $0x640] sm:$0xff]
    %v316 = vld [vmem:[#allocation7 + $0x648] sm:$0xff]
    %v317 = vld [vmem:[#allocation7 + $0x650] sm:$0xff]
    %v318 = vld [vmem:[#allocation7 + $0x658] sm:$0xff]
    %v319 = vld [vmem:[#allocation7 + $0x660] sm:$0xff]
    %v320 = vld [vmem:[#allocation7 + $0x668] sm:$0xff]
    %v321 = vld [vmem:[#allocation7 + $0x670] sm:$0xff]
    %v322 = vld [vmem:[#allocation7 + $0x678] sm:$0xff]
    %v323 = vld [vmem:[#allocation7 + $0x680] sm:$0xff]
    %v324 = vld [vmem:[#allocation7 + $0x688] sm:$0xff]
    %v325 = vld [vmem:[#allocation7 + $0x690] sm:$0xff]
    %v326 = vld [vmem:[#allocation7 + $0x698] sm:$0xff]
    %v327 = vld [vmem:[#allocation7 + $0x6a0] sm:$0xff]
    %v328 = vld [vmem:[#allocation7 + $0x6a8] sm:$0xff]
    %v329 = vld [vmem:[#allocation7 + $0x6b0] sm:$0xff]
    %v330 = vld [vmem:[#allocation7 + $0x6b8] sm:$0xff]
    %v331 = vld [vmem:[#allocation7 + $0x6c0] sm:$0xff]
    %v332 = vld [vmem:[#allocation7 + $0x6c8] sm:$0xff]
    %v333 = vld [vmem:[#allocation7 + $0x6d0] sm:$0xff]
    %v334 = vld [vmem:[#allocation7 + $0x6d8] sm:$0xff]
    %v335 = vld [vmem:[#allocation7 + $0x6e0] sm:$0xff]
    %v336 = vld [vmem:[#allocation7 + $0x6e8] sm:$0xff]
    %v337 = vld [vmem:[#allocation7 + $0x6f0] sm:$0xff]
    %v338 = vld [vmem:[#allocation7 + $0x6f8] sm:$0xff]
    %v339 = vld [vmem:[#allocation7 + $0x700] sm:$0xff]
    %v340 = vld [vmem:[#allocation7 + $0x708] sm:$0xff]
    %v341 = vld [vmem:[#allocation7 + $0x710] sm:$0xff]
    %v342 = vld [vmem:[#allocation7 + $0x718] sm:$0xff]
    %v343 = vld [vmem:[#allocation7 + $0x720] sm:$0xff]
    %v344 = vld [vmem:[#allocation7 + $0x728] sm:$0xff]
    %v345 = vld [vmem:[#allocation7 + $0x730] sm:$0xff]
    %v346 = vld [vmem:[#allocation7 + $0x738] sm:$0xff]
    %v347 = vld [vmem:[#allocation7 + $0x740] sm:$0xff]
    %v348 = vld [vmem:[#allocation7 + $0x748] sm:$0xff]
    %v349 = vld [vmem:[#allocation7 + $0x750] sm:$0xff]
    %v350 = vld [vmem:[#allocation7 + $0x758] sm:$0xff]
    %v351 = vld [vmem:[#allocation7 + $0x760] sm:$0xff]
    %v352 = vld [vmem:[#allocation7 + $0x768] sm:$0xff]
    %v353 = vld [vmem:[#allocation7 + $0x770] sm:$0xff]
    %v354 = vld [vmem:[#allocation7 + $0x778] sm:$0xff]
    %v355 = vld [vmem:[#allocation7 + $0x780] sm:$0xff]
    %v356 = vld [vmem:[#allocation7 + $0x788] sm:$0xff]
    %v357 = vld [vmem:[#allocation7 + $0x790] sm:$0xff]
    %v358 = vld [vmem:[#allocation7 + $0x798] sm:$0xff]
    %v359 = vld [vmem:[#allocation7 + $0x7a0] sm:$0xff]
    %v360 = vld [vmem:[#allocation7 + $0x7a8] sm:$0xff]
    %v361 = vld [vmem:[#allocation7 + $0x7b0] sm:$0xff]
    %v362 = vld [vmem:[#allocation7 + $0x7b8] sm:$0xff]
    %v363 = vld [vmem:[#allocation7 + $0x7c0] sm:$0xff]
    %v364 = vld [vmem:[#allocation7 + $0x7c8] sm:$0xff]
    %v365 = vld [vmem:[#allocation7 + $0x7d0] sm:$0xff]
    %v366 = vld [vmem:[#allocation7 + $0x7d8] sm:$0xff]
    %v367 = vld [vmem:[#allocation7 + $0x7e0] sm:$0xff]
    %v368 = vld [vmem:[#allocation7 + $0x7e8] sm:$0xff]
    %v369 = vld [vmem:[#allocation7 + $0x7f0] sm:$0xff]
    %v370 = vld [vmem:[#allocation7 + $0x7f8] sm:$0xff]
    %v371 = vld [vmem:[#allocation7 + $0x800] sm:$0xff]
    %v372 = vld [vmem:[#allocation7 + $0x808] sm:$0xff]
    %v373 = vld [vmem:[#allocation7 + $0x810] sm:$0xff]
    %v374 = vld [vmem:[#allocation7 + $0x818] sm:$0xff]
    %v375 = vld [vmem:[#allocation7 + $0x820] sm:$0xff]
    %v376 = vld [vmem:[#allocation7 + $0x828] sm:$0xff]
    %v377 = vld [vmem:[#allocation7 + $0x830] sm:$0xff]
    %v378 = vld [vmem:[#allocation7 + $0x838] sm:$0xff]
    %v379 = vld [vmem:[#allocation7 + $0x840] sm:$0xff]
    %v380 = vld [vmem:[#allocation7 + $0x848] sm:$0xff]
    %v381 = vld [vmem:[#allocation7 + $0x850] sm:$0xff]
    %v382 = vld [vmem:[#allocation7 + $0x858] sm:$0xff]
    %v383 = vld [vmem:[#allocation7 + $0x860] sm:$0xff]
    %v384 = vld [vmem:[#allocation7 + $0x868] sm:$0xff]
    %v385 = vld [vmem:[#allocation7 + $0x870] sm:$0xff]
    %v386 = vld [vmem:[#allocation7 + $0x878] sm:$0xff]
    %v387 = vld [vmem:[#allocation7 + $0x880] sm:$0xff]
    %v388 = vld [vmem:[#allocation7 + $0x888] sm:$0xff]
    %v389 = vld [vmem:[#allocation7 + $0x890] sm:$0xff]
    %v390 = vld [vmem:[#allocation7 + $0x898] sm:$0xff]
    %v391 = vld [vmem:[#allocation7 + $0x8a0] sm:$0xff]
    %v392 = vld [vmem:[#allocation7 + $0x8a8] sm:$0xff]
    %v393 = vld [vmem:[#allocation7 + $0x8b0] sm:$0xff]
    %v394 = vld [vmem:[#allocation7 + $0x8b8] sm:$0xff]
    %v395 = vld [vmem:[#allocation7 + $0x8c0] sm:$0xff]
    %v396 = vld [vmem:[#allocation7 + $0x8c8] sm:$0xff]
    %v397 = vld [vmem:[#allocation7 + $0x8d0] sm:$0xff]
    %v398 = vld [vmem:[#allocation7 + $0x8d8] sm:$0xff]
    %v399 = vld [vmem:[#allocation7 + $0x8e0] sm:$0xff]
    %v400 = vld [vmem:[#allocation7 + $0x8e8] sm:$0xff]
    %v401 = vld [vmem:[#allocation7 + $0x8f0] sm:$0xff]
    %v402 = vld [vmem:[#allocation7 + $0x8f8] sm:$0xff]
    %v403 = vld [vmem:[#allocation7 + $0x900] sm:$0xff]
    %v404 = vld [vmem:[#allocation7 + $0x908] sm:$0xff]
    %v405 = vld [vmem:[#allocation7 + $0x910] sm:$0xff]
    %v406 = vld [vmem:[#allocation7 + $0x918] sm:$0xff]
    %v407 = vld [vmem:[#allocation7 + $0x920] sm:$0xff]
    %v408 = vld [vmem:[#allocation7 + $0x928] sm:$0xff]
    %v409 = vld [vmem:[#allocation7 + $0x930] sm:$0xff]
    %v410 = vld [vmem:[#allocation7 + $0x938] sm:$0xff]
    %v411 = vld [vmem:[#allocation7 + $0x940] sm:$0xff]
    %v412 = vld [vmem:[#allocation7 + $0x948] sm:$0xff]
    %v413 = vld [vmem:[#allocation7 + $0x950] sm:$0xff]
    %v414 = vld [vmem:[#allocation7 + $0x958] sm:$0xff]
    %v415 = vld [vmem:[#allocation7 + $0x960] sm:$0xff]
    %v416 = vld [vmem:[#allocation7 + $0x968] sm:$0xff]
    %v417 = vld [vmem:[#allocation7 + $0x970] sm:$0xff]
    %v418 = vld [vmem:[#allocation7 + $0x978] sm:$0xff]
    %v419 = vld [vmem:[#allocation7 + $0x980] sm:$0xff]
    %v420 = vld [vmem:[#allocation7 + $0x988] sm:$0xff]
    %v421 = vld [vmem:[#allocation7 + $0x990] sm:$0xff]
    %v422 = vld [vmem:[#allocation7 + $0x998] sm:$0xff]
    %v423 = vld [vmem:[#allocation7 + $0x9a0] sm:$0xff]
    %v424 = vld [vmem:[#allocation7 + $0x9a8] sm:$0xff]
    %v425 = vld [vmem:[#allocation7 + $0x9b0] sm:$0xff]
    %v426 = vld [vmem:[#allocation7 + $0x9b8] sm:$0xff]
    %v427 = vld [vmem:[#allocation7 + $0x9c0] sm:$0xff]
    %v428 = vld [vmem:[#allocation7 + $0x9c8] sm:$0xff]
    %v429 = vld [vmem:[#allocation7 + $0x9d0] sm:$0xff]
    %v430 = vld [vmem:[#allocation7 + $0x9d8] sm:$0xff]
    %v431 = vld [vmem:[#allocation7 + $0x9e0] sm:$0xff]
    %v432 = vld [vmem:[#allocation7 + $0x9e8] sm:$0xff]
    %v433 = vld [vmem:[#allocation7 + $0x9f0] sm:$0xff]
    %v434 = vld [vmem:[#allocation7 + $0x9f8] sm:$0xff]
    %v435 = vld [vmem:[#allocation7 + $0xa00] sm:$0xff]
    %v436 = vld [vmem:[#allocation7 + $0xa08] sm:$0xff]
    %v437 = vld [vmem:[#allocation7 + $0xa10] sm:$0xff]
    %v438 = vld [vmem:[#allocation7 + $0xa18] sm:$0xff]
    %v439 = vld [vmem:[#allocation7 + $0xa20] sm:$0xff]
    %v440 = vld [vmem:[#allocation7 + $0xa28] sm:$0xff]
    %v441 = vld [vmem:[#allocation7 + $0xa30] sm:$0xff]
    %v442 = vld [vmem:[#allocation7 + $0xa38] sm:$0xff]
    %v443 = vld [vmem:[#allocation7 + $0xa40] sm:$0xff]
    %v444 = vld [vmem:[#allocation7 + $0xa48] sm:$0xff]
    %v445 = vld [vmem:[#allocation7 + $0xa50] sm:$0xff]
    %v446 = vld [vmem:[#allocation7 + $0xa58] sm:$0xff]
    %v447 = vld [vmem:[#allocation7 + $0xa60] sm:$0xff]
    %v448 = vld [vmem:[#allocation7 + $0xa68] sm:$0xff]
    %v449 = vld [vmem:[#allocation7 + $0xa70] sm:$0xff]
    %v450 = vld [vmem:[#allocation7 + $0xa78] sm:$0xff]
    %v451 = vld [vmem:[#allocation7 + $0xa80] sm:$0xff]
    %v452 = vld [vmem:[#allocation7 + $0xa88] sm:$0xff]
    %v453 = vld [vmem:[#allocation7 + $0xa90] sm:$0xff]
    %v454 = vld [vmem:[#allocation7 + $0xa98] sm:$0xff]
    %v455 = vld [vmem:[#allocation7 + $0xaa0] sm:$0xff]
    %v456 = vld [vmem:[#allocation7 + $0xaa8] sm:$0xff]
    %v457 = vld [vmem:[#allocation7 + $0xab0] sm:$0xff]
    %v458 = vld [vmem:[#allocation7 + $0xab8] sm:$0xff]
    %v459 = vld [vmem:[#allocation7 + $0xac0] sm:$0xff]
    %v460 = vld [vmem:[#allocation7 + $0xac8] sm:$0xff]
    %v461 = vld [vmem:[#allocation7 + $0xad0] sm:$0xff]
    %v462 = vld [vmem:[#allocation7 + $0xad8] sm:$0xff]
    %v463 = vld [vmem:[#allocation7 + $0xae0] sm:$0xff]
    %v464 = vld [vmem:[#allocation7 + $0xae8] sm:$0xff]
    %v465 = vld [vmem:[#allocation7 + $0xaf0] sm:$0xff]
    %v466 = vld [vmem:[#allocation7 + $0xaf8] sm:$0xff]
    %v467 = vld [vmem:[#allocation7 + $0xb00] sm:$0xff]
    %v468 = vld [vmem:[#allocation7 + $0xb08] sm:$0xff]
    %v469 = vld [vmem:[#allocation7 + $0xb10] sm:$0xff]
    %v470 = vld [vmem:[#allocation7 + $0xb18] sm:$0xff]
    %v471 = vld [vmem:[#allocation7 + $0xb20] sm:$0xff]
    %v472 = vld [vmem:[#allocation7 + $0xb28] sm:$0xff]
    %v473 = vld [vmem:[#allocation7 + $0xb30] sm:$0xff]
    %v474 = vld [vmem:[#allocation7 + $0xb38] sm:$0xff]
    %v475 = vld [vmem:[#allocation7 + $0xb40] sm:$0xff]
    %v476 = vld [vmem:[#allocation7 + $0xb48] sm:$0xff]
    %v477 = vld [vmem:[#allocation7 + $0xb50] sm:$0xff]
    %v478 = vld [vmem:[#allocation7 + $0xb58] sm:$0xff]
    %v479 = vld [vmem:[#allocation7 + $0xb60] sm:$0xff]
    %v480 = vld [vmem:[#allocation7 + $0xb68] sm:$0xff]
    %v481 = vld [vmem:[#allocation7 + $0xb70] sm:$0xff]
    %v482 = vld [vmem:[#allocation7 + $0xb78] sm:$0xff]
    %v483 = vld [vmem:[#allocation7 + $0xb80] sm:$0xff]
    %v484 = vld [vmem:[#allocation7 + $0xb88] sm:$0xff]
    %v485 = vld [vmem:[#allocation7 + $0xb90] sm:$0xff]
    %v486 = vld [vmem:[#allocation7 + $0xb98] sm:$0xff]
    %v487 = vld [vmem:[#allocation7 + $0xba0] sm:$0xff]
    %v488 = vld [vmem:[#allocation7 + $0xba8] sm:$0xff]
    %v489 = vld [vmem:[#allocation7 + $0xbb0] sm:$0xff]
    %v490 = vld [vmem:[#allocation7 + $0xbb8] sm:$0xff]
    %v491 = vld [vmem:[#allocation7 + $0xbc0] sm:$0xff]
    %v492 = vld [vmem:[#allocation7 + $0xbc8] sm:$0xff]
    %v493 = vld [vmem:[#allocation7 + $0xbd0] sm:$0xff]
    %v494 = vld [vmem:[#allocation7 + $0xbd8] sm:$0xff]
    %v495 = vld [vmem:[#allocation7 + $0xbe0] sm:$0xff]
    %v496 = vld [vmem:[#allocation7 + $0xbe8] sm:$0xff]
    %v497 = vld [vmem:[#allocation7 + $0xbf0] sm:$0xff]
    %v498 = vld [vmem:[#allocation7 + $0xbf8] sm:$0xff]
    %v499 = vld [vmem:[#allocation7 + $0xc00] sm:$0xff]
    %v500 = vld [vmem:[#allocation7 + $0xc08] sm:$0xff]
    %v501 = vld [vmem:[#allocation7 + $0xc10] sm:$0xff]
    %v502 = vld [vmem:[#allocation7 + $0xc18] sm:$0xff]
    %v503 = vld [vmem:[#allocation7 + $0xc20] sm:$0xff]
    %v504 = vld [vmem:[#allocation7 + $0xc28] sm:$0xff]
    %v505 = vld [vmem:[#allocation7 + $0xc30] sm:$0xff]
    %v506 = vld [vmem:[#allocation7 + $0xc38] sm:$0xff]
    %v507 = vld [vmem:[#allocation7 + $0xc40] sm:$0xff]
    %v508 = vld [vmem:[#allocation7 + $0xc48] sm:$0xff]
    %v509 = vld [vmem:[#allocation7 + $0xc50] sm:$0xff]
    %v510 = vld [vmem:[#allocation7 + $0xc58] sm:$0xff]
    %v511 = vld [vmem:[#allocation7 + $0xc60] sm:$0xff]
    %v512 = vld [vmem:[#allocation7 + $0xc68] sm:$0xff]
    %v513 = vld [vmem:[#allocation7 + $0xc70] sm:$0xff]
    %v514 = vld [vmem:[#allocation7 + $0xc78] sm:$0xff]
    %v515 = vld [vmem:[#allocation7 + $0xc80] sm:$0xff]
    %v516 = vld [vmem:[#allocation7 + $0xc88] sm:$0xff]
    %v517 = vld [vmem:[#allocation7 + $0xc90] sm:$0xff]
    %v518 = vld [vmem:[#allocation7 + $0xc98] sm:$0xff]
    %v519 = vld [vmem:[#allocation7 + $0xca0] sm:$0xff]
    %v520 = vld [vmem:[#allocation7 + $0xca8] sm:$0xff]
    %v521 = vld [vmem:[#allocation7 + $0xcb0] sm:$0xff]
    %v522 = vld [vmem:[#allocation7 + $0xcb8] sm:$0xff]
    %v523 = vld [vmem:[#allocation7 + $0xcc0] sm:$0xff]
    %v524 = vld [vmem:[#allocation7 + $0xcc8] sm:$0xff]
    %v525 = vld [vmem:[#allocation7 + $0xcd0] sm:$0xff]
    %v526 = vld [vmem:[#allocation7 + $0xcd8] sm:$0xff]
    %v527 = vld [vmem:[#allocation7 + $0xce0] sm:$0xff]
    %v528 = vld [vmem:[#allocation7 + $0xce8] sm:$0xff]
    %v529 = vld [vmem:[#allocation7 + $0xcf0] sm:$0xff]
    %v530 = vld [vmem:[#allocation7 + $0xcf8] sm:$0xff]
    %v531 = vld [vmem:[#allocation7 + $0xd00] sm:$0xff]
    %v532 = vld [vmem:[#allocation7 + $0xd08] sm:$0xff]
    %v533 = vld [vmem:[#allocation7 + $0xd10] sm:$0xff]
    %v534 = vld [vmem:[#allocation7 + $0xd18] sm:$0xff]
    %v535 = vld [vmem:[#allocation7 + $0xd20] sm:$0xff]
    %v536 = vld [vmem:[#allocation7 + $0xd28] sm:$0xff]
    %v537 = vld [vmem:[#allocation7 + $0xd30] sm:$0xff]
    %v538 = vld [vmem:[#allocation7 + $0xd38] sm:$0xff]
    %v539 = vld [vmem:[#allocation7 + $0xd40] sm:$0xff]
    %v540 = vld [vmem:[#allocation7 + $0xd48] sm:$0xff]
    %v541 = vld [vmem:[#allocation7 + $0xd50] sm:$0xff]
    %v542 = vld [vmem:[#allocation7 + $0xd58] sm:$0xff]
    %v543 = vld [vmem:[#allocation7 + $0xd60] sm:$0xff]
    %v544 = vld [vmem:[#allocation7 + $0xd68] sm:$0xff]
    %v545 = vld [vmem:[#allocation7 + $0xd70] sm:$0xff]
    %v546 = vld [vmem:[#allocation7 + $0xd78] sm:$0xff]
    %v547 = vld [vmem:[#allocation7 + $0xd80] sm:$0xff]
    %v548 = vld [vmem:[#allocation7 + $0xd88] sm:$0xff]
    %v549 = vld [vmem:[#allocation7 + $0xd90] sm:$0xff]
    %v550 = vld [vmem:[#allocation7 + $0xd98] sm:$0xff]
    %v551 = vld [vmem:[#allocation7 + $0xda0] sm:$0xff]
    %v552 = vld [vmem:[#allocation7 + $0xda8] sm:$0xff]
    %v553 = vld [vmem:[#allocation7 + $0xdb0] sm:$0xff]
    %v554 = vld [vmem:[#allocation7 + $0xdb8] sm:$0xff]
    %v555 = vld [vmem:[#allocation7 + $0xdc0] sm:$0xff]
    %v556 = vld [vmem:[#allocation7 + $0xdc8] sm:$0xff]
    %v557 = vld [vmem:[#allocation7 + $0xdd0] sm:$0xff]
    %v558 = vld [vmem:[#allocation7 + $0xdd8] sm:$0xff]
    %v559 = vld [vmem:[#allocation7 + $0xde0] sm:$0xff]
    %v560 = vld [vmem:[#allocation7 + $0xde8] sm:$0xff]
    %v561 = vld [vmem:[#allocation7 + $0xdf0] sm:$0xff]
    %v562 = vld [vmem:[#allocation7 + $0xdf8] sm:$0xff]
    %v563 = vld [vmem:[#allocation5] sm:$0xff]
    %v564 = vld [vmem:[#allocation8] sm:$0xff]
    %v565 = vld [vmem:[#allocation8 + $0x8] sm:$0xff]
    %v566 = vld [vmem:[#allocation8 + $0x10] sm:$0xff]
    %v567 = vld [vmem:[#allocation8 + $0x18] sm:$0xff]
    %v568 = vld [vmem:[#allocation8 + $0x20] sm:$0xff]
    %v569 = vld [vmem:[#allocation8 + $0x28] sm:$0xff]
    %v570 = vld [vmem:[#allocation8 + $0x30] sm:$0xff]
    %v571 = vld [vmem:[#allocation8 + $0x38] sm:$0xff]
    %v572 = vld [vmem:[#allocation8 + $0x40] sm:$0xff]
    %v573 = vld [vmem:[#allocation8 + $0x48] sm:$0xff]
    %v574 = vld [vmem:[#allocation8 + $0x50] sm:$0xff]
    %v575 = vld [vmem:[#allocation8 + $0x58] sm:$0xff]
    %v576 = vld [vmem:[#allocation8 + $0x60] sm:$0xff]
    %v577 = vld [vmem:[#allocation8 + $0x68] sm:$0xff]
    %v578 = vld [vmem:[#allocation8 + $0x70] sm:$0xff]
    %v579 = vld [vmem:[#allocation8 + $0x78] sm:$0xff]
    %v580 = vld [vmem:[#allocation8 + $0x80] sm:$0xff]
    %v581 = vld [vmem:[#allocation8 + $0x88] sm:$0xff]
    %v582 = vld [vmem:[#allocation8 + $0x90] sm:$0xff]
    %v583 = vld [vmem:[#allocation8 + $0x98] sm:$0xff]
    %v584 = vld [vmem:[#allocation8 + $0xa0] sm:$0xff]
    %v585 = vld [vmem:[#allocation8 + $0xa8] sm:$0xff]
    %v586 = vld [vmem:[#allocation8 + $0xb0] sm:$0xff]
    %v587 = vld [vmem:[#allocation8 + $0xb8] sm:$0xff]
    %v588 = vld [vmem:[#allocation8 + $0xc0] sm:$0xff]
    %v589 = vld [vmem:[#allocation8 + $0xc8] sm:$0xff]
    %v590 = vld [vmem:[#allocation8 + $0xd0] sm:$0xff]
    %v591 = vld [vmem:[#allocation8 + $0xd8] sm:$0xff]
    %v592 = vld [vmem:[#allocation8 + $0xe0] sm:$0xff]
    %v593 = vld [vmem:[#allocation8 + $0xe8] sm:$0xff]
    %v594 = vld [vmem:[#allocation8 + $0xf0] sm:$0xff]
    %v595 = vld [vmem:[#allocation8 + $0xf8] sm:$0xff]
    %v596 = vld [vmem:[#allocation8 + $0x100] sm:$0xff]
    %v597 = vld [vmem:[#allocation8 + $0x108] sm:$0xff]
    %v598 = vld [vmem:[#allocation8 + $0x110] sm:$0xff]
    %v599 = vld [vmem:[#allocation8 + $0x118] sm:$0xff]
    %v600 = vld [vmem:[#allocation8 + $0x120] sm:$0xff]
    %v601 = vld [vmem:[#allocation8 + $0x128] sm:$0xff]
    %v602 = vld [vmem:[#allocation8 + $0x130] sm:$0xff]
    %v603 = vld [vmem:[#allocation8 + $0x138] sm:$0xff]
    %v604 = vld [vmem:[#allocation8 + $0x140] sm:$0xff]
    %v605 = vld [vmem:[#allocation8 + $0x148] sm:$0xff]
    %v606 = vld [vmem:[#allocation8 + $0x150] sm:$0xff]
    %v607 = vld [vmem:[#allocation8 + $0x158] sm:$0xff]
    %v608 = vld [vmem:[#allocation8 + $0x160] sm:$0xff]
    %v609 = vld [vmem:[#allocation8 + $0x168] sm:$0xff]
    %v610 = vld [vmem:[#allocation8 + $0x170] sm:$0xff]
    %v611 = vld [vmem:[#allocation8 + $0x178] sm:$0xff]
    %v612 = vld [vmem:[#allocation8 + $0x180] sm:$0xff]
    %v613 = vld [vmem:[#allocation8 + $0x188] sm:$0xff]
    %v614 = vld [vmem:[#allocation8 + $0x190] sm:$0xff]
    %v615 = vld [vmem:[#allocation8 + $0x198] sm:$0xff]
    %v616 = vld [vmem:[#allocation8 + $0x1a0] sm:$0xff]
    %v617 = vld [vmem:[#allocation8 + $0x1a8] sm:$0xff]
    %v618 = vld [vmem:[#allocation8 + $0x1b0] sm:$0xff]
    %v619 = vld [vmem:[#allocation8 + $0x1b8] sm:$0xff]
    %v620 = vld [vmem:[#allocation8 + $0x1c0] sm:$0xff]
    %v621 = vld [vmem:[#allocation8 + $0x1c8] sm:$0xff]
    %v622 = vld [vmem:[#allocation8 + $0x1d0] sm:$0xff]
    %v623 = vld [vmem:[#allocation8 + $0x1d8] sm:$0xff]
    %v624 = vld [vmem:[#allocation8 + $0x1e0] sm:$0xff]
    %v625 = vld [vmem:[#allocation8 + $0x1e8] sm:$0xff]
    %v626 = vld [vmem:[#allocation8 + $0x1f0] sm:$0xff]
    %v627 = vld [vmem:[#allocation8 + $0x1f8] sm:$0xff]
    %v628 = vld [vmem:[#allocation8 + $0x200] sm:$0xff]
    %v629 = vld [vmem:[#allocation8 + $0x208] sm:$0xff]
    %v630 = vld [vmem:[#allocation8 + $0x210] sm:$0xff]
    %v631 = vld [vmem:[#allocation8 + $0x218] sm:$0xff]
    %v632 = vld [vmem:[#allocation8 + $0x220] sm:$0xff]
    %v633 = vld [vmem:[#allocation8 + $0x228] sm:$0xff]
    %v634 = vld [vmem:[#allocation8 + $0x230] sm:$0xff]
    %v635 = vld [vmem:[#allocation8 + $0x238] sm:$0xff]
    %v636 = vld [vmem:[#allocation8 + $0x240] sm:$0xff]
    %v637 = vld [vmem:[#allocation8 + $0x248] sm:$0xff]
    %v638 = vld [vmem:[#allocation8 + $0x250] sm:$0xff]
    %v639 = vld [vmem:[#allocation8 + $0x258] sm:$0xff]
    %v640 = vld [vmem:[#allocation8 + $0x260] sm:$0xff]
    %v641 = vld [vmem:[#allocation8 + $0x268] sm:$0xff]
    %v642 = vld [vmem:[#allocation8 + $0x270] sm:$0xff]
    %v643 = vld [vmem:[#allocation8 + $0x278] sm:$0xff]
    %v644 = vld [vmem:[#allocation8 + $0x280] sm:$0xff]
    %v645 = vld [vmem:[#allocation8 + $0x288] sm:$0xff]
    %v646 = vld [vmem:[#allocation8 + $0x290] sm:$0xff]
    %v647 = vld [vmem:[#allocation8 + $0x298] sm:$0xff]
    %v648 = vld [vmem:[#allocation8 + $0x2a0] sm:$0xff]
    %v649 = vld [vmem:[#allocation8 + $0x2a8] sm:$0xff]
    %v650 = vld [vmem:[#allocation8 + $0x2b0] sm:$0xff]
    %v651 = vld [vmem:[#allocation8 + $0x2b8] sm:$0xff]
    %v652 = vld [vmem:[#allocation8 + $0x2c0] sm:$0xff]
    %v653 = vld [vmem:[#allocation8 + $0x2c8] sm:$0xff]
    %v654 = vld [vmem:[#allocation8 + $0x2d0] sm:$0xff]
    %v655 = vld [vmem:[#allocation8 + $0x2d8] sm:$0xff]
    %v656 = vld [vmem:[#allocation8 + $0x2e0] sm:$0xff]
    %v657 = vld [vmem:[#allocation8 + $0x2e8] sm:$0xff]
    %v658 = vld [vmem:[#allocation8 + $0x2f0] sm:$0xff]
    %v659 = vld [vmem:[#allocation8 + $0x2f8] sm:$0xff]
    %v660 = vld [vmem:[#allocation8 + $0x300] sm:$0xff]
    %v661 = vld [vmem:[#allocation8 + $0x308] sm:$0xff]
    %v662 = vld [vmem:[#allocation8 + $0x310] sm:$0xff]
    %v663 = vld [vmem:[#allocation8 + $0x318] sm:$0xff]
    %v664 = vld [vmem:[#allocation8 + $0x320] sm:$0xff]
    %v665 = vld [vmem:[#allocation8 + $0x328] sm:$0xff]
    %v666 = vld [vmem:[#allocation8 + $0x330] sm:$0xff]
    %v667 = vld [vmem:[#allocation8 + $0x338] sm:$0xff]
    %v668 = vld [vmem:[#allocation8 + $0x340] sm:$0xff]
    %v669 = vld [vmem:[#allocation8 + $0x348] sm:$0xff]
    %v670 = vld [vmem:[#allocation8 + $0x350] sm:$0xff]
    %v671 = vld [vmem:[#allocation8 + $0x358] sm:$0xff]
    %v672 = vld [vmem:[#allocation8 + $0x360] sm:$0xff]
    %v673 = vld [vmem:[#allocation8 + $0x368] sm:$0xff]
    %v674 = vld [vmem:[#allocation8 + $0x370] sm:$0xff]
    %v675 = vld [vmem:[#allocation8 + $0x378] sm:$0xff]
    %v676 = vld [vmem:[#allocation8 + $0x380] sm:$0xff]
    %v677 = vld [vmem:[#allocation8 + $0x388] sm:$0xff]
    %v678 = vld [vmem:[#allocation8 + $0x390] sm:$0xff]
    %v679 = vld [vmem:[#allocation8 + $0x398] sm:$0xff]
    %v680 = vld [vmem:[#allocation8 + $0x3a0] sm:$0xff]
    %v681 = vld [vmem:[#allocation8 + $0x3a8] sm:$0xff]
    %v682 = vld [vmem:[#allocation8 + $0x3b0] sm:$0xff]
    %v683 = vld [vmem:[#allocation8 + $0x3b8] sm:$0xff]
    %v684 = vld [vmem:[#allocation8 + $0x3c0] sm:$0xff]
    %v685 = vld [vmem:[#allocation8 + $0x3c8] sm:$0xff]
    %v686 = vld [vmem:[#allocation8 + $0x3d0] sm:$0xff]
    %v687 = vld [vmem:[#allocation8 + $0x3d8] sm:$0xff]
    %v688 = vld [vmem:[#allocation8 + $0x3e0] sm:$0xff]
    %v689 = vld [vmem:[#allocation8 + $0x3e8] sm:$0xff]
    %v690 = vld [vmem:[#allocation8 + $0x3f0] sm:$0xff]
    %v691 = vld [vmem:[#allocation8 + $0x3f8] sm:$0xff]
    %v692 = vld [vmem:[#allocation8 + $0x400] sm:$0xff]
    %v693 = vld [vmem:[#allocation8 + $0x408] sm:$0xff]
    %v694 = vld [vmem:[#allocation8 + $0x410] sm:$0xff]
    %v695 = vld [vmem:[#allocation8 + $0x418] sm:$0xff]
    %v696 = vld [vmem:[#allocation8 + $0x420] sm:$0xff]
    %v697 = vld [vmem:[#allocation8 + $0x428] sm:$0xff]
    %v698 = vld [vmem:[#allocation8 + $0x430] sm:$0xff]
    %v699 = vld [vmem:[#allocation8 + $0x438] sm:$0xff]
    %v700 = vld [vmem:[#allocation8 + $0x440] sm:$0xff]
    %v701 = vld [vmem:[#allocation8 + $0x448] sm:$0xff]
    %v702 = vld [vmem:[#allocation8 + $0x450] sm:$0xff]
    %v703 = vld [vmem:[#allocation8 + $0x458] sm:$0xff]
    %v704 = vld [vmem:[#allocation8 + $0x460] sm:$0xff]
    %v705 = vld [vmem:[#allocation8 + $0x468] sm:$0xff]
    %v706 = vld [vmem:[#allocation8 + $0x470] sm:$0xff]
    %v707 = vld [vmem:[#allocation8 + $0x478] sm:$0xff]
    %v708 = vld [vmem:[#allocation8 + $0x480] sm:$0xff]
    %v709 = vld [vmem:[#allocation8 + $0x488] sm:$0xff]
    %v710 = vld [vmem:[#allocation8 + $0x490] sm:$0xff]
    %v711 = vld [vmem:[#allocation8 + $0x498] sm:$0xff]
    %v712 = vld [vmem:[#allocation8 + $0x4a0] sm:$0xff]
    %v713 = vld [vmem:[#allocation8 + $0x4a8] sm:$0xff]
    %v714 = vld [vmem:[#allocation8 + $0x4b0] sm:$0xff]
    %v715 = vld [vmem:[#allocation8 + $0x4b8] sm:$0xff]
    %v716 = vld [vmem:[#allocation8 + $0x4c0] sm:$0xff]
    %v717 = vld [vmem:[#allocation8 + $0x4c8] sm:$0xff]
    %v718 = vld [vmem:[#allocation8 + $0x4d0] sm:$0xff]
    %v719 = vld [vmem:[#allocation8 + $0x4d8] sm:$0xff]
    %v720 = vld [vmem:[#allocation8 + $0x4e0] sm:$0xff]
    %v721 = vld [vmem:[#allocation8 + $0x4e8] sm:$0xff]
    %v722 = vld [vmem:[#allocation8 + $0x4f0] sm:$0xff]
    %v723 = vld [vmem:[#allocation8 + $0x4f8] sm:$0xff]
    %v724 = vld [vmem:[#allocation8 + $0x500] sm:$0xff]
    %v725 = vld [vmem:[#allocation8 + $0x508] sm:$0xff]
    %v726 = vld [vmem:[#allocation8 + $0x510] sm:$0xff]
    %v727 = vld [vmem:[#allocation8 + $0x518] sm:$0xff]
    %v728 = vld [vmem:[#allocation8 + $0x520] sm:$0xff]
    %v729 = vld [vmem:[#allocation8 + $0x528] sm:$0xff]
    %v730 = vld [vmem:[#allocation8 + $0x530] sm:$0xff]
    %v731 = vld [vmem:[#allocation8 + $0x538] sm:$0xff]
    %v732 = vld [vmem:[#allocation8 + $0x540] sm:$0xff]
    %v733 = vld [vmem:[#allocation8 + $0x548] sm:$0xff]
    %v734 = vld [vmem:[#allocation8 + $0x550] sm:$0xff]
    %v735 = vld [vmem:[#allocation8 + $0x558] sm:$0xff]
    %v736 = vld [vmem:[#allocation8 + $0x560] sm:$0xff]
    %v737 = vld [vmem:[#allocation8 + $0x568] sm:$0xff]
    %v738 = vld [vmem:[#allocation8 + $0x570] sm:$0xff]
    %v739 = vld [vmem:[#allocation8 + $0x578] sm:$0xff]
    %v740 = vld [vmem:[#allocation8 + $0x580] sm:$0xff]
    %v741 = vld [vmem:[#allocation8 + $0x588] sm:$0xff]
    %v742 = vld [vmem:[#allocation8 + $0x590] sm:$0xff]
    %v743 = vld [vmem:[#allocation8 + $0x598] sm:$0xff]
    %v744 = vld [vmem:[#allocation8 + $0x5a0] sm:$0xff]
    %v745 = vld [vmem:[#allocation8 + $0x5a8] sm:$0xff]
    %v746 = vld [vmem:[#allocation8 + $0x5b0] sm:$0xff]
    %v747 = vld [vmem:[#allocation8 + $0x5b8] sm:$0xff]
    %v748 = vld [vmem:[#allocation8 + $0x5c0] sm:$0xff]
    %v749 = vld [vmem:[#allocation8 + $0x5c8] sm:$0xff]
    %v750 = vld [vmem:[#allocation8 + $0x5d0] sm:$0xff]
    %v751 = vld [vmem:[#allocation8 + $0x5d8] sm:$0xff]
    %v752 = vld [vmem:[#allocation8 + $0x5e0] sm:$0xff]
    %v753 = vld [vmem:[#allocation8 + $0x5e8] sm:$0xff]
    %v754 = vld [vmem:[#allocation8 + $0x5f0] sm:$0xff]
    %v755 = vld [vmem:[#allocation8 + $0x5f8] sm:$0xff]
    %v756 = vld [vmem:[#allocation8 + $0x600] sm:$0xff]
    %v757 = vld [vmem:[#allocation8 + $0x608] sm:$0xff]
    %v758 = vld [vmem:[#allocation8 + $0x610] sm:$0xff]
    %v759 = vld [vmem:[#allocation8 + $0x618] sm:$0xff]
    %v760 = vld [vmem:[#allocation8 + $0x620] sm:$0xff]
    %v761 = vld [vmem:[#allocation8 + $0x628] sm:$0xff]
    %v762 = vld [vmem:[#allocation8 + $0x630] sm:$0xff]
    %v763 = vld [vmem:[#allocation8 + $0x638] sm:$0xff]
    %v764 = vld [vmem:[#allocation8 + $0x640] sm:$0xff]
    %v765 = vld [vmem:[#allocation8 + $0x648] sm:$0xff]
    %v766 = vld [vmem:[#allocation8 + $0x650] sm:$0xff]
    %v767 = vld [vmem:[#allocation8 + $0x658] sm:$0xff]
    %v768 = vld [vmem:[#allocation8 + $0x660] sm:$0xff]
    %v769 = vld [vmem:[#allocation8 + $0x668] sm:$0xff]
    %v770 = vld [vmem:[#allocation8 + $0x670] sm:$0xff]
    %v771 = vld [vmem:[#allocation8 + $0x678] sm:$0xff]
    %v772 = vld [vmem:[#allocation8 + $0x680] sm:$0xff]
    %v773 = vld [vmem:[#allocation8 + $0x688] sm:$0xff]
    %v774 = vld [vmem:[#allocation8 + $0x690] sm:$0xff]
    %v775 = vld [vmem:[#allocation8 + $0x698] sm:$0xff]
    %v776 = vld [vmem:[#allocation8 + $0x6a0] sm:$0xff]
    %v777 = vld [vmem:[#allocation8 + $0x6a8] sm:$0xff]
    %v778 = vld [vmem:[#allocation8 + $0x6b0] sm:$0xff]
    %v779 = vld [vmem:[#allocation8 + $0x6b8] sm:$0xff]
    %v780 = vld [vmem:[#allocation8 + $0x6c0] sm:$0xff]
    %v781 = vld [vmem:[#allocation8 + $0x6c8] sm:$0xff]
    %v782 = vld [vmem:[#allocation8 + $0x6d0] sm:$0xff]
    %v783 = vld [vmem:[#allocation8 + $0x6d8] sm:$0xff]
    %v784 = vld [vmem:[#allocation8 + $0x6e0] sm:$0xff]
    %v785 = vld [vmem:[#allocation8 + $0x6e8] sm:$0xff]
    %v786 = vld [vmem:[#allocation8 + $0x6f0] sm:$0xff]
    %v787 = vld [vmem:[#allocation8 + $0x6f8] sm:$0xff]
    %v788 = vld [vmem:[#allocation8 + $0x700] sm:$0xff]
    %v789 = vld [vmem:[#allocation8 + $0x708] sm:$0xff]
    %v790 = vld [vmem:[#allocation8 + $0x710] sm:$0xff]
    %v791 = vld [vmem:[#allocation8 + $0x718] sm:$0xff]
    %v792 = vld [vmem:[#allocation8 + $0x720] sm:$0xff]
    %v793 = vld [vmem:[#allocation8 + $0x728] sm:$0xff]
    %v794 = vld [vmem:[#allocation8 + $0x730] sm:$0xff]
    %v795 = vld [vmem:[#allocation8 + $0x738] sm:$0xff]
    %v796 = vld [vmem:[#allocation8 + $0x740] sm:$0xff]
    %v797 = vld [vmem:[#allocation8 + $0x748] sm:$0xff]
    %v798 = vld [vmem:[#allocation8 + $0x750] sm:$0xff]
    %v799 = vld [vmem:[#allocation8 + $0x758] sm:$0xff]
    %v800 = vld [vmem:[#allocation8 + $0x760] sm:$0xff]
    %v801 = vld [vmem:[#allocation8 + $0x768] sm:$0xff]
    %v802 = vld [vmem:[#allocation8 + $0x770] sm:$0xff]
    %v803 = vld [vmem:[#allocation8 + $0x778] sm:$0xff]
    %v804 = vld [vmem:[#allocation8 + $0x780] sm:$0xff]
    %v805 = vld [vmem:[#allocation8 + $0x788] sm:$0xff]
    %v806 = vld [vmem:[#allocation8 + $0x790] sm:$0xff]
    %v807 = vld [vmem:[#allocation8 + $0x798] sm:$0xff]
    %v808 = vld [vmem:[#allocation8 + $0x7a0] sm:$0xff]
    %v809 = vld [vmem:[#allocation8 + $0x7a8] sm:$0xff]
    %v810 = vld [vmem:[#allocation8 + $0x7b0] sm:$0xff]
    %v811 = vld [vmem:[#allocation8 + $0x7b8] sm:$0xff]
    %v812 = vld [vmem:[#allocation8 + $0x7c0] sm:$0xff]
    %v813 = vld [vmem:[#allocation8 + $0x7c8] sm:$0xff]
    %v814 = vld [vmem:[#allocation8 + $0x7d0] sm:$0xff]
    %v815 = vld [vmem:[#allocation8 + $0x7d8] sm:$0xff]
    %v816 = vld [vmem:[#allocation8 + $0x7e0] sm:$0xff]
    %v817 = vld [vmem:[#allocation8 + $0x7e8] sm:$0xff]
    %v818 = vld [vmem:[#allocation8 + $0x7f0] sm:$0xff]
    %v819 = vld [vmem:[#allocation8 + $0x7f8] sm:$0xff]
    %v820 = vld [vmem:[#allocation8 + $0x800] sm:$0xff]
    %v821 = vld [vmem:[#allocation8 + $0x808] sm:$0xff]
    %v822 = vld [vmem:[#allocation8 + $0x810] sm:$0xff]
    %v823 = vld [vmem:[#allocation8 + $0x818] sm:$0xff]
    %v824 = vld [vmem:[#allocation8 + $0x820] sm:$0xff]
    %v825 = vld [vmem:[#allocation8 + $0x828] sm:$0xff]
    %v826 = vld [vmem:[#allocation8 + $0x830] sm:$0xff]
    %v827 = vld [vmem:[#allocation8 + $0x838] sm:$0xff]
    %v828 = vld [vmem:[#allocation8 + $0x840] sm:$0xff]
    %v829 = vld [vmem:[#allocation8 + $0x848] sm:$0xff]
    %v830 = vld [vmem:[#allocation8 + $0x850] sm:$0xff]
    %v831 = vld [vmem:[#allocation8 + $0x858] sm:$0xff]
    %v832 = vld [vmem:[#allocation8 + $0x860] sm:$0xff]
    %v833 = vld [vmem:[#allocation8 + $0x868] sm:$0xff]
    %v834 = vld [vmem:[#allocation8 + $0x870] sm:$0xff]
    %v835 = vld [vmem:[#allocation8 + $0x878] sm:$0xff]
    %v836 = vld [vmem:[#allocation8 + $0x880] sm:$0xff]
    %v837 = vld [vmem:[#allocation8 + $0x888] sm:$0xff]
    %v838 = vld [vmem:[#allocation8 + $0x890] sm:$0xff]
    %v839 = vld [vmem:[#allocation8 + $0x898] sm:$0xff]
    %v840 = vld [vmem:[#allocation8 + $0x8a0] sm:$0xff]
    %v841 = vld [vmem:[#allocation8 + $0x8a8] sm:$0xff]
    %v842 = vld [vmem:[#allocation8 + $0x8b0] sm:$0xff]
    %v843 = vld [vmem:[#allocation8 + $0x8b8] sm:$0xff]
    %v844 = vld [vmem:[#allocation8 + $0x8c0] sm:$0xff]
    %v845 = vld [vmem:[#allocation8 + $0x8c8] sm:$0xff]
    %v846 = vld [vmem:[#allocation8 + $0x8d0] sm:$0xff]
    %v847 = vld [vmem:[#allocation8 + $0x8d8] sm:$0xff]
    %v848 = vld [vmem:[#allocation8 + $0x8e0] sm:$0xff]
    %v849 = vld [vmem:[#allocation8 + $0x8e8] sm:$0xff]
    %v850 = vld [vmem:[#allocation8 + $0x8f0] sm:$0xff]
    %v851 = vld [vmem:[#allocation8 + $0x8f8] sm:$0xff]
    %v852 = vld [vmem:[#allocation8 + $0x900] sm:$0xff]
    %v853 = vld [vmem:[#allocation8 + $0x908] sm:$0xff]
    %v854 = vld [vmem:[#allocation8 + $0x910] sm:$0xff]
    %v855 = vld [vmem:[#allocation8 + $0x918] sm:$0xff]
    %v856 = vld [vmem:[#allocation8 + $0x920] sm:$0xff]
    %v857 = vld [vmem:[#allocation8 + $0x928] sm:$0xff]
    %v858 = vld [vmem:[#allocation8 + $0x930] sm:$0xff]
    %v859 = vld [vmem:[#allocation8 + $0x938] sm:$0xff]
    %v860 = vld [vmem:[#allocation8 + $0x940] sm:$0xff]
    %v861 = vld [vmem:[#allocation8 + $0x948] sm:$0xff]
    %v862 = vld [vmem:[#allocation8 + $0x950] sm:$0xff]
    %v863 = vld [vmem:[#allocation8 + $0x958] sm:$0xff]
    %v864 = vld [vmem:[#allocation8 + $0x960] sm:$0xff]
    %v865 = vld [vmem:[#allocation8 + $0x968] sm:$0xff]
    %v866 = vld [vmem:[#allocation8 + $0x970] sm:$0xff]
    %v867 = vld [vmem:[#allocation8 + $0x978] sm:$0xff]
    %v868 = vld [vmem:[#allocation8 + $0x980] sm:$0xff]
    %v869 = vld [vmem:[#allocation8 + $0x988] sm:$0xff]
    %v870 = vld [vmem:[#allocation8 + $0x990] sm:$0xff]
    %v871 = vld [vmem:[#allocation8 + $0x998] sm:$0xff]
    %v872 = vld [vmem:[#allocation8 + $0x9a0] sm:$0xff]
    %v873 = vld [vmem:[#allocation8 + $0x9a8] sm:$0xff]
    %v874 = vld [vmem:[#allocation8 + $0x9b0] sm:$0xff]
    %v875 = vld [vmem:[#allocation8 + $0x9b8] sm:$0xff]
    %v876 = vld [vmem:[#allocation8 + $0x9c0] sm:$0xff]
    %v877 = vld [vmem:[#allocation8 + $0x9c8] sm:$0xff]
    %v878 = vld [vmem:[#allocation8 + $0x9d0] sm:$0xff]
    %v879 = vld [vmem:[#allocation8 + $0x9d8] sm:$0xff]
    %v880 = vld [vmem:[#allocation8 + $0x9e0] sm:$0xff]
    %v881 = vld [vmem:[#allocation8 + $0x9e8] sm:$0xff]
    %v882 = vld [vmem:[#allocation8 + $0x9f0] sm:$0xff]
    %v883 = vld [vmem:[#allocation8 + $0x9f8] sm:$0xff]
    %v884 = vld [vmem:[#allocation8 + $0xa00] sm:$0xff]
    %v885 = vld [vmem:[#allocation8 + $0xa08] sm:$0xff]
    %v886 = vld [vmem:[#allocation8 + $0xa10] sm:$0xff]
    %v887 = vld [vmem:[#allocation8 + $0xa18] sm:$0xff]
    %v888 = vld [vmem:[#allocation8 + $0xa20] sm:$0xff]
    %v889 = vld [vmem:[#allocation8 + $0xa28] sm:$0xff]
    %v890 = vld [vmem:[#allocation8 + $0xa30] sm:$0xff]
    %v891 = vld [vmem:[#allocation8 + $0xa38] sm:$0xff]
    %v892 = vld [vmem:[#allocation8 + $0xa40] sm:$0xff]
    %v893 = vld [vmem:[#allocation8 + $0xa48] sm:$0xff]
    %v894 = vld [vmem:[#allocation8 + $0xa50] sm:$0xff]
    %v895 = vld [vmem:[#allocation8 + $0xa58] sm:$0xff]
    %v896 = vld [vmem:[#allocation8 + $0xa60] sm:$0xff]
    %v897 = vld [vmem:[#allocation8 + $0xa68] sm:$0xff]
    %v898 = vld [vmem:[#allocation8 + $0xa70] sm:$0xff]
    %v899 = vld [vmem:[#allocation8 + $0xa78] sm:$0xff]
    %v900 = vld [vmem:[#allocation8 + $0xa80] sm:$0xff]
    %v901 = vld [vmem:[#allocation8 + $0xa88] sm:$0xff]
    %v902 = vld [vmem:[#allocation8 + $0xa90] sm:$0xff]
    %v903 = vld [vmem:[#allocation8 + $0xa98] sm:$0xff]
    %v904 = vld [vmem:[#allocation8 + $0xaa0] sm:$0xff]
    %v905 = vld [vmem:[#allocation8 + $0xaa8] sm:$0xff]
    %v906 = vld [vmem:[#allocation8 + $0xab0] sm:$0xff]
    %v907 = vld [vmem:[#allocation8 + $0xab8] sm:$0xff]
    %v908 = vld [vmem:[#allocation8 + $0xac0] sm:$0xff]
    %v909 = vld [vmem:[#allocation8 + $0xac8] sm:$0xff]
    %v910 = vld [vmem:[#allocation8 + $0xad0] sm:$0xff]
    %v911 = vld [vmem:[#allocation8 + $0xad8] sm:$0xff]
    %v912 = vld [vmem:[#allocation8 + $0xae0] sm:$0xff]
    %v913 = vld [vmem:[#allocation8 + $0xae8] sm:$0xff]
    %v914 = vld [vmem:[#allocation8 + $0xaf0] sm:$0xff]
    %v915 = vld [vmem:[#allocation8 + $0xaf8] sm:$0xff]
    %v916 = vld [vmem:[#allocation8 + $0xb00] sm:$0xff]
    %v917 = vld [vmem:[#allocation8 + $0xb08] sm:$0xff]
    %v918 = vld [vmem:[#allocation8 + $0xb10] sm:$0xff]
    %v919 = vld [vmem:[#allocation8 + $0xb18] sm:$0xff]
    %v920 = vld [vmem:[#allocation8 + $0xb20] sm:$0xff]
    %v921 = vld [vmem:[#allocation8 + $0xb28] sm:$0xff]
    %v922 = vld [vmem:[#allocation8 + $0xb30] sm:$0xff]
    %v923 = vld [vmem:[#allocation8 + $0xb38] sm:$0xff]
    %v924 = vld [vmem:[#allocation8 + $0xb40] sm:$0xff]
    %v925 = vld [vmem:[#allocation8 + $0xb48] sm:$0xff]
    %v926 = vld [vmem:[#allocation8 + $0xb50] sm:$0xff]
    %v927 = vld [vmem:[#allocation8 + $0xb58] sm:$0xff]
    %v928 = vld [vmem:[#allocation8 + $0xb60] sm:$0xff]
    %v929 = vld [vmem:[#allocation8 + $0xb68] sm:$0xff]
    %v930 = vld [vmem:[#allocation8 + $0xb70] sm:$0xff]
    %v931 = vld [vmem:[#allocation8 + $0xb78] sm:$0xff]
    %v932 = vld [vmem:[#allocation8 + $0xb80] sm:$0xff]
    %v933 = vld [vmem:[#allocation8 + $0xb88] sm:$0xff]
    %v934 = vld [vmem:[#allocation8 + $0xb90] sm:$0xff]
    %v935 = vld [vmem:[#allocation8 + $0xb98] sm:$0xff]
    %v936 = vld [vmem:[#allocation8 + $0xba0] sm:$0xff]
    %v937 = vld [vmem:[#allocation8 + $0xba8] sm:$0xff]
    %v938 = vld [vmem:[#allocation8 + $0xbb0] sm:$0xff]
    %v939 = vld [vmem:[#allocation8 + $0xbb8] sm:$0xff]
    %v940 = vld [vmem:[#allocation8 + $0xbc0] sm:$0xff]
    %v941 = vld [vmem:[#allocation8 + $0xbc8] sm:$0xff]
    %v942 = vld [vmem:[#allocation8 + $0xbd0] sm:$0xff]
    %v943 = vld [vmem:[#allocation8 + $0xbd8] sm:$0xff]
    %v944 = vld [vmem:[#allocation8 + $0xbe0] sm:$0xff]
    %v945 = vld [vmem:[#allocation8 + $0xbe8] sm:$0xff]
    %v946 = vld [vmem:[#allocation8 + $0xbf0] sm:$0xff]
    %v947 = vld [vmem:[#allocation8 + $0xbf8] sm:$0xff]
    %v948 = vld [vmem:[#allocation8 + $0xc00] sm:$0xff]
    %v949 = vld [vmem:[#allocation8 + $0xc08] sm:$0xff]
    %v950 = vld [vmem:[#allocation8 + $0xc10] sm:$0xff]
    %v951 = vld [vmem:[#allocation8 + $0xc18] sm:$0xff]
    %v952 = vld [vmem:[#allocation8 + $0xc20] sm:$0xff]
    %v953 = vld [vmem:[#allocation8 + $0xc28] sm:$0xff]
    %v954 = vld [vmem:[#allocation8 + $0xc30] sm:$0xff]
    %v955 = vld [vmem:[#allocation8 + $0xc38] sm:$0xff]
    %v956 = vld [vmem:[#allocation8 + $0xc40] sm:$0xff]
    %v957 = vld [vmem:[#allocation8 + $0xc48] sm:$0xff]
    %v958 = vld [vmem:[#allocation8 + $0xc50] sm:$0xff]
    %v959 = vld [vmem:[#allocation8 + $0xc58] sm:$0xff]
    %v960 = vld [vmem:[#allocation8 + $0xc60] sm:$0xff]
    %v961 = vld [vmem:[#allocation8 + $0xc68] sm:$0xff]
    %v962 = vld [vmem:[#allocation8 + $0xc70] sm:$0xff]
    %v963 = vld [vmem:[#allocation8 + $0xc78] sm:$0xff]
    %v964 = vld [vmem:[#allocation8 + $0xc80] sm:$0xff]
    %v965 = vld [vmem:[#allocation8 + $0xc88] sm:$0xff]
    %v966 = vld [vmem:[#allocation8 + $0xc90] sm:$0xff]
    %v967 = vld [vmem:[#allocation8 + $0xc98] sm:$0xff]
    %v968 = vld [vmem:[#allocation8 + $0xca0] sm:$0xff]
    %v969 = vld [vmem:[#allocation8 + $0xca8] sm:$0xff]
    %v970 = vld [vmem:[#allocation8 + $0xcb0] sm:$0xff]
    %v971 = vld [vmem:[#allocation8 + $0xcb8] sm:$0xff]
    %v972 = vld [vmem:[#allocation8 + $0xcc0] sm:$0xff]
    %v973 = vld [vmem:[#allocation8 + $0xcc8] sm:$0xff]
    %v974 = vld [vmem:[#allocation8 + $0xcd0] sm:$0xff]
    %v975 = vld [vmem:[#allocation8 + $0xcd8] sm:$0xff]
    %v976 = vld [vmem:[#allocation8 + $0xce0] sm:$0xff]
    %v977 = vld [vmem:[#allocation8 + $0xce8] sm:$0xff]
    %v978 = vld [vmem:[#allocation8 + $0xcf0] sm:$0xff]
    %v979 = vld [vmem:[#allocation8 + $0xcf8] sm:$0xff]
    %v980 = vld [vmem:[#allocation8 + $0xd00] sm:$0xff]
    %v981 = vld [vmem:[#allocation8 + $0xd08] sm:$0xff]
    %v982 = vld [vmem:[#allocation8 + $0xd10] sm:$0xff]
    %v983 = vld [vmem:[#allocation8 + $0xd18] sm:$0xff]
    %v984 = vld [vmem:[#allocation8 + $0xd20] sm:$0xff]
    %v985 = vld [vmem:[#allocation8 + $0xd28] sm:$0xff]
    %v986 = vld [vmem:[#allocation8 + $0xd30] sm:$0xff]
    %v987 = vld [vmem:[#allocation8 + $0xd38] sm:$0xff]
    %v988 = vld [vmem:[#allocation8 + $0xd40] sm:$0xff]
    %v989 = vld [vmem:[#allocation8 + $0xd48] sm:$0xff]
    %v990 = vld [vmem:[#allocation8 + $0xd50] sm:$0xff]
    %v991 = vld [vmem:[#allocation8 + $0xd58] sm:$0xff]
    %v992 = vld [vmem:[#allocation8 + $0xd60] sm:$0xff]
    %v993 = vld [vmem:[#allocation8 + $0xd68] sm:$0xff]
    %v994 = vld [vmem:[#allocation8 + $0xd70] sm:$0xff]
    %v995 = vld [vmem:[#allocation8 + $0xd78] sm:$0xff]
    %v996 = vld [vmem:[#allocation8 + $0xd80] sm:$0xff]
    %v997 = vld [vmem:[#allocation8 + $0xd88] sm:$0xff]
    %v998 = vld [vmem:[#allocation8 + $0xd90] sm:$0xff]
    %v999 = vld [vmem:[#allocation8 + $0xd98] sm:$0xff]
    %v1000 = vld [vmem:[#allocation8 + $0xda0] sm:$0xff]
    %v1001 = vld [vmem:[#allocation8 + $0xda8] sm:$0xff]
    %v1002 = vld [vmem:[#allocation8 + $0xdb0] sm:$0xff]
    %v1003 = vld [vmem:[#allocation8 + $0xdb8] sm:$0xff]
    %v1004 = vld [vmem:[#allocation8 + $0xdc0] sm:$0xff]
    %v1005 = vld [vmem:[#allocation8 + $0xdc8] sm:$0xff]
    %v1006 = vld [vmem:[#allocation8 + $0xdd0] sm:$0xff]
    %v1007 = vld [vmem:[#allocation8 + $0xdd8] sm:$0xff]
    %v1008 = vld [vmem:[#allocation8 + $0xde0] sm:$0xff]
    %v1009 = vld [vmem:[#allocation8 + $0xde8] sm:$0xff]
    %v1010 = vld [vmem:[#allocation8 + $0xdf0] sm:$0xff]
    %v1011 = vld [vmem:[#allocation8 + $0xdf8] sm:$0xff]
    %v1013 = vcombine.high %v563, %v563
    %v1015 = vunpack.c.l.s4 1983009808
    %v1016 = vunpack.c.0.s8 %v1015
    %v1017 = vlaneseq
    %v1018 = vshrl.u32 %v1017, 7
    %v1019 = vsub.s32 %v1016, %v1018
    %v1020 = vrot.slane %v563, %v1019
    %v1022 = vunpack.c.l.s4 1983009808
    %v1023 = vunpack.c.0.s8 %v1022
    %v1024 = vlaneseq
    %v1025 = vshrl.u32 %v1024, 7
    %v1026 = vsub.s32 %v1023, %v1025
    %v1027 = vrot.slane %v1013, %v1026
    %v1028 = vcombine.high %v1020, %v1020
    %v1029 = vcombine.high %v1027, %v1027
    %1034 = vmatprep.subr.mxu0 %v565
    %1035 = vmatpush1.msra.mxu0 %v564
    %1036 = vmatprep.subr.mxu0 %v572
    %1037 = vmatpush1.msra.mxu0 %v571
    %1038 = vmatprep.subr.mxu0 %v579
    %1039 = vmatpush1.msra.mxu0 %v578
    %1040 = vmatprep.subr.mxu0 %v586
    %1041 = vmatpush1.msra.mxu0 %v585
    %1042 = vmatprep.subr.mxu0 %v593
    %1043 = vmatpush1.msra.mxu0 %v592
    %1044 = vmatprep.subr.mxu0 %v600
    %1045 = vmatpush1.msra.mxu0 %v599
    %1046 = vmatprep.subr.mxu0 %v607
    %1047 = vmatpush1.msra.mxu0 %v606
    %1048 = vmatprep.subr.mxu0 %v614
    %1049 = vmatpush1.msra.mxu0 %v613
    %1050 = vmatprep.subr.mxu0 %v621
    %1051 = vmatpush1.msra.mxu0 %v620
    %1052 = vmatprep.subr.mxu0 %v628
    %1053 = vmatpush1.msra.mxu0 %v627
    %1054 = vmatprep.subr.mxu0 %v635
    %1055 = vmatpush1.msra.mxu0 %v634
    %1056 = vmatprep.subr.mxu0 %v642
    %1057 = vmatpush1.msra.mxu0 %v641
    %1058 = vmatprep.subr.mxu0 %v649
    %1059 = vmatpush1.msra.mxu0 %v648
    %1060 = vmatprep.subr.mxu0 %v656
    %1061 = vmatpush1.msra.mxu0 %v655
    %1062 = vmatprep.subr.mxu0 %v663
    %1063 = vmatpush1.msra.mxu0 %v662
    %1064 = vmatprep.subr.mxu0 %v670
    %1065 = vmatpush1.msra.mxu0 %v669
    %1066 = vmatprep.subr.mxu0 %v677
    %1067 = vmatpush1.msra.mxu0 %v676
    %1068 = vmatprep.subr.mxu0 %v684
    %1069 = vmatpush1.msra.mxu0 %v683
    %1070 = vmatprep.subr.mxu0 %v691
    %1071 = vmatpush1.msra.mxu0 %v690
    %1072 = vmatprep.subr.mxu0 %v698
    %1073 = vmatpush1.msra.mxu0 %v697
    %1074 = vmatprep.subr.mxu0 %v705
    %1075 = vmatpush1.msra.mxu0 %v704
    %1076 = vmatprep.subr.mxu0 %v712
    %1077 = vmatpush1.msra.mxu0 %v711
    %1078 = vmatprep.subr.mxu0 %v719
    %1079 = vmatpush1.msra.mxu0 %v718
    %1080 = vmatprep.subr.mxu0 %v726
    %1081 = vmatpush1.msra.mxu0 %v725
    %1082 = vmatprep.subr.mxu0 %v733
    %1083 = vmatpush1.msra.mxu0 %v732
    %1084 = vmatprep.subr.mxu0 %v740
    %1085 = vmatpush1.msra.mxu0 %v739
    %1086 = vmatprep.subr.mxu0 %v747
    %1087 = vmatpush1.msra.mxu0 %v746
    %1088 = vmatprep.subr.mxu0 %v754
    %1089 = vmatpush1.msra.mxu0 %v753
    %1090 = vmatprep.subr.mxu0 %v761
    %1091 = vmatpush1.msra.mxu0 %v760
    %1092 = vmatprep.subr.mxu0 %v768
    %1093 = vmatpush1.msra.mxu0 %v767
    %1094 = vmatprep.subr.mxu0 %v775
    %1095 = vmatpush1.msra.mxu0 %v774
    %1096 = vmatprep.subr.mxu0 %v782
    %1097 = vmatpush1.msra.mxu0 %v781
    %1098 = vmatprep.mubr.f32.mxu0 %v1028
    %1099 = vmatmul.mubr.f32.gmra.mrb[0].mxu0 %v1020
    %v1100 = vpop.f32.mrb[0].mxu0
    %v1101 = vadd.f32 0.0, %v1100
    %v1102 = vpop.f32.mrb[0].mxu0
    %v1103 = vadd.f32 0.0, %v1102
    %1104 = vdwg.mxu0
    %1105 = vmatprep.subr.mxu0 %v789
    %1106 = vmatpush1.msra.mxu0 %v788
    %1107 = vmatprep.subr.mxu0 %v796
    %1108 = vmatpush1.msra.mxu0 %v795
    %1109 = vmatprep.subr.mxu0 %v803
    %1110 = vmatpush1.msra.mxu0 %v802
    %1111 = vmatprep.subr.mxu0 %v810
    %1112 = vmatpush1.msra.mxu0 %v809
    %1113 = vmatprep.subr.mxu0 %v817
    %1114 = vmatpush1.msra.mxu0 %v816
    %1115 = vmatprep.subr.mxu0 %v824
    %1116 = vmatpush1.msra.mxu0 %v823
    %1117 = vmatprep.subr.mxu0 %v831
    %1118 = vmatpush1.msra.mxu0 %v830
    %1119 = vmatprep.subr.mxu0 %v838
    %1120 = vmatpush1.msra.mxu0 %v837
    %1121 = vmatprep.subr.mxu0 %v845
    %1122 = vmatpush1.msra.mxu0 %v844
    %1123 = vmatprep.subr.mxu0 %v852
    %1124 = vmatpush1.msra.mxu0 %v851
    %1125 = vmatprep.subr.mxu0 %v859
    %1126 = vmatpush1.msra.mxu0 %v858
    %1127 = vmatprep.subr.mxu0 %v866
    %1128 = vmatpush1.msra.mxu0 %v865
    %1129 = vmatprep.subr.mxu0 %v873
    %1130 = vmatpush1.msra.mxu0 %v872
    %1131 = vmatprep.subr.mxu0 %v880
    %1132 = vmatpush1.msra.mxu0 %v879
    %1133 = vmatprep.subr.mxu0 %v887
    %1134 = vmatpush1.msra.mxu0 %v886
    %1135 = vmatprep.subr.mxu0 %v894
    %1136 = vmatpush1.msra.mxu0 %v893
    %1137 = vmatprep.subr.mxu0 %v901
    %1138 = vmatpush1.msra.mxu0 %v900
    %1139 = vmatprep.subr.mxu0 %v908
    %1140 = vmatpush1.msra.mxu0 %v907
    %1141 = vmatprep.subr.mxu0 %v915
    %1142 = vmatpush1.msra.mxu0 %v914
    %1143 = vmatprep.subr.mxu0 %v922
    %1144 = vmatpush1.msra.mxu0 %v921
    %1145 = vmatprep.subr.mxu0 %v929
    %1146 = vmatpush1.msra.mxu0 %v928
    %1147 = vmatprep.subr.mxu0 %v936
    %1148 = vmatpush1.msra.mxu0 %v935
    %1149 = vmatprep.subr.mxu0 %v943
    %1150 = vmatpush1.msra.mxu0 %v942
    %1151 = vmatprep.subr.mxu0 %v950
    %1152 = vmatpush1.msra.mxu0 %v949
    %1153 = vmatprep.subr.mxu0 %v957
    %1154 = vmatpush1.msra.mxu0 %v956
    %1155 = vmatprep.subr.mxu0 %v964
    %1156 = vmatpush1.msra.mxu0 %v963
    %1157 = vmatprep.subr.mxu0 %v971
    %1158 = vmatpush1.msra.mxu0 %v970
    %1159 = vmatprep.subr.mxu0 %v978
    %1160 = vmatpush1.msra.mxu0 %v977
    %1161 = vmatprep.subr.mxu0 %v985
    %1162 = vmatpush1.msra.mxu0 %v984
    %1163 = vmatprep.subr.mxu0 %v992
    %1164 = vmatpush1.msra.mxu0 %v991
    %1165 = vmatprep.subr.mxu0 %v999
    %1166 = vmatpush1.msra.mxu0 %v998
    %1167 = vmatprep.subr.mxu0 %v1006
    %1168 = vmatpush1.msra.mxu0 %v1005
    %1169 = vmatprep.mubr.f32.mxu0 %v1029
    %1170 = vmatmul.mubr.f32.gmra.mrb[0].mxu0 %v1027
    %v1171 = vpop.f32.mrb[0].mxu0
    %v1172 = vadd.f32 %v1101, %v1171
    %v1173 = vpop.f32.mrb[0].mxu0
    %v1174 = vadd.f32 %v1103, %v1173
    %1175 = vdwg.mxu0
    %1176 = vmatprep.subr.mxu0 %v567
    %1177 = vmatpush1.msra.mxu0 %v566
    %1178 = vmatprep.subr.mxu0 %v574
    %1179 = vmatpush1.msra.mxu0 %v573
    %1180 = vmatprep.subr.mxu0 %v581
    %1181 = vmatpush1.msra.mxu0 %v580
    %1182 = vmatprep.subr.mxu0 %v588
    %1183 = vmatpush1.msra.mxu0 %v587
    %1184 = vmatprep.subr.mxu0 %v595
    %1185 = vmatpush1.msra.mxu0 %v594
    %1186 = vmatprep.subr.mxu0 %v602
    %1187 = vmatpush1.msra.mxu0 %v601
    %1188 = vmatprep.subr.mxu0 %v609
    %1189 = vmatpush1.msra.mxu0 %v608
    %1190 = vmatprep.subr.mxu0 %v616
    %1191 = vmatpush1.msra.mxu0 %v615
    %1192 = vmatprep.subr.mxu0 %v623
    %1193 = vmatpush1.msra.mxu0 %v622
    %1194 = vmatprep.subr.mxu0 %v630
    %1195 = vmatpush1.msra.mxu0 %v629
    %1196 = vmatprep.subr.mxu0 %v637
    %1197 = vmatpush1.msra.mxu0 %v636
    %1198 = vmatprep.subr.mxu0 %v644
    %1199 = vmatpush1.msra.mxu0 %v643
    %1200 = vmatprep.subr.mxu0 %v651
    %1201 = vmatpush1.msra.mxu0 %v650
    %1202 = vmatprep.subr.mxu0 %v658
    %1203 = vmatpush1.msra.mxu0 %v657
    %1204 = vmatprep.subr.mxu0 %v665
    %1205 = vmatpush1.msra.mxu0 %v664
    %1206 = vmatprep.subr.mxu0 %v672
    %1207 = vmatpush1.msra.mxu0 %v671
    %1208 = vmatprep.subr.mxu0 %v679
    %1209 = vmatpush1.msra.mxu0 %v678
    %1210 = vmatprep.subr.mxu0 %v686
    %1211 = vmatpush1.msra.mxu0 %v685
    %1212 = vmatprep.subr.mxu0 %v693
    %1213 = vmatpush1.msra.mxu0 %v692
    %1214 = vmatprep.subr.mxu0 %v700
    %1215 = vmatpush1.msra.mxu0 %v699
    %1216 = vmatprep.subr.mxu0 %v707
    %1217 = vmatpush1.msra.mxu0 %v706
    %1218 = vmatprep.subr.mxu0 %v714
    %1219 = vmatpush1.msra.mxu0 %v713
    %1220 = vmatprep.subr.mxu0 %v721
    %1221 = vmatpush1.msra.mxu0 %v720
    %1222 = vmatprep.subr.mxu0 %v728
    %1223 = vmatpush1.msra.mxu0 %v727
    %1224 = vmatprep.subr.mxu0 %v735
    %1225 = vmatpush1.msra.mxu0 %v734
    %1226 = vmatprep.subr.mxu0 %v742
    %1227 = vmatpush1.msra.mxu0 %v741
    %1228 = vmatprep.subr.mxu0 %v749
    %1229 = vmatpush1.msra.mxu0 %v748
    %1230 = vmatprep.subr.mxu0 %v756
    %1231 = vmatpush1.msra.mxu0 %v755
    %1232 = vmatprep.subr.mxu0 %v763
    %1233 = vmatpush1.msra.mxu0 %v762
    %1234 = vmatprep.subr.mxu0 %v770
    %1235 = vmatpush1.msra.mxu0 %v769
    %1236 = vmatprep.subr.mxu0 %v777
    %1237 = vmatpush1.msra.mxu0 %v776
    %1238 = vmatprep.subr.mxu0 %v784
    %1239 = vmatpush1.msra.mxu0 %v783
    %1240 = vmatprep.mubr.f32.mxu0 %v1028
    %1241 = vmatmul.mubr.f32.gmra.mrb[0].mxu0 %v1020
    %v1242 = vpop.f32.mrb[0].mxu0
    %v1243 = vadd.f32 0.0, %v1242
    %v1244 = vpop.f32.mrb[0].mxu0
    %v1245 = vadd.f32 0.0, %v1244
    %1246 = vdwg.mxu0
    %1247 = vmatprep.subr.mxu0 %v791
    %1248 = vmatpush1.msra.mxu0 %v790
    %1249 = vmatprep.subr.mxu0 %v798
    %1250 = vmatpush1.msra.mxu0 %v797
    %1251 = vmatprep.subr.mxu0 %v805
    %1252 = vmatpush1.msra.mxu0 %v804
    %1253 = vmatprep.subr.mxu0 %v812
    %1254 = vmatpush1.msra.mxu0 %v811
    %1255 = vmatprep.subr.mxu0 %v819
    %1256 = vmatpush1.msra.mxu0 %v818
    %1257 = vmatprep.subr.mxu0 %v826
    %1258 = vmatpush1.msra.mxu0 %v825
    %1259 = vmatprep.subr.mxu0 %v833
    %1260 = vmatpush1.msra.mxu0 %v832
    %1261 = vmatprep.subr.mxu0 %v840
    %1262 = vmatpush1.msra.mxu0 %v839
    %1263 = vmatprep.subr.mxu0 %v847
    %1264 = vmatpush1.msra.mxu0 %v846
    %1265 = vmatprep.subr.mxu0 %v854
    %1266 = vmatpush1.msra.mxu0 %v853
    %1267 = vmatprep.subr.mxu0 %v861
    %1268 = vmatpush1.msra.mxu0 %v860
    %1269 = vmatprep.subr.mxu0 %v868
    %1270 = vmatpush1.msra.mxu0 %v867
    %1271 = vmatprep.subr.mxu0 %v875
    %1272 = vmatpush1.msra.mxu0 %v874
    %1273 = vmatprep.subr.mxu0 %v882
    %1274 = vmatpush1.msra.mxu0 %v881
    %1275 = vmatprep.subr.mxu0 %v889
    %1276 = vmatpush1.msra.mxu0 %v888
    %1277 = vmatprep.subr.mxu0 %v896
    %1278 = vmatpush1.msra.mxu0 %v895
    %1279 = vmatprep.subr.mxu0 %v903
    %1280 = vmatpush1.msra.mxu0 %v902
    %1281 = vmatprep.subr.mxu0 %v910
    %1282 = vmatpush1.msra.mxu0 %v909
    %1283 = vmatprep.subr.mxu0 %v917
    %1284 = vmatpush1.msra.mxu0 %v916
    %1285 = vmatprep.subr.mxu0 %v924
    %1286 = vmatpush1.msra.mxu0 %v923
    %1287 = vmatprep.subr.mxu0 %v931
    %1288 = vmatpush1.msra.mxu0 %v930
    %1289 = vmatprep.subr.mxu0 %v938
    %1290 = vmatpush1.msra.mxu0 %v937
    %1291 = vmatprep.subr.mxu0 %v945
    %1292 = vmatpush1.msra.mxu0 %v944
    %1293 = vmatprep.subr.mxu0 %v952
    %1294 = vmatpush1.msra.mxu0 %v951
    %1295 = vmatprep.subr.mxu0 %v959
    %1296 = vmatpush1.msra.mxu0 %v958
    %1297 = vmatprep.subr.mxu0 %v966
    %1298 = vmatpush1.msra.mxu0 %v965
    %1299 = vmatprep.subr.mxu0 %v973
    %1300 = vmatpush1.msra.mxu0 %v972
    %1301 = vmatprep.subr.mxu0 %v980
    %1302 = vmatpush1.msra.mxu0 %v979
    %1303 = vmatprep.subr.mxu0 %v987
    %1304 = vmatpush1.msra.mxu0 %v986
    %1305 = vmatprep.subr.mxu0 %v994
    %1306 = vmatpush1.msra.mxu0 %v993
    %1307 = vmatprep.subr.mxu0 %v1001
    %1308 = vmatpush1.msra.mxu0 %v1000
    %1309 = vmatprep.subr.mxu0 %v1008
    %1310 = vmatpush1.msra.mxu0 %v1007
    %1311 = vmatprep.mubr.f32.mxu0 %v1029
    %1312 = vmatmul.mubr.f32.gmra.mrb[0].mxu0 %v1027
    %v1313 = vpop.f32.mrb[0].mxu0
    %v1314 = vadd.f32 %v1243, %v1313
    %v1315 = vpop.f32.mrb[0].mxu0
    %v1316 = vadd.f32 %v1245, %v1315
    %1317 = vdwg.mxu0
    %1318 = vmatprep.subr.mxu0 %v569
    %1319 = vmatpush1.msra.mxu0 %v568
    %1320 = vmatprep.subr.mxu0 %v576
    %1321 = vmatpush1.msra.mxu0 %v575
    %1322 = vmatprep.subr.mxu0 %v583
    %1323 = vmatpush1.msra.mxu0 %v582
    %1324 = vmatprep.subr.mxu0 %v590
    %1325 = vmatpush1.msra.mxu0 %v589
    %1326 = vmatprep.subr.mxu0 %v597
    %1327 = vmatpush1.msra.mxu0 %v596
    %1328 = vmatprep.subr.mxu0 %v604
    %1329 = vmatpush1.msra.mxu0 %v603
    %1330 = vmatprep.subr.mxu0 %v611
    %1331 = vmatpush1.msra.mxu0 %v610
    %1332 = vmatprep.subr.mxu0 %v618
    %1333 = vmatpush1.msra.mxu0 %v617
    %1334 = vmatprep.subr.mxu0 %v625
    %1335 = vmatpush1.msra.mxu0 %v624
    %1336 = vmatprep.subr.mxu0 %v632
    %1337 = vmatpush1.msra.mxu0 %v631
    %1338 = vmatprep.subr.mxu0 %v639
    %1339 = vmatpush1.msra.mxu0 %v638
    %1340 = vmatprep.subr.mxu0 %v646
    %1341 = vmatpush1.msra.mxu0 %v645
    %1342 = vmatprep.subr.mxu0 %v653
    %1343 = vmatpush1.msra.mxu0 %v652
    %1344 = vmatprep.subr.mxu0 %v660
    %1345 = vmatpush1.msra.mxu0 %v659
    %1346 = vmatprep.subr.mxu0 %v667
    %1347 = vmatpush1.msra.mxu0 %v666
    %1348 = vmatprep.subr.mxu0 %v674
    %1349 = vmatpush1.msra.mxu0 %v673
    %1350 = vmatprep.subr.mxu0 %v681
    %1351 = vmatpush1.msra.mxu0 %v680
    %1352 = vmatprep.subr.mxu0 %v688
    %1353 = vmatpush1.msra.mxu0 %v687
    %1354 = vmatprep.subr.mxu0 %v695
    %1355 = vmatpush1.msra.mxu0 %v694
    %1356 = vmatprep.subr.mxu0 %v702
    %1357 = vmatpush1.msra.mxu0 %v701
    %1358 = vmatprep.subr.mxu0 %v709
    %1359 = vmatpush1.msra.mxu0 %v708
    %1360 = vmatprep.subr.mxu0 %v716
    %1361 = vmatpush1.msra.mxu0 %v715
    %1362 = vmatprep.subr.mxu0 %v723
    %1363 = vmatpush1.msra.mxu0 %v722
    %1364 = vmatprep.subr.mxu0 %v730
    %1365 = vmatpush1.msra.mxu0 %v729
    %1366 = vmatprep.subr.mxu0 %v737
    %1367 = vmatpush1.msra.mxu0 %v736
    %1368 = vmatprep.subr.mxu0 %v744
    %1369 = vmatpush1.msra.mxu0 %v743
    %1370 = vmatprep.subr.mxu0 %v751
    %1371 = vmatpush1.msra.mxu0 %v750
    %1372 = vmatprep.subr.mxu0 %v758
    %1373 = vmatpush1.msra.mxu0 %v757
    %1374 = vmatprep.subr.mxu0 %v765
    %1375 = vmatpush1.msra.mxu0 %v764
    %1376 = vmatprep.subr.mxu0 %v772
    %1377 = vmatpush1.msra.mxu0 %v771
    %1378 = vmatprep.subr.mxu0 %v779
    %1379 = vmatpush1.msra.mxu0 %v778
    %1380 = vmatprep.subr.mxu0 %v786
    %1381 = vmatpush1.msra.mxu0 %v785
    %1382 = vmatprep.mubr.f32.mxu0 %v1028
    %1383 = vmatmul.mubr.f32.gmra.mrb[0].mxu0 %v1020
    %v1384 = vpop.f32.mrb[0].mxu0
    %v1385 = vadd.f32 0.0, %v1384
    %v1386 = vpop.f32.mrb[0].mxu0
    %v1387 = vadd.f32 0.0, %v1386
    %1388 = vdwg.mxu0
    %1389 = vmatprep.subr.mxu0 %v793
    %1390 = vmatpush1.msra.mxu0 %v792
    %1391 = vmatprep.subr.mxu0 %v800
    %1392 = vmatpush1.msra.mxu0 %v799
    %1393 = vmatprep.subr.mxu0 %v807
    %1394 = vmatpush1.msra.mxu0 %v806
    %1395 = vmatprep.subr.mxu0 %v814
    %1396 = vmatpush1.msra.mxu0 %v813
    %1397 = vmatprep.subr.mxu0 %v821
    %1398 = vmatpush1.msra.mxu0 %v820
    %1399 = vmatprep.subr.mxu0 %v828
    %1400 = vmatpush1.msra.mxu0 %v827
    %1401 = vmatprep.subr.mxu0 %v835
    %1402 = vmatpush1.msra.mxu0 %v834
    %1403 = vmatprep.subr.mxu0 %v842
    %1404 = vmatpush1.msra.mxu0 %v841
    %1405 = vmatprep.subr.mxu0 %v849
    %1406 = vmatpush1.msra.mxu0 %v848
    %1407 = vmatprep.subr.mxu0 %v856
    %1408 = vmatpush1.msra.mxu0 %v855
    %1409 = vmatprep.subr.mxu0 %v863
    %1410 = vmatpush1.msra.mxu0 %v862
    %1411 = vmatprep.subr.mxu0 %v870
    %1412 = vmatpush1.msra.mxu0 %v869
    %1413 = vmatprep.subr.mxu0 %v877
    %1414 = vmatpush1.msra.mxu0 %v876
    %1415 = vmatprep.subr.mxu0 %v884
    %1416 = vmatpush1.msra.mxu0 %v883
    %1417 = vmatprep.subr.mxu0 %v891
    %1418 = vmatpush1.msra.mxu0 %v890
    %1419 = vmatprep.subr.mxu0 %v898
    %1420 = vmatpush1.msra.mxu0 %v897
    %1421 = vmatprep.subr.mxu0 %v905
    %1422 = vmatpush1.msra.mxu0 %v904
    %1423 = vmatprep.subr.mxu0 %v912
    %1424 = vmatpush1.msra.mxu0 %v911
    %1425 = vmatprep.subr.mxu0 %v919
    %1426 = vmatpush1.msra.mxu0 %v918
    %1427 = vmatprep.subr.mxu0 %v926
    %1428 = vmatpush1.msra.mxu0 %v925
    %1429 = vmatprep.subr.mxu0 %v933
    %1430 = vmatpush1.msra.mxu0 %v932
    %1431 = vmatprep.subr.mxu0 %v940
    %1432 = vmatpush1.msra.mxu0 %v939
    %1433 = vmatprep.subr.mxu0 %v947
    %1434 = vmatpush1.msra.mxu0 %v946
    %1435 = vmatprep.subr.mxu0 %v954
    %1436 = vmatpush1.msra.mxu0 %v953
    %1437 = vmatprep.subr.mxu0 %v961
    %1438 = vmatpush1.msra.mxu0 %v960
    %1439 = vmatprep.subr.mxu0 %v968
    %1440 = vmatpush1.msra.mxu0 %v967
    %1441 = vmatprep.subr.mxu0 %v975
    %1442 = vmatpush1.msra.mxu0 %v974
    %1443 = vmatprep.subr.mxu0 %v982
    %1444 = vmatpush1.msra.mxu0 %v981
    %1445 = vmatprep.subr.mxu0 %v989
    %1446 = vmatpush1.msra.mxu0 %v988
    %1447 = vmatprep.subr.mxu0 %v996
    %1448 = vmatpush1.msra.mxu0 %v995
    %1449 = vmatprep.subr.mxu0 %v1003
    %1450 = vmatpush1.msra.mxu0 %v1002
    %1451 = vmatprep.subr.mxu0 %v1010
    %1452 = vmatpush1.msra.mxu0 %v1009
    %1453 = vmatprep.mubr.f32.mxu0 %v1029
    %1454 = vmatmul.mubr.f32.gmra.mrb[0].mxu0 %v1027
    %v1455 = vpop.f32.mrb[0].mxu0
    %v1456 = vadd.f32 %v1385, %v1455
    %v1457 = vpop.f32.mrb[0].mxu0
    %v1458 = vadd.f32 %v1387, %v1457
    %1459 = vdwg.mxu0
    %1460 = vmatprep.subr.mxu0 0.0
    %1461 = vmatpush1.msra.mxu0 %v570
    %1462 = vmatprep.subr.mxu0 0.0
    %1463 = vmatpush1.msra.mxu0 %v577
    %1464 = vmatprep.subr.mxu0 0.0
    %1465 = vmatpush1.msra.mxu0 %v584
    %1466 = vmatprep.subr.mxu0 0.0
    %1467 = vmatpush1.msra.mxu0 %v591
    %1468 = vmatprep.subr.mxu0 0.0
    %1469 = vmatpush1.msra.mxu0 %v598
    %1470 = vmatprep.subr.mxu0 0.0
    %1471 = vmatpush1.msra.mxu0 %v605
    %1472 = vmatprep.subr.mxu0 0.0
    %1473 = vmatpush1.msra.mxu0 %v612
    %1474 = vmatprep.subr.mxu0 0.0
    %1475 = vmatpush1.msra.mxu0 %v619
    %1476 = vmatprep.subr.mxu0 0.0
    %1477 = vmatpush1.msra.mxu0 %v626
    %1478 = vmatprep.subr.mxu0 0.0
    %1479 = vmatpush1.msra.mxu0 %v633
    %1480 = vmatprep.subr.mxu0 0.0
    %1481 = vmatpush1.msra.mxu0 %v640
    %1482 = vmatprep.subr.mxu0 0.0
    %1483 = vmatpush1.msra.mxu0 %v647
    %1484 = vmatprep.subr.mxu0 0.0
    %1485 = vmatpush1.msra.mxu0 %v654
    %1486 = vmatprep.subr.mxu0 0.0
    %1487 = vmatpush1.msra.mxu0 %v661
    %1488 = vmatprep.subr.mxu0 0.0
    %1489 = vmatpush1.msra.mxu0 %v668
    %1490 = vmatprep.subr.mxu0 0.0
    %1491 = vmatpush1.msra.mxu0 %v675
    %1492 = vmatprep.subr.mxu0 0.0
    %1493 = vmatpush1.msra.mxu0 %v682
    %1494 = vmatprep.subr.mxu0 0.0
    %1495 = vmatpush1.msra.mxu0 %v689
    %1496 = vmatprep.subr.mxu0 0.0
    %1497 = vmatpush1.msra.mxu0 %v696
    %1498 = vmatprep.subr.mxu0 0.0
    %1499 = vmatpush1.msra.mxu0 %v703
    %1500 = vmatprep.subr.mxu0 0.0
    %1501 = vmatpush1.msra.mxu0 %v710
    %1502 = vmatprep.subr.mxu0 0.0
    %1503 = vmatpush1.msra.mxu0 %v717
    %1504 = vmatprep.subr.mxu0 0.0
    %1505 = vmatpush1.msra.mxu0 %v724
    %1506 = vmatprep.subr.mxu0 0.0
    %1507 = vmatpush1.msra.mxu0 %v731
    %1508 = vmatprep.subr.mxu0 0.0
    %1509 = vmatpush1.msra.mxu0 %v738
    %1510 = vmatprep.subr.mxu0 0.0
    %1511 = vmatpush1.msra.mxu0 %v745
    %1512 = vmatprep.subr.mxu0 0.0
    %1513 = vmatpush1.msra.mxu0 %v752
    %1514 = vmatprep.subr.mxu0 0.0
    %1515 = vmatpush1.msra.mxu0 %v759
    %1516 = vmatprep.subr.mxu0 0.0
    %1517 = vmatpush1.msra.mxu0 %v766
    %1518 = vmatprep.subr.mxu0 0.0
    %1519 = vmatpush1.msra.mxu0 %v773
    %1520 = vmatprep.subr.mxu0 0.0
    %1521 = vmatpush1.msra.mxu0 %v780
    %1522 = vmatprep.subr.mxu0 0.0
    %1523 = vmatpush1.msra.mxu0 %v787
    %1524 = vmatprep.mubr.f32.mxu0 %v1028
    %1525 = vmatmul.mubr.f32.gmra.mrb[0].mxu0 %v1020
    %v1526 = vpop.f32.mrb[0].mxu0
    %v1527 = vadd.f32 0.0, %v1526
    %v1528 = vpop.f32.mrb[0].mxu0
    %1529 = vdwg.mxu0
    %1530 = vmatprep.subr.mxu0 0.0
    %1531 = vmatpush1.msra.mxu0 %v794
    %1532 = vmatprep.subr.mxu0 0.0
    %1533 = vmatpush1.msra.mxu0 %v801
    %1534 = vmatprep.subr.mxu0 0.0
    %1535 = vmatpush1.msra.mxu0 %v808
    %1536 = vmatprep.subr.mxu0 0.0
    %1537 = vmatpush1.msra.mxu0 %v815
    %1538 = vmatprep.subr.mxu0 0.0
    %1539 = vmatpush1.msra.mxu0 %v822
    %1540 = vmatprep.subr.mxu0 0.0
    %1541 = vmatpush1.msra.mxu0 %v829
    %1542 = vmatprep.subr.mxu0 0.0
    %1543 = vmatpush1.msra.mxu0 %v836
    %1544 = vmatprep.subr.mxu0 0.0
    %1545 = vmatpush1.msra.mxu0 %v843
    %1546 = vmatprep.subr.mxu0 0.0
    %1547 = vmatpush1.msra.mxu0 %v850
    %1548 = vmatprep.subr.mxu0 0.0
    %1549 = vmatpush1.msra.mxu0 %v857
    %1550 = vmatprep.subr.mxu0 0.0
    %1551 = vmatpush1.msra.mxu0 %v864
    %1552 = vmatprep.subr.mxu0 0.0
    %1553 = vmatpush1.msra.mxu0 %v871
    %1554 = vmatprep.subr.mxu0 0.0
    %1555 = vmatpush1.msra.mxu0 %v878
    %1556 = vmatprep.subr.mxu0 0.0
    %1557 = vmatpush1.msra.mxu0 %v885
    %1558 = vmatprep.subr.mxu0 0.0
    %1559 = vmatpush1.msra.mxu0 %v892
    %1560 = vmatprep.subr.mxu0 0.0
    %1561 = vmatpush1.msra.mxu0 %v899
    %1562 = vmatprep.subr.mxu0 0.0
    %1563 = vmatpush1.msra.mxu0 %v906
    %1564 = vmatprep.subr.mxu0 0.0
    %1565 = vmatpush1.msra.mxu0 %v913
    %1566 = vmatprep.subr.mxu0 0.0
    %1567 = vmatpush1.msra.mxu0 %v920
    %1568 = vmatprep.subr.mxu0 0.0
    %1569 = vmatpush1.msra.mxu0 %v927
    %1570 = vmatprep.subr.mxu0 0.0
    %1571 = vmatpush1.msra.mxu0 %v934
    %1572 = vmatprep.subr.mxu0 0.0
    %1573 = vmatpush1.msra.mxu0 %v941
    %1574 = vmatprep.subr.mxu0 0.0
    %1575 = vmatpush1.msra.mxu0 %v948
    %1576 = vmatprep.subr.mxu0 0.0
    %1577 = vmatpush1.msra.mxu0 %v955
    %1578 = vmatprep.subr.mxu0 0.0
    %1579 = vmatpush1.msra.mxu0 %v962
    %1580 = vmatprep.subr.mxu0 0.0
    %1581 = vmatpush1.msra.mxu0 %v969
    %1582 = vmatprep.subr.mxu0 0.0
    %1583 = vmatpush1.msra.mxu0 %v976
    %1584 = vmatprep.subr.mxu0 0.0
    %1585 = vmatpush1.msra.mxu0 %v983
    %1586 = vmatprep.subr.mxu0 0.0
    %1587 = vmatpush1.msra.mxu0 %v990
    %1588 = vmatprep.subr.mxu0 0.0
    %1589 = vmatpush1.msra.mxu0 %v997
    %1590 = vmatprep.subr.mxu0 0.0
    %1591 = vmatpush1.msra.mxu0 %v1004
    %1592 = vmatprep.subr.mxu0 0.0
    %1593 = vmatpush1.msra.mxu0 %v1011
    %1594 = vmatprep.mubr.f32.mxu0 %v1029
    %1595 = vmatmul.mubr.f32.gmra.mrb[0].mxu0 %v1027
    %v1596 = vpop.f32.mrb[0].mxu0
    %v1597 = vadd.f32 %v1527, %v1596
    %v1598 = vpop.f32.mrb[0].mxu0
    %1599 = vdwg.mxu0
    %v1601 = vcombine.high %v114, %v114
    %v1603 = vunpack.c.l.s4 1983009808
    %v1604 = vunpack.c.0.s8 %v1603
    %v1605 = vlaneseq
    %v1606 = vshrl.u32 %v1605, 7
    %v1607 = vsub.s32 %v1604, %v1606
    %v1608 = vrot.slane %v114, %v1607
    %v1610 = vunpack.c.l.s4 1983009808
    %v1611 = vunpack.c.0.s8 %v1610
    %v1612 = vlaneseq
    %v1613 = vshrl.u32 %v1612, 7
    %v1614 = vsub.s32 %v1611, %v1613
    %v1615 = vrot.slane %v1601, %v1614
    %v1616 = vcombine.high %v1608, %v1608
    %v1617 = vcombine.high %v1615, %v1615
    %1622 = vmatprep.subr.mxu0 %v116
    %1623 = vmatpush1.msra.mxu0 %v115
    %1624 = vmatprep.subr.mxu0 %v123
    %1625 = vmatpush1.msra.mxu0 %v122
    %1626 = vmatprep.subr.mxu0 %v130
    %1627 = vmatpush1.msra.mxu0 %v129
    %1628 = vmatprep.subr.mxu0 %v137
    %1629 = vmatpush1.msra.mxu0 %v136
    %1630 = vmatprep.subr.mxu0 %v144
    %1631 = vmatpush1.msra.mxu0 %v143
    %1632 = vmatprep.subr.mxu0 %v151
    %1633 = vmatpush1.msra.mxu0 %v150
    %1634 = vmatprep.subr.mxu0 %v158
    %1635 = vmatpush1.msra.mxu0 %v157
    %1636 = vmatprep.subr.mxu0 %v165
    %1637 = vmatpush1.msra.mxu0 %v164
    %1638 = vmatprep.subr.mxu0 %v172
    %1639 = vmatpush1.msra.mxu0 %v171
    %1640 = vmatprep.subr.mxu0 %v179
    %1641 = vmatpush1.msra.mxu0 %v178
    %1642 = vmatprep.subr.mxu0 %v186
    %1643 = vmatpush1.msra.mxu0 %v185
    %1644 = vmatprep.subr.mxu0 %v193
    %1645 = vmatpush1.msra.mxu0 %v192
    %1646 = vmatprep.subr.mxu0 %v200
    %1647 = vmatpush1.msra.mxu0 %v199
    %1648 = vmatprep.subr.mxu0 %v207
    %1649 = vmatpush1.msra.mxu0 %v206
    %1650 = vmatprep.subr.mxu0 %v214
    %1651 = vmatpush1.msra.mxu0 %v213
    %1652 = vmatprep.subr.mxu0 %v221
    %1653 = vmatpush1.msra.mxu0 %v220
    %1654 = vmatprep.subr.mxu0 %v228
    %1655 = vmatpush1.msra.mxu0 %v227
    %1656 = vmatprep.subr.mxu0 %v235
    %1657 = vmatpush1.msra.mxu0 %v234
    %1658 = vmatprep.subr.mxu0 %v242
    %1659 = vmatpush1.msra.mxu0 %v241
    %1660 = vmatprep.subr.mxu0 %v249
    %1661 = vmatpush1.msra.mxu0 %v248
    %1662 = vmatprep.subr.mxu0 %v256
    %1663 = vmatpush1.msra.mxu0 %v255
    %1664 = vmatprep.subr.mxu0 %v263
    %1665 = vmatpush1.msra.mxu0 %v262
    %1666 = vmatprep.subr.mxu0 %v270
    %1667 = vmatpush1.msra.mxu0 %v269
    %1668 = vmatprep.subr.mxu0 %v277
    %1669 = vmatpush1.msra.mxu0 %v276
    %1670 = vmatprep.subr.mxu0 %v284
    %1671 = vmatpush1.msra.mxu0 %v283
    %1672 = vmatprep.subr.mxu0 %v291
    %1673 = vmatpush1.msra.mxu0 %v290
    %1674 = vmatprep.subr.mxu0 %v298
    %1675 = vmatpush1.msra.mxu0 %v297
    %1676 = vmatprep.subr.mxu0 %v305
    %1677 = vmatpush1.msra.mxu0 %v304
    %1678 = vmatprep.subr.mxu0 %v312
    %1679 = vmatpush1.msra.mxu0 %v311
    %1680 = vmatprep.subr.mxu0 %v319
    %1681 = vmatpush1.msra.mxu0 %v318
    %1682 = vmatprep.subr.mxu0 %v326
    %1683 = vmatpush1.msra.mxu0 %v325
    %1684 = vmatprep.subr.mxu0 %v333
    %1685 = vmatpush1.msra.mxu0 %v332
    %1686 = vmatprep.mubr.f32.mxu0 %v1616
    %1687 = vmatmul.mubr.f32.gmra.mrb[0].mxu0 %v1608
    %v1688 = vpop.f32.mrb[0].mxu0
    %v1689 = vadd.f32 %v1172, %v1688
    %v1690 = vpop.f32.mrb[0].mxu0
    %v1691 = vadd.f32 %v1174, %v1690
    %1692 = vdwg.mxu0
    %1693 = vmatprep.subr.mxu0 %v340
    %1694 = vmatpush1.msra.mxu0 %v339
    %1695 = vmatprep.subr.mxu0 %v347
    %1696 = vmatpush1.msra.mxu0 %v346
    %1697 = vmatprep.subr.mxu0 %v354
    %1698 = vmatpush1.msra.mxu0 %v353
    %1699 = vmatprep.subr.mxu0 %v361
    %1700 = vmatpush1.msra.mxu0 %v360
    %1701 = vmatprep.subr.mxu0 %v368
    %1702 = vmatpush1.msra.mxu0 %v367
    %1703 = vmatprep.subr.mxu0 %v375
    %1704 = vmatpush1.msra.mxu0 %v374
    %1705 = vmatprep.subr.mxu0 %v382
    %1706 = vmatpush1.msra.mxu0 %v381
    %1707 = vmatprep.subr.mxu0 %v389
    %1708 = vmatpush1.msra.mxu0 %v388
    %1709 = vmatprep.subr.mxu0 %v396
    %1710 = vmatpush1.msra.mxu0 %v395
    %1711 = vmatprep.subr.mxu0 %v403
    %1712 = vmatpush1.msra.mxu0 %v402
    %1713 = vmatprep.subr.mxu0 %v410
    %1714 = vmatpush1.msra.mxu0 %v409
    %1715 = vmatprep.subr.mxu0 %v417
    %1716 = vmatpush1.msra.mxu0 %v416
    %1717 = vmatprep.subr.mxu0 %v424
    %1718 = vmatpush1.msra.mxu0 %v423
    %1719 = vmatprep.subr.mxu0 %v431
    %1720 = vmatpush1.msra.mxu0 %v430
    %1721 = vmatprep.subr.mxu0 %v438
    %1722 = vmatpush1.msra.mxu0 %v437
    %1723 = vmatprep.subr.mxu0 %v445
    %1724 = vmatpush1.msra.mxu0 %v444
    %1725 = vmatprep.subr.mxu0 %v452
    %1726 = vmatpush1.msra.mxu0 %v451
    %1727 = vmatprep.subr.mxu0 %v459
    %1728 = vmatpush1.msra.mxu0 %v458
    %1729 = vmatprep.subr.mxu0 %v466
    %1730 = vmatpush1.msra.mxu0 %v465
    %1731 = vmatprep.subr.mxu0 %v473
    %1732 = vmatpush1.msra.mxu0 %v472
    %1733 = vmatprep.subr.mxu0 %v480
    %1734 = vmatpush1.msra.mxu0 %v479
    %1735 = vmatprep.subr.mxu0 %v487
    %1736 = vmatpush1.msra.mxu0 %v486
    %1737 = vmatprep.subr.mxu0 %v494
    %1738 = vmatpush1.msra.mxu0 %v493
    %1739 = vmatprep.subr.mxu0 %v501
    %1740 = vmatpush1.msra.mxu0 %v500
    %1741 = vmatprep.subr.mxu0 %v508
    %1742 = vmatpush1.msra.mxu0 %v507
    %1743 = vmatprep.subr.mxu0 %v515
    %1744 = vmatpush1.msra.mxu0 %v514
    %1745 = vmatprep.subr.mxu0 %v522
    %1746 = vmatpush1.msra.mxu0 %v521
    %1747 = vmatprep.subr.mxu0 %v529
    %1748 = vmatpush1.msra.mxu0 %v528
    %1749 = vmatprep.subr.mxu0 %v536
    %1750 = vmatpush1.msra.mxu0 %v535
    %1751 = vmatprep.subr.mxu0 %v543
    %1752 = vmatpush1.msra.mxu0 %v542
    %1753 = vmatprep.subr.mxu0 %v550
    %1754 = vmatpush1.msra.mxu0 %v549
    %1755 = vmatprep.subr.mxu0 %v557
    %1756 = vmatpush1.msra.mxu0 %v556
    %1757 = vmatprep.mubr.f32.mxu0 %v1617
    %1758 = vmatmul.mubr.f32.gmra.mrb[0].mxu0 %v1615
    %v1759 = vpop.f32.mrb[0].mxu0
    %v1760 = vadd.f32 %v1689, %v1759
    %v1761 = vpop.f32.mrb[0].mxu0
    %v1762 = vadd.f32 %v1691, %v1761
    %1763 = vdwg.mxu0
    %1764 = vmatprep.subr.mxu0 %v118
    %1765 = vmatpush1.msra.mxu0 %v117
    %1766 = vmatprep.subr.mxu0 %v125
    %1767 = vmatpush1.msra.mxu0 %v124
    %1768 = vmatprep.subr.mxu0 %v132
    %1769 = vmatpush1.msra.mxu0 %v131
    %1770 = vmatprep.subr.mxu0 %v139
    %1771 = vmatpush1.msra.mxu0 %v138
    %1772 = vmatprep.subr.mxu0 %v146
    %1773 = vmatpush1.msra.mxu0 %v145
    %1774 = vmatprep.subr.mxu0 %v153
    %1775 = vmatpush1.msra.mxu0 %v152
    %1776 = vmatprep.subr.mxu0 %v160
    %1777 = vmatpush1.msra.mxu0 %v159
    %1778 = vmatprep.subr.mxu0 %v167
    %1779 = vmatpush1.msra.mxu0 %v166
    %1780 = vmatprep.subr.mxu0 %v174
    %1781 = vmatpush1.msra.mxu0 %v173
    %1782 = vmatprep.subr.mxu0 %v181
    %1783 = vmatpush1.msra.mxu0 %v180
    %1784 = vmatprep.subr.mxu0 %v188
    %1785 = vmatpush1.msra.mxu0 %v187
    %1786 = vmatprep.subr.mxu0 %v195
    %1787 = vmatpush1.msra.mxu0 %v194
    %1788 = vmatprep.subr.mxu0 %v202
    %1789 = vmatpush1.msra.mxu0 %v201
    %1790 = vmatprep.subr.mxu0 %v209
    %1791 = vmatpush1.msra.mxu0 %v208
    %1792 = vmatprep.subr.mxu0 %v216
    %1793 = vmatpush1.msra.mxu0 %v215
    %1794 = vmatprep.subr.mxu0 %v223
    %1795 = vmatpush1.msra.mxu0 %v222
    %1796 = vmatprep.subr.mxu0 %v230
    %1797 = vmatpush1.msra.mxu0 %v229
    %1798 = vmatprep.subr.mxu0 %v237
    %1799 = vmatpush1.msra.mxu0 %v236
    %1800 = vmatprep.subr.mxu0 %v244
    %1801 = vmatpush1.msra.mxu0 %v243
    %1802 = vmatprep.subr.mxu0 %v251
    %1803 = vmatpush1.msra.mxu0 %v250
    %1804 = vmatprep.subr.mxu0 %v258
    %1805 = vmatpush1.msra.mxu0 %v257
    %1806 = vmatprep.subr.mxu0 %v265
    %1807 = vmatpush1.msra.mxu0 %v264
    %1808 = vmatprep.subr.mxu0 %v272
    %1809 = vmatpush1.msra.mxu0 %v271
    %1810 = vmatprep.subr.mxu0 %v279
    %1811 = vmatpush1.msra.mxu0 %v278
    %1812 = vmatprep.subr.mxu0 %v286
    %1813 = vmatpush1.msra.mxu0 %v285
    %1814 = vmatprep.subr.mxu0 %v293
    %1815 = vmatpush1.msra.mxu0 %v292
    %1816 = vmatprep.subr.mxu0 %v300
    %1817 = vmatpush1.msra.mxu0 %v299
    %1818 = vmatprep.subr.mxu0 %v307
    %1819 = vmatpush1.msra.mxu0 %v306
    %1820 = vmatprep.subr.mxu0 %v314
    %1821 = vmatpush1.msra.mxu0 %v313
    %1822 = vmatprep.subr.mxu0 %v321
    %1823 = vmatpush1.msra.mxu0 %v320
    %1824 = vmatprep.subr.mxu0 %v328
    %1825 = vmatpush1.msra.mxu0 %v327
    %1826 = vmatprep.subr.mxu0 %v335
    %1827 = vmatpush1.msra.mxu0 %v334
    %1828 = vmatprep.mubr.f32.mxu0 %v1616
    %1829 = vmatmul.mubr.f32.gmra.mrb[0].mxu0 %v1608
    %v1830 = vpop.f32.mrb[0].mxu0
    %v1831 = vadd.f32 %v1314, %v1830
    %v1832 = vpop.f32.mrb[0].mxu0
    %v1833 = vadd.f32 %v1316, %v1832
    %1834 = vdwg.mxu0
    %1835 = vmatprep.subr.mxu0 %v342
    %1836 = vmatpush1.msra.mxu0 %v341
    %1837 = vmatprep.subr.mxu0 %v349
    %1838 = vmatpush1.msra.mxu0 %v348
    %1839 = vmatprep.subr.mxu0 %v356
    %1840 = vmatpush1.msra.mxu0 %v355
    %1841 = vmatprep.subr.mxu0 %v363
    %1842 = vmatpush1.msra.mxu0 %v362
    %1843 = vmatprep.subr.mxu0 %v370
    %1844 = vmatpush1.msra.mxu0 %v369
    %1845 = vmatprep.subr.mxu0 %v377
    %1846 = vmatpush1.msra.mxu0 %v376
    %1847 = vmatprep.subr.mxu0 %v384
    %1848 = vmatpush1.msra.mxu0 %v383
    %1849 = vmatprep.subr.mxu0 %v391
    %1850 = vmatpush1.msra.mxu0 %v390
    %1851 = vmatprep.subr.mxu0 %v398
    %1852 = vmatpush1.msra.mxu0 %v397
    %1853 = vmatprep.subr.mxu0 %v405
    %1854 = vmatpush1.msra.mxu0 %v404
    %1855 = vmatprep.subr.mxu0 %v412
    %1856 = vmatpush1.msra.mxu0 %v411
    %1857 = vmatprep.subr.mxu0 %v419
    %1858 = vmatpush1.msra.mxu0 %v418
    %1859 = vmatprep.subr.mxu0 %v426
    %1860 = vmatpush1.msra.mxu0 %v425
    %1861 = vmatprep.subr.mxu0 %v433
    %1862 = vmatpush1.msra.mxu0 %v432
    %1863 = vmatprep.subr.mxu0 %v440
    %1864 = vmatpush1.msra.mxu0 %v439
    %1865 = vmatprep.subr.mxu0 %v447
    %1866 = vmatpush1.msra.mxu0 %v446
    %1867 = vmatprep.subr.mxu0 %v454
    %1868 = vmatpush1.msra.mxu0 %v453
    %1869 = vmatprep.subr.mxu0 %v461
    %1870 = vmatpush1.msra.mxu0 %v460
    %1871 = vmatprep.subr.mxu0 %v468
    %1872 = vmatpush1.msra.mxu0 %v467
    %1873 = vmatprep.subr.mxu0 %v475
    %1874 = vmatpush1.msra.mxu0 %v474
    %1875 = vmatprep.subr.mxu0 %v482
    %1876 = vmatpush1.msra.mxu0 %v481
    %1877 = vmatprep.subr.mxu0 %v489
    %1878 = vmatpush1.msra.mxu0 %v488
    %1879 = vmatprep.subr.mxu0 %v496
    %1880 = vmatpush1.msra.mxu0 %v495
    %1881 = vmatprep.subr.mxu0 %v503
    %1882 = vmatpush1.msra.mxu0 %v502
    %1883 = vmatprep.subr.mxu0 %v510
    %1884 = vmatpush1.msra.mxu0 %v509
    %1885 = vmatprep.subr.mxu0 %v517
    %1886 = vmatpush1.msra.mxu0 %v516
    %1887 = vmatprep.subr.mxu0 %v524
    %1888 = vmatpush1.msra.mxu0 %v523
    %1889 = vmatprep.subr.mxu0 %v531
    %1890 = vmatpush1.msra.mxu0 %v530
    %1891 = vmatprep.subr.mxu0 %v538
    %1892 = vmatpush1.msra.mxu0 %v537
    %1893 = vmatprep.subr.mxu0 %v545
    %1894 = vmatpush1.msra.mxu0 %v544
    %1895 = vmatprep.subr.mxu0 %v552
    %1896 = vmatpush1.msra.mxu0 %v551
    %1897 = vmatprep.subr.mxu0 %v559
    %1898 = vmatpush1.msra.mxu0 %v558
    %1899 = vmatprep.mubr.f32.mxu0 %v1617
    %1900 = vmatmul.mubr.f32.gmra.mrb[0].mxu0 %v1615
    %v1901 = vpop.f32.mrb[0].mxu0
    %v1902 = vadd.f32 %v1831, %v1901
    %v1903 = vpop.f32.mrb[0].mxu0
    %v1904 = vadd.f32 %v1833, %v1903
    %1905 = vdwg.mxu0
    %1906 = vmatprep.subr.mxu0 %v120
    %1907 = vmatpush1.msra.mxu0 %v119
    %1908 = vmatprep.subr.mxu0 %v127
    %1909 = vmatpush1.msra.mxu0 %v126
    %1910 = vmatprep.subr.mxu0 %v134
    %1911 = vmatpush1.msra.mxu0 %v133
    %1912 = vmatprep.subr.mxu0 %v141
    %1913 = vmatpush1.msra.mxu0 %v140
    %1914 = vmatprep.subr.mxu0 %v148
    %1915 = vmatpush1.msra.mxu0 %v147
    %1916 = vmatprep.subr.mxu0 %v155
    %1917 = vmatpush1.msra.mxu0 %v154
    %1918 = vmatprep.subr.mxu0 %v162
    %1919 = vmatpush1.msra.mxu0 %v161
    %1920 = vmatprep.subr.mxu0 %v169
    %1921 = vmatpush1.msra.mxu0 %v168
    %1922 = vmatprep.subr.mxu0 %v176
    %1923 = vmatpush1.msra.mxu0 %v175
    %1924 = vmatprep.subr.mxu0 %v183
    %1925 = vmatpush1.msra.mxu0 %v182
    %1926 = vmatprep.subr.mxu0 %v190
    %1927 = vmatpush1.msra.mxu0 %v189
    %1928 = vmatprep.subr.mxu0 %v197
    %1929 = vmatpush1.msra.mxu0 %v196
    %1930 = vmatprep.subr.mxu0 %v204
    %1931 = vmatpush1.msra.mxu0 %v203
    %1932 = vmatprep.subr.mxu0 %v211
    %1933 = vmatpush1.msra.mxu0 %v210
    %1934 = vmatprep.subr.mxu0 %v218
    %1935 = vmatpush1.msra.mxu0 %v217
    %1936 = vmatprep.subr.mxu0 %v225
    %1937 = vmatpush1.msra.mxu0 %v224
    %1938 = vmatprep.subr.mxu0 %v232
    %1939 = vmatpush1.msra.mxu0 %v231
    %1940 = vmatprep.subr.mxu0 %v239
    %1941 = vmatpush1.msra.mxu0 %v238
    %1942 = vmatprep.subr.mxu0 %v246
    %1943 = vmatpush1.msra.mxu0 %v245
    %1944 = vmatprep.subr.mxu0 %v253
    %1945 = vmatpush1.msra.mxu0 %v252
    %1946 = vmatprep.subr.mxu0 %v260
    %1947 = vmatpush1.msra.mxu0 %v259
    %1948 = vmatprep.subr.mxu0 %v267
    %1949 = vmatpush1.msra.mxu0 %v266
    %1950 = vmatprep.subr.mxu0 %v274
    %1951 = vmatpush1.msra.mxu0 %v273
    %1952 = vmatprep.subr.mxu0 %v281
    %1953 = vmatpush1.msra.mxu0 %v280
    %1954 = vmatprep.subr.mxu0 %v288
    %1955 = vmatpush1.msra.mxu0 %v287
    %1956 = vmatprep.subr.mxu0 %v295
    %1957 = vmatpush1.msra.mxu0 %v294
    %1958 = vmatprep.subr.mxu0 %v302
    %1959 = vmatpush1.msra.mxu0 %v301
    %1960 = vmatprep.subr.mxu0 %v309
    %1961 = vmatpush1.msra.mxu0 %v308
    %1962 = vmatprep.subr.mxu0 %v316
    %1963 = vmatpush1.msra.mxu0 %v315
    %1964 = vmatprep.subr.mxu0 %v323
    %1965 = vmatpush1.msra.mxu0 %v322
    %1966 = vmatprep.subr.mxu0 %v330
    %1967 = vmatpush1.msra.mxu0 %v329
    %1968 = vmatprep.subr.mxu0 %v337
    %1969 = vmatpush1.msra.mxu0 %v336
    %1970 = vmatprep.mubr.f32.mxu0 %v1616
    %1971 = vmatmul.mubr.f32.gmra.mrb[0].mxu0 %v1608
    %v1972 = vpop.f32.mrb[0].mxu0
    %v1973 = vadd.f32 %v1456, %v1972
    %v1974 = vpop.f32.mrb[0].mxu0
    %v1975 = vadd.f32 %v1458, %v1974
    %1976 = vdwg.mxu0
    %1977 = vmatprep.subr.mxu0 %v344
    %1978 = vmatpush1.msra.mxu0 %v343
    %1979 = vmatprep.subr.mxu0 %v351
    %1980 = vmatpush1.msra.mxu0 %v350
    %1981 = vmatprep.subr.mxu0 %v358
    %1982 = vmatpush1.msra.mxu0 %v357
    %1983 = vmatprep.subr.mxu0 %v365
    %1984 = vmatpush1.msra.mxu0 %v364
    %1985 = vmatprep.subr.mxu0 %v372
    %1986 = vmatpush1.msra.mxu0 %v371
    %1987 = vmatprep.subr.mxu0 %v379
    %1988 = vmatpush1.msra.mxu0 %v378
    %1989 = vmatprep.subr.mxu0 %v386
    %1990 = vmatpush1.msra.mxu0 %v385
    %1991 = vmatprep.subr.mxu0 %v393
    %1992 = vmatpush1.msra.mxu0 %v392
    %1993 = vmatprep.subr.mxu0 %v400
    %1994 = vmatpush1.msra.mxu0 %v399
    %1995 = vmatprep.subr.mxu0 %v407
    %1996 = vmatpush1.msra.mxu0 %v406
    %1997 = vmatprep.subr.mxu0 %v414
    %1998 = vmatpush1.msra.mxu0 %v413
    %1999 = vmatprep.subr.mxu0 %v421
    %2000 = vmatpush1.msra.mxu0 %v420
    %2001 = vmatprep.subr.mxu0 %v428
    %2002 = vmatpush1.msra.mxu0 %v427
    %2003 = vmatprep.subr.mxu0 %v435
    %2004 = vmatpush1.msra.mxu0 %v434
    %2005 = vmatprep.subr.mxu0 %v442
    %2006 = vmatpush1.msra.mxu0 %v441
    %2007 = vmatprep.subr.mxu0 %v449
    %2008 = vmatpush1.msra.mxu0 %v448
    %2009 = vmatprep.subr.mxu0 %v456
    %2010 = vmatpush1.msra.mxu0 %v455
    %2011 = vmatprep.subr.mxu0 %v463
    %2012 = vmatpush1.msra.mxu0 %v462
    %2013 = vmatprep.subr.mxu0 %v470
    %2014 = vmatpush1.msra.mxu0 %v469
    %2015 = vmatprep.subr.mxu0 %v477
    %2016 = vmatpush1.msra.mxu0 %v476
    %2017 = vmatprep.subr.mxu0 %v484
    %2018 = vmatpush1.msra.mxu0 %v483
    %2019 = vmatprep.subr.mxu0 %v491
    %2020 = vmatpush1.msra.mxu0 %v490
    %2021 = vmatprep.subr.mxu0 %v498
    %2022 = vmatpush1.msra.mxu0 %v497
    %2023 = vmatprep.subr.mxu0 %v505
    %2024 = vmatpush1.msra.mxu0 %v504
    %2025 = vmatprep.subr.mxu0 %v512
    %2026 = vmatpush1.msra.mxu0 %v511
    %2027 = vmatprep.subr.mxu0 %v519
    %2028 = vmatpush1.msra.mxu0 %v518
    %2029 = vmatprep.subr.mxu0 %v526
    %2030 = vmatpush1.msra.mxu0 %v525
    %2031 = vmatprep.subr.mxu0 %v533
    %2032 = vmatpush1.msra.mxu0 %v532
    %2033 = vmatprep.subr.mxu0 %v540
    %2034 = vmatpush1.msra.mxu0 %v539
    %2035 = vmatprep.subr.mxu0 %v547
    %2036 = vmatpush1.msra.mxu0 %v546
    %2037 = vmatprep.subr.mxu0 %v554
    %2038 = vmatpush1.msra.mxu0 %v553
    %2039 = vmatprep.subr.mxu0 %v561
    %2040 = vmatpush1.msra.mxu0 %v560
    %2041 = vmatprep.mubr.f32.mxu0 %v1617
    %2042 = vmatmul.mubr.f32.gmra.mrb[0].mxu0 %v1615
    %v2043 = vpop.f32.mrb[0].mxu0
    %v2044 = vadd.f32 %v1973, %v2043
    %v2045 = vpop.f32.mrb[0].mxu0
    %v2046 = vadd.f32 %v1975, %v2045
    %2047 = vdwg.mxu0
    %2048 = vmatprep.subr.mxu0 0.0
    %2049 = vmatpush1.msra.mxu0 %v121
    %2050 = vmatprep.subr.mxu0 0.0
    %2051 = vmatpush1.msra.mxu0 %v128
    %2052 = vmatprep.subr.mxu0 0.0
    %2053 = vmatpush1.msra.mxu0 %v135
    %2054 = vmatprep.subr.mxu0 0.0
    %2055 = vmatpush1.msra.mxu0 %v142
    %2056 = vmatprep.subr.mxu0 0.0
    %2057 = vmatpush1.msra.mxu0 %v149
    %2058 = vmatprep.subr.mxu0 0.0
    %2059 = vmatpush1.msra.mxu0 %v156
    %2060 = vmatprep.subr.mxu0 0.0
    %2061 = vmatpush1.msra.mxu0 %v163
    %2062 = vmatprep.subr.mxu0 0.0
    %2063 = vmatpush1.msra.mxu0 %v170
    %2064 = vmatprep.subr.mxu0 0.0
    %2065 = vmatpush1.msra.mxu0 %v177
    %2066 = vmatprep.subr.mxu0 0.0
    %2067 = vmatpush1.msra.mxu0 %v184
    %2068 = vmatprep.subr.mxu0 0.0
    %2069 = vmatpush1.msra.mxu0 %v191
    %2070 = vmatprep.subr.mxu0 0.0
    %2071 = vmatpush1.msra.mxu0 %v198
    %2072 = vmatprep.subr.mxu0 0.0
    %2073 = vmatpush1.msra.mxu0 %v205
    %2074 = vmatprep.subr.mxu0 0.0
    %2075 = vmatpush1.msra.mxu0 %v212
    %2076 = vmatprep.subr.mxu0 0.0
    %2077 = vmatpush1.msra.mxu0 %v219
    %2078 = vmatprep.subr.mxu0 0.0
    %2079 = vmatpush1.msra.mxu0 %v226
    %2080 = vmatprep.subr.mxu0 0.0
    %2081 = vmatpush1.msra.mxu0 %v233
    %2082 = vmatprep.subr.mxu0 0.0
    %2083 = vmatpush1.msra.mxu0 %v240
    %2084 = vmatprep.subr.mxu0 0.0
    %2085 = vmatpush1.msra.mxu0 %v247
    %2086 = vmatprep.subr.mxu0 0.0
    %2087 = vmatpush1.msra.mxu0 %v254
    %2088 = vmatprep.subr.mxu0 0.0
    %2089 = vmatpush1.msra.mxu0 %v261
    %2090 = vmatprep.subr.mxu0 0.0
    %2091 = vmatpush1.msra.mxu0 %v268
    %2092 = vmatprep.subr.mxu0 0.0
    %2093 = vmatpush1.msra.mxu0 %v275
    %2094 = vmatprep.subr.mxu0 0.0
    %2095 = vmatpush1.msra.mxu0 %v282
    %2096 = vmatprep.subr.mxu0 0.0
    %2097 = vmatpush1.msra.mxu0 %v289
    %2098 = vmatprep.subr.mxu0 0.0
    %2099 = vmatpush1.msra.mxu0 %v296
    %2100 = vmatprep.subr.mxu0 0.0
    %2101 = vmatpush1.msra.mxu0 %v303
    %2102 = vmatprep.subr.mxu0 0.0
    %2103 = vmatpush1.msra.mxu0 %v310
    %2104 = vmatprep.subr.mxu0 0.0
    %2105 = vmatpush1.msra.mxu0 %v317
    %2106 = vmatprep.subr.mxu0 0.0
    %2107 = vmatpush1.msra.mxu0 %v324
    %2108 = vmatprep.subr.mxu0 0.0
    %2109 = vmatpush1.msra.mxu0 %v331
    %2110 = vmatprep.subr.mxu0 0.0
    %2111 = vmatpush1.msra.mxu0 %v338
    %2112 = vmatprep.mubr.f32.mxu0 %v1616
    %2113 = vmatmul.mubr.f32.gmra.mrb[0].mxu0 %v1608
    %v2114 = vpop.f32.mrb[0].mxu0
    %v2115 = vadd.f32 %v1597, %v2114
    %v2116 = vpop.f32.mrb[0].mxu0
    %2117 = vdwg.mxu0
    %2118 = vmatprep.subr.mxu0 0.0
    %2119 = vmatpush1.msra.mxu0 %v345
    %2120 = vmatprep.subr.mxu0 0.0
    %2121 = vmatpush1.msra.mxu0 %v352
    %2122 = vmatprep.subr.mxu0 0.0
    %2123 = vmatpush1.msra.mxu0 %v359
    %2124 = vmatprep.subr.mxu0 0.0
    %2125 = vmatpush1.msra.mxu0 %v366
    %2126 = vmatprep.subr.mxu0 0.0
    %2127 = vmatpush1.msra.mxu0 %v373
    %2128 = vmatprep.subr.mxu0 0.0
    %2129 = vmatpush1.msra.mxu0 %v380
    %2130 = vmatprep.subr.mxu0 0.0
    %2131 = vmatpush1.msra.mxu0 %v387
    %2132 = vmatprep.subr.mxu0 0.0
    %2133 = vmatpush1.msra.mxu0 %v394
    %2134 = vmatprep.subr.mxu0 0.0
    %2135 = vmatpush1.msra.mxu0 %v401
    %2136 = vmatprep.subr.mxu0 0.0
    %2137 = vmatpush1.msra.mxu0 %v408
    %2138 = vmatprep.subr.mxu0 0.0
    %2139 = vmatpush1.msra.mxu0 %v415
    %2140 = vmatprep.subr.mxu0 0.0
    %2141 = vmatpush1.msra.mxu0 %v422
    %2142 = vmatprep.subr.mxu0 0.0
    %2143 = vmatpush1.msra.mxu0 %v429
    %2144 = vmatprep.subr.mxu0 0.0
    %2145 = vmatpush1.msra.mxu0 %v436
    %2146 = vmatprep.subr.mxu0 0.0
    %2147 = vmatpush1.msra.mxu0 %v443
    %2148 = vmatprep.subr.mxu0 0.0
    %2149 = vmatpush1.msra.mxu0 %v450
    %2150 = vmatprep.subr.mxu0 0.0
    %2151 = vmatpush1.msra.mxu0 %v457
    %2152 = vmatprep.subr.mxu0 0.0
    %2153 = vmatpush1.msra.mxu0 %v464
    %2154 = vmatprep.subr.mxu0 0.0
    %2155 = vmatpush1.msra.mxu0 %v471
    %2156 = vmatprep.subr.mxu0 0.0
    %2157 = vmatpush1.msra.mxu0 %v478
    %2158 = vmatprep.subr.mxu0 0.0
    %2159 = vmatpush1.msra.mxu0 %v485
    %2160 = vmatprep.subr.mxu0 0.0
    %2161 = vmatpush1.msra.mxu0 %v492
    %2162 = vmatprep.subr.mxu0 0.0
    %2163 = vmatpush1.msra.mxu0 %v499
    %2164 = vmatprep.subr.mxu0 0.0
    %2165 = vmatpush1.msra.mxu0 %v506
    %2166 = vmatprep.subr.mxu0 0.0
    %2167 = vmatpush1.msra.mxu0 %v513
    %2168 = vmatprep.subr.mxu0 0.0
    %2169 = vmatpush1.msra.mxu0 %v520
    %2170 = vmatprep.subr.mxu0 0.0
    %2171 = vmatpush1.msra.mxu0 %v527
    %2172 = vmatprep.subr.mxu0 0.0
    %2173 = vmatpush1.msra.mxu0 %v534
    %2174 = vmatprep.subr.mxu0 0.0
    %2175 = vmatpush1.msra.mxu0 %v541
    %2176 = vmatprep.subr.mxu0 0.0
    %2177 = vmatpush1.msra.mxu0 %v548
    %2178 = vmatprep.subr.mxu0 0.0
    %2179 = vmatpush1.msra.mxu0 %v555
    %2180 = vmatprep.subr.mxu0 0.0
    %2181 = vmatpush1.msra.mxu0 %v562
    %2182 = vmatprep.mubr.f32.mxu0 %v1617
    %2183 = vmatmul.mubr.f32.gmra.mrb[0].mxu0 %v1615
    %v2184 = vpop.f32.mrb[0].mxu0
    %v2185 = vadd.f32 %v2115, %v2184
    %v2186 = vpop.f32.mrb[0].mxu0
    %2187 = vdwg.mxu0
    %v2188 = vld [vmem:[#allocation10] sm:$0x7f]
    %v2190 = vlaneseq
    %v2191 = vshrl.u32 %v2190, 7
    %v2192 = vsub.s32 0, %v2191
    %v2193 = vrot.slane %v2188, %v2192
    %v2194 = vlaneseq
    %v2195 = vshrl.u32 %v2194, 7
    %v2196 = vsub.s32 1, %v2195
    %v2197 = vrot.slane %v2188, %v2196
    %v2198 = vlaneseq
    %v2199 = vshrl.u32 %v2198, 7
    %v2200 = vsub.s32 2, %v2199
    %v2201 = vrot.slane %v2188, %v2200
    %v2202 = vlaneseq
    %v2203 = vshrl.u32 %v2202, 7
    %v2204 = vsub.s32 3, %v2203
    %v2205 = vrot.slane %v2188, %v2204
    %v2206 = vlaneseq
    %v2207 = vshrl.u32 %v2206, 7
    %v2208 = vsub.s32 4, %v2207
    %v2209 = vrot.slane %v2188, %v2208
    %v2210 = vlaneseq
    %v2211 = vshrl.u32 %v2210, 7
    %v2212 = vsub.s32 5, %v2211
    %v2213 = vrot.slane %v2188, %v2212
    %v2214 = vlaneseq
    %v2215 = vshrl.u32 %v2214, 7
    %v2216 = vsub.s32 6, %v2215
    %v2217 = vrot.slane %v2188, %v2216
    %v2225 = vadd.f32 %v1760, %v2193
    %v2226 = vadd.f32 %v1762, %v2197
    %v2227 = vadd.f32 %v1902, %v2201
    %v2228 = vadd.f32 %v1904, %v2205
    %v2229 = vadd.f32 %v2044, %v2209
    %v2230 = vadd.f32 %v2046, %v2213
    %v2231 = vadd.f32 %v2185, %v2217
    %v2232 = vmax.f32 %v2225, 0.0
    %v2233 = vmax.f32 %v2226, 0.0
    %v2234 = vmax.f32 %v2227, 0.0
    %v2235 = vmax.f32 %v2228, 0.0
    %v2236 = vmax.f32 %v2229, 0.0
    %v2237 = vmax.f32 %v2230, 0.0
    %v2238 = vmax.f32 %v2231, 0.0
    %v2239 = vld [vmem:[#allocation11] sm:$0xff]
    %v2240 = vld [vmem:[#allocation11 + $0x8] sm:$0xff]
    %v2241 = vld [vmem:[#allocation11 + $0x10] sm:$0xff]
    %v2242 = vld [vmem:[#allocation11 + $0x18] sm:$0xff]
    %v2243 = vld [vmem:[#allocation11 + $0x20] sm:$0xff]
    %v2244 = vld [vmem:[#allocation11 + $0x28] sm:$0xff]
    %v2245 = vld [vmem:[#allocation11 + $0x30] sm:$0xff]
    %v2246 = vld [vmem:[#allocation11 + $0x38] sm:$0xff]
    %v2247 = vld [vmem:[#allocation11 + $0x40] sm:$0xff]
    %v2248 = vld [vmem:[#allocation11 + $0x48] sm:$0xff]
    %v2249 = vld [vmem:[#allocation11 + $0x50] sm:$0xff]
    %v2250 = vld [vmem:[#allocation11 + $0x58] sm:$0xff]
    %v2251 = vld [vmem:[#allocation11 + $0x60] sm:$0xff]
    %v2252 = vld [vmem:[#allocation11 + $0x68] sm:$0xff]
    %v2253 = vld [vmem:[#allocation11 + $0x70] sm:$0xff]
    %v2254 = vld [vmem:[#allocation11 + $0x78] sm:$0xff]
    %v2255 = vld [vmem:[#allocation11 + $0x80] sm:$0xff]
    %v2256 = vld [vmem:[#allocation11 + $0x88] sm:$0xff]
    %v2257 = vld [vmem:[#allocation11 + $0x90] sm:$0xff]
    %v2258 = vld [vmem:[#allocation11 + $0x98] sm:$0xff]
    %v2259 = vld [vmem:[#allocation11 + $0xa0] sm:$0xff]
    %v2260 = vld [vmem:[#allocation11 + $0xa8] sm:$0xff]
    %v2261 = vld [vmem:[#allocation11 + $0xb0] sm:$0xff]
    %v2262 = vld [vmem:[#allocation11 + $0xb8] sm:$0xff]
    %v2263 = vld [vmem:[#allocation11 + $0xc0] sm:$0xff]
    %v2264 = vld [vmem:[#allocation11 + $0xc8] sm:$0xff]
    %v2265 = vld [vmem:[#allocation11 + $0xd0] sm:$0xff]
    %v2266 = vld [vmem:[#allocation11 + $0xd8] sm:$0xff]
    %v2267 = vld [vmem:[#allocation11 + $0xe0] sm:$0xff]
    %v2268 = vld [vmem:[#allocation11 + $0xe8] sm:$0xff]
    %v2269 = vld [vmem:[#allocation11 + $0xf0] sm:$0xff]
    %v2270 = vld [vmem:[#allocation11 + $0xf8] sm:$0xff]
    %v2271 = vld [vmem:[#allocation11 + $0x100] sm:$0xff]
    %v2272 = vld [vmem:[#allocation11 + $0x108] sm:$0xff]
    %v2273 = vld [vmem:[#allocation11 + $0x110] sm:$0xff]
    %v2274 = vld [vmem:[#allocation11 + $0x118] sm:$0xff]
    %v2275 = vld [vmem:[#allocation11 + $0x120] sm:$0xff]
    %v2276 = vld [vmem:[#allocation11 + $0x128] sm:$0xff]
    %v2277 = vld [vmem:[#allocation11 + $0x130] sm:$0xff]
    %v2278 = vld [vmem:[#allocation11 + $0x138] sm:$0xff]
    %v2279 = vld [vmem:[#allocation11 + $0x140] sm:$0xff]
    %v2280 = vld [vmem:[#allocation11 + $0x148] sm:$0xff]
    %v2281 = vld [vmem:[#allocation11 + $0x150] sm:$0xff]
    %v2282 = vld [vmem:[#allocation11 + $0x158] sm:$0xff]
    %v2283 = vld [vmem:[#allocation11 + $0x160] sm:$0xff]
    %v2284 = vld [vmem:[#allocation11 + $0x168] sm:$0xff]
    %v2285 = vld [vmem:[#allocation11 + $0x170] sm:$0xff]
    %v2286 = vld [vmem:[#allocation11 + $0x178] sm:$0xff]
    %v2287 = vld [vmem:[#allocation11 + $0x180] sm:$0xff]
    %v2288 = vld [vmem:[#allocation11 + $0x188] sm:$0xff]
    %v2289 = vld [vmem:[#allocation11 + $0x190] sm:$0xff]
    %v2290 = vld [vmem:[#allocation11 + $0x198] sm:$0xff]
    %v2291 = vld [vmem:[#allocation11 + $0x1a0] sm:$0xff]
    %v2292 = vld [vmem:[#allocation11 + $0x1a8] sm:$0xff]
    %v2293 = vld [vmem:[#allocation11 + $0x1b0] sm:$0xff]
    %v2294 = vld [vmem:[#allocation11 + $0x1b8] sm:$0xff]
    %v2295 = vld [vmem:[#allocation11 + $0x1c0] sm:$0xff]
    %v2296 = vld [vmem:[#allocation11 + $0x1c8] sm:$0xff]
    %v2297 = vld [vmem:[#allocation11 + $0x1d0] sm:$0xff]
    %v2298 = vld [vmem:[#allocation11 + $0x1d8] sm:$0xff]
    %v2299 = vld [vmem:[#allocation11 + $0x1e0] sm:$0xff]
    %v2300 = vld [vmem:[#allocation11 + $0x1e8] sm:$0xff]
    %v2301 = vld [vmem:[#allocation11 + $0x1f0] sm:$0xff]
    %v2302 = vld [vmem:[#allocation11 + $0x1f8] sm:$0xff]
    %v2303 = vld [vmem:[#allocation11 + $0x200] sm:$0xff]
    %v2304 = vld [vmem:[#allocation11 + $0x208] sm:$0xff]
    %v2305 = vld [vmem:[#allocation11 + $0x210] sm:$0xff]
    %v2306 = vld [vmem:[#allocation11 + $0x218] sm:$0xff]
    %v2307 = vld [vmem:[#allocation11 + $0x220] sm:$0xff]
    %v2308 = vld [vmem:[#allocation11 + $0x228] sm:$0xff]
    %v2309 = vld [vmem:[#allocation11 + $0x230] sm:$0xff]
    %v2310 = vld [vmem:[#allocation11 + $0x238] sm:$0xff]
    %v2311 = vld [vmem:[#allocation11 + $0x240] sm:$0xff]
    %v2312 = vld [vmem:[#allocation11 + $0x248] sm:$0xff]
    %v2313 = vld [vmem:[#allocation11 + $0x250] sm:$0xff]
    %v2314 = vld [vmem:[#allocation11 + $0x258] sm:$0xff]
    %v2315 = vld [vmem:[#allocation11 + $0x260] sm:$0xff]
    %v2316 = vld [vmem:[#allocation11 + $0x268] sm:$0xff]
    %v2317 = vld [vmem:[#allocation11 + $0x270] sm:$0xff]
    %v2318 = vld [vmem:[#allocation11 + $0x278] sm:$0xff]
    %v2319 = vld [vmem:[#allocation11 + $0x280] sm:$0xff]
    %v2320 = vld [vmem:[#allocation11 + $0x288] sm:$0xff]
    %v2321 = vld [vmem:[#allocation11 + $0x290] sm:$0xff]
    %v2322 = vld [vmem:[#allocation11 + $0x298] sm:$0xff]
    %v2323 = vld [vmem:[#allocation11 + $0x2a0] sm:$0xff]
    %v2324 = vld [vmem:[#allocation11 + $0x2a8] sm:$0xff]
    %v2325 = vld [vmem:[#allocation11 + $0x2b0] sm:$0xff]
    %v2326 = vld [vmem:[#allocation11 + $0x2b8] sm:$0xff]
    %v2327 = vld [vmem:[#allocation11 + $0x2c0] sm:$0xff]
    %v2328 = vld [vmem:[#allocation11 + $0x2c8] sm:$0xff]
    %v2329 = vld [vmem:[#allocation11 + $0x2d0] sm:$0xff]
    %v2330 = vld [vmem:[#allocation11 + $0x2d8] sm:$0xff]
    %v2331 = vld [vmem:[#allocation11 + $0x2e0] sm:$0xff]
    %v2332 = vld [vmem:[#allocation11 + $0x2e8] sm:$0xff]
    %v2333 = vld [vmem:[#allocation11 + $0x2f0] sm:$0xff]
    %v2334 = vld [vmem:[#allocation11 + $0x2f8] sm:$0xff]
    %v2335 = vld [vmem:[#allocation11 + $0x300] sm:$0xff]
    %v2336 = vld [vmem:[#allocation11 + $0x308] sm:$0xff]
    %v2337 = vld [vmem:[#allocation11 + $0x310] sm:$0xff]
    %v2338 = vld [vmem:[#allocation11 + $0x318] sm:$0xff]
    %v2339 = vld [vmem:[#allocation11 + $0x320] sm:$0xff]
    %v2340 = vld [vmem:[#allocation11 + $0x328] sm:$0xff]
    %v2341 = vld [vmem:[#allocation11 + $0x330] sm:$0xff]
    %v2342 = vld [vmem:[#allocation11 + $0x338] sm:$0xff]
    %v2343 = vld [vmem:[#allocation11 + $0x340] sm:$0xff]
    %v2344 = vld [vmem:[#allocation11 + $0x348] sm:$0xff]
    %v2345 = vld [vmem:[#allocation11 + $0x350] sm:$0xff]
    %v2346 = vld [vmem:[#allocation11 + $0x358] sm:$0xff]
    %v2347 = vld [vmem:[#allocation11 + $0x360] sm:$0xff]
    %v2348 = vld [vmem:[#allocation11 + $0x368] sm:$0xff]
    %v2349 = vld [vmem:[#allocation11 + $0x370] sm:$0xff]
    %v2350 = vld [vmem:[#allocation11 + $0x378] sm:$0xff]
    %v2351 = vld [vmem:[#allocation11 + $0x380] sm:$0xff]
    %v2352 = vld [vmem:[#allocation11 + $0x388] sm:$0xff]
    %v2353 = vld [vmem:[#allocation11 + $0x390] sm:$0xff]
    %v2354 = vld [vmem:[#allocation11 + $0x398] sm:$0xff]
    %v2355 = vld [vmem:[#allocation11 + $0x3a0] sm:$0xff]
    %v2356 = vld [vmem:[#allocation11 + $0x3a8] sm:$0xff]
    %v2357 = vld [vmem:[#allocation11 + $0x3b0] sm:$0xff]
    %v2358 = vld [vmem:[#allocation11 + $0x3b8] sm:$0xff]
    %v2359 = vld [vmem:[#allocation11 + $0x3c0] sm:$0xff]
    %v2360 = vld [vmem:[#allocation11 + $0x3c8] sm:$0xff]
    %v2361 = vld [vmem:[#allocation11 + $0x3d0] sm:$0xff]
    %v2362 = vld [vmem:[#allocation11 + $0x3d8] sm:$0xff]
    %v2363 = vld [vmem:[#allocation11 + $0x3e0] sm:$0xff]
    %v2364 = vld [vmem:[#allocation11 + $0x3e8] sm:$0xff]
    %v2365 = vld [vmem:[#allocation11 + $0x3f0] sm:$0xff]
    %v2366 = vld [vmem:[#allocation11 + $0x3f8] sm:$0xff]
    %v2367 = vld [vmem:[#allocation11 + $0x400] sm:$0xff]
    %v2368 = vld [vmem:[#allocation11 + $0x408] sm:$0xff]
    %v2369 = vld [vmem:[#allocation11 + $0x410] sm:$0xff]
    %v2370 = vld [vmem:[#allocation11 + $0x418] sm:$0xff]
    %v2371 = vld [vmem:[#allocation11 + $0x420] sm:$0xff]
    %v2372 = vld [vmem:[#allocation11 + $0x428] sm:$0xff]
    %v2373 = vld [vmem:[#allocation11 + $0x430] sm:$0xff]
    %v2374 = vld [vmem:[#allocation11 + $0x438] sm:$0xff]
    %v2375 = vld [vmem:[#allocation11 + $0x440] sm:$0xff]
    %v2376 = vld [vmem:[#allocation11 + $0x448] sm:$0xff]
    %v2377 = vld [vmem:[#allocation11 + $0x450] sm:$0xff]
    %v2378 = vld [vmem:[#allocation11 + $0x458] sm:$0xff]
    %v2379 = vld [vmem:[#allocation11 + $0x460] sm:$0xff]
    %v2380 = vld [vmem:[#allocation11 + $0x468] sm:$0xff]
    %v2381 = vld [vmem:[#allocation11 + $0x470] sm:$0xff]
    %v2382 = vld [vmem:[#allocation11 + $0x478] sm:$0xff]
    %v2383 = vld [vmem:[#allocation11 + $0x480] sm:$0xff]
    %v2384 = vld [vmem:[#allocation11 + $0x488] sm:$0xff]
    %v2385 = vld [vmem:[#allocation11 + $0x490] sm:$0xff]
    %v2386 = vld [vmem:[#allocation11 + $0x498] sm:$0xff]
    %v2387 = vld [vmem:[#allocation11 + $0x4a0] sm:$0xff]
    %v2388 = vld [vmem:[#allocation11 + $0x4a8] sm:$0xff]
    %v2389 = vld [vmem:[#allocation11 + $0x4b0] sm:$0xff]
    %v2390 = vld [vmem:[#allocation11 + $0x4b8] sm:$0xff]
    %v2391 = vld [vmem:[#allocation11 + $0x4c0] sm:$0xff]
    %v2392 = vld [vmem:[#allocation11 + $0x4c8] sm:$0xff]
    %v2393 = vld [vmem:[#allocation11 + $0x4d0] sm:$0xff]
    %v2394 = vld [vmem:[#allocation11 + $0x4d8] sm:$0xff]
    %v2395 = vld [vmem:[#allocation11 + $0x4e0] sm:$0xff]
    %v2396 = vld [vmem:[#allocation11 + $0x4e8] sm:$0xff]
    %v2397 = vld [vmem:[#allocation11 + $0x4f0] sm:$0xff]
    %v2398 = vld [vmem:[#allocation11 + $0x4f8] sm:$0xff]
    %v2399 = vld [vmem:[#allocation11 + $0x500] sm:$0xff]
    %v2400 = vld [vmem:[#allocation11 + $0x508] sm:$0xff]
    %v2401 = vld [vmem:[#allocation11 + $0x510] sm:$0xff]
    %v2402 = vld [vmem:[#allocation11 + $0x518] sm:$0xff]
    %v2403 = vld [vmem:[#allocation11 + $0x520] sm:$0xff]
    %v2404 = vld [vmem:[#allocation11 + $0x528] sm:$0xff]
    %v2405 = vld [vmem:[#allocation11 + $0x530] sm:$0xff]
    %v2406 = vld [vmem:[#allocation11 + $0x538] sm:$0xff]
    %v2407 = vld [vmem:[#allocation11 + $0x540] sm:$0xff]
    %v2408 = vld [vmem:[#allocation11 + $0x548] sm:$0xff]
    %v2409 = vld [vmem:[#allocation11 + $0x550] sm:$0xff]
    %v2410 = vld [vmem:[#allocation11 + $0x558] sm:$0xff]
    %v2411 = vld [vmem:[#allocation11 + $0x560] sm:$0xff]
    %v2412 = vld [vmem:[#allocation11 + $0x568] sm:$0xff]
    %v2413 = vld [vmem:[#allocation11 + $0x570] sm:$0xff]
    %v2414 = vld [vmem:[#allocation11 + $0x578] sm:$0xff]
    %v2415 = vld [vmem:[#allocation11 + $0x580] sm:$0xff]
    %v2416 = vld [vmem:[#allocation11 + $0x588] sm:$0xff]
    %v2417 = vld [vmem:[#allocation11 + $0x590] sm:$0xff]
    %v2418 = vld [vmem:[#allocation11 + $0x598] sm:$0xff]
    %v2419 = vld [vmem:[#allocation11 + $0x5a0] sm:$0xff]
    %v2420 = vld [vmem:[#allocation11 + $0x5a8] sm:$0xff]
    %v2421 = vld [vmem:[#allocation11 + $0x5b0] sm:$0xff]
    %v2422 = vld [vmem:[#allocation11 + $0x5b8] sm:$0xff]
    %v2423 = vld [vmem:[#allocation11 + $0x5c0] sm:$0xff]
    %v2424 = vld [vmem:[#allocation11 + $0x5c8] sm:$0xff]
    %v2425 = vld [vmem:[#allocation11 + $0x5d0] sm:$0xff]
    %v2426 = vld [vmem:[#allocation11 + $0x5d8] sm:$0xff]
    %v2427 = vld [vmem:[#allocation11 + $0x5e0] sm:$0xff]
    %v2428 = vld [vmem:[#allocation11 + $0x5e8] sm:$0xff]
    %v2429 = vld [vmem:[#allocation11 + $0x5f0] sm:$0xff]
    %v2430 = vld [vmem:[#allocation11 + $0x5f8] sm:$0xff]
    %v2431 = vld [vmem:[#allocation11 + $0x600] sm:$0xff]
    %v2432 = vld [vmem:[#allocation11 + $0x608] sm:$0xff]
    %v2433 = vld [vmem:[#allocation11 + $0x610] sm:$0xff]
    %v2434 = vld [vmem:[#allocation11 + $0x618] sm:$0xff]
    %v2435 = vld [vmem:[#allocation11 + $0x620] sm:$0xff]
    %v2436 = vld [vmem:[#allocation11 + $0x628] sm:$0xff]
    %v2437 = vld [vmem:[#allocation11 + $0x630] sm:$0xff]
    %v2438 = vld [vmem:[#allocation11 + $0x638] sm:$0xff]
    %v2439 = vld [vmem:[#allocation11 + $0x640] sm:$0xff]
    %v2440 = vld [vmem:[#allocation11 + $0x648] sm:$0xff]
    %v2441 = vld [vmem:[#allocation11 + $0x650] sm:$0xff]
    %v2442 = vld [vmem:[#allocation11 + $0x658] sm:$0xff]
    %v2443 = vld [vmem:[#allocation11 + $0x660] sm:$0xff]
    %v2444 = vld [vmem:[#allocation11 + $0x668] sm:$0xff]
    %v2445 = vld [vmem:[#allocation11 + $0x670] sm:$0xff]
    %v2446 = vld [vmem:[#allocation11 + $0x678] sm:$0xff]
    %v2447 = vld [vmem:[#allocation11 + $0x680] sm:$0xff]
    %v2448 = vld [vmem:[#allocation11 + $0x688] sm:$0xff]
    %v2449 = vld [vmem:[#allocation11 + $0x690] sm:$0xff]
    %v2450 = vld [vmem:[#allocation11 + $0x698] sm:$0xff]
    %v2451 = vld [vmem:[#allocation11 + $0x6a0] sm:$0xff]
    %v2452 = vld [vmem:[#allocation11 + $0x6a8] sm:$0xff]
    %v2453 = vld [vmem:[#allocation11 + $0x6b0] sm:$0xff]
    %v2454 = vld [vmem:[#allocation11 + $0x6b8] sm:$0xff]
    %v2455 = vld [vmem:[#allocation11 + $0x6c0] sm:$0xff]
    %v2456 = vld [vmem:[#allocation11 + $0x6c8] sm:$0xff]
    %v2457 = vld [vmem:[#allocation11 + $0x6d0] sm:$0xff]
    %v2458 = vld [vmem:[#allocation11 + $0x6d8] sm:$0xff]
    %v2459 = vld [vmem:[#allocation11 + $0x6e0] sm:$0xff]
    %v2460 = vld [vmem:[#allocation11 + $0x6e8] sm:$0xff]
    %v2461 = vld [vmem:[#allocation11 + $0x6f0] sm:$0xff]
    %v2462 = vld [vmem:[#allocation11 + $0x6f8] sm:$0xff]
    %v2463 = vld [vmem:[#allocation11 + $0x700] sm:$0xff]
    %v2464 = vld [vmem:[#allocation11 + $0x708] sm:$0xff]
    %v2465 = vld [vmem:[#allocation11 + $0x710] sm:$0xff]
    %v2466 = vld [vmem:[#allocation11 + $0x718] sm:$0xff]
    %v2467 = vld [vmem:[#allocation11 + $0x720] sm:$0xff]
    %v2468 = vld [vmem:[#allocation11 + $0x728] sm:$0xff]
    %v2469 = vld [vmem:[#allocation11 + $0x730] sm:$0xff]
    %v2470 = vld [vmem:[#allocation11 + $0x738] sm:$0xff]
    %v2471 = vld [vmem:[#allocation11 + $0x740] sm:$0xff]
    %v2472 = vld [vmem:[#allocation11 + $0x748] sm:$0xff]
    %v2473 = vld [vmem:[#allocation11 + $0x750] sm:$0xff]
    %v2474 = vld [vmem:[#allocation11 + $0x758] sm:$0xff]
    %v2475 = vld [vmem:[#allocation11 + $0x760] sm:$0xff]
    %v2476 = vld [vmem:[#allocation11 + $0x768] sm:$0xff]
    %v2477 = vld [vmem:[#allocation11 + $0x770] sm:$0xff]
    %v2478 = vld [vmem:[#allocation11 + $0x778] sm:$0xff]
    %v2479 = vld [vmem:[#allocation11 + $0x780] sm:$0xff]
    %v2480 = vld [vmem:[#allocation11 + $0x788] sm:$0xff]
    %v2481 = vld [vmem:[#allocation11 + $0x790] sm:$0xff]
    %v2482 = vld [vmem:[#allocation11 + $0x798] sm:$0xff]
    %v2483 = vld [vmem:[#allocation11 + $0x7a0] sm:$0xff]
    %v2484 = vld [vmem:[#allocation11 + $0x7a8] sm:$0xff]
    %v2485 = vld [vmem:[#allocation11 + $0x7b0] sm:$0xff]
    %v2486 = vld [vmem:[#allocation11 + $0x7b8] sm:$0xff]
    %v2487 = vld [vmem:[#allocation11 + $0x7c0] sm:$0xff]
    %v2488 = vld [vmem:[#allocation11 + $0x7c8] sm:$0xff]
    %v2489 = vld [vmem:[#allocation11 + $0x7d0] sm:$0xff]
    %v2490 = vld [vmem:[#allocation11 + $0x7d8] sm:$0xff]
    %v2491 = vld [vmem:[#allocation11 + $0x7e0] sm:$0xff]
    %v2492 = vld [vmem:[#allocation11 + $0x7e8] sm:$0xff]
    %v2493 = vld [vmem:[#allocation11 + $0x7f0] sm:$0xff]
    %v2494 = vld [vmem:[#allocation11 + $0x7f8] sm:$0xff]
    %v2495 = vld [vmem:[#allocation11 + $0x800] sm:$0xff]
    %v2496 = vld [vmem:[#allocation11 + $0x808] sm:$0xff]
    %v2497 = vld [vmem:[#allocation11 + $0x810] sm:$0xff]
    %v2498 = vld [vmem:[#allocation11 + $0x818] sm:$0xff]
    %v2499 = vld [vmem:[#allocation11 + $0x820] sm:$0xff]
    %v2500 = vld [vmem:[#allocation11 + $0x828] sm:$0xff]
    %v2501 = vld [vmem:[#allocation11 + $0x830] sm:$0xff]
    %v2502 = vld [vmem:[#allocation11 + $0x838] sm:$0xff]
    %v2503 = vld [vmem:[#allocation11 + $0x840] sm:$0xff]
    %v2504 = vld [vmem:[#allocation11 + $0x848] sm:$0xff]
    %v2505 = vld [vmem:[#allocation11 + $0x850] sm:$0xff]
    %v2506 = vld [vmem:[#allocation11 + $0x858] sm:$0xff]
    %v2507 = vld [vmem:[#allocation11 + $0x860] sm:$0xff]
    %v2508 = vld [vmem:[#allocation11 + $0x868] sm:$0xff]
    %v2509 = vld [vmem:[#allocation11 + $0x870] sm:$0xff]
    %v2510 = vld [vmem:[#allocation11 + $0x878] sm:$0xff]
    %v2511 = vld [vmem:[#allocation11 + $0x880] sm:$0xff]
    %v2512 = vld [vmem:[#allocation11 + $0x888] sm:$0xff]
    %v2513 = vld [vmem:[#allocation11 + $0x890] sm:$0xff]
    %v2514 = vld [vmem:[#allocation11 + $0x898] sm:$0xff]
    %v2515 = vld [vmem:[#allocation11 + $0x8a0] sm:$0xff]
    %v2516 = vld [vmem:[#allocation11 + $0x8a8] sm:$0xff]
    %v2517 = vld [vmem:[#allocation11 + $0x8b0] sm:$0xff]
    %v2518 = vld [vmem:[#allocation11 + $0x8b8] sm:$0xff]
    %v2519 = vld [vmem:[#allocation11 + $0x8c0] sm:$0xff]
    %v2520 = vld [vmem:[#allocation11 + $0x8c8] sm:$0xff]
    %v2521 = vld [vmem:[#allocation11 + $0x8d0] sm:$0xff]
    %v2522 = vld [vmem:[#allocation11 + $0x8d8] sm:$0xff]
    %v2523 = vld [vmem:[#allocation11 + $0x8e0] sm:$0xff]
    %v2524 = vld [vmem:[#allocation11 + $0x8e8] sm:$0xff]
    %v2525 = vld [vmem:[#allocation11 + $0x8f0] sm:$0xff]
    %v2526 = vld [vmem:[#allocation11 + $0x8f8] sm:$0xff]
    %v2527 = vld [vmem:[#allocation11 + $0x900] sm:$0xff]
    %v2528 = vld [vmem:[#allocation11 + $0x908] sm:$0xff]
    %v2529 = vld [vmem:[#allocation11 + $0x910] sm:$0xff]
    %v2530 = vld [vmem:[#allocation11 + $0x918] sm:$0xff]
    %v2531 = vld [vmem:[#allocation11 + $0x920] sm:$0xff]
    %v2532 = vld [vmem:[#allocation11 + $0x928] sm:$0xff]
    %v2533 = vld [vmem:[#allocation11 + $0x930] sm:$0xff]
    %v2534 = vld [vmem:[#allocation11 + $0x938] sm:$0xff]
    %v2535 = vld [vmem:[#allocation11 + $0x940] sm:$0xff]
    %v2536 = vld [vmem:[#allocation11 + $0x948] sm:$0xff]
    %v2537 = vld [vmem:[#allocation11 + $0x950] sm:$0xff]
    %v2538 = vld [vmem:[#allocation11 + $0x958] sm:$0xff]
    %v2539 = vld [vmem:[#allocation11 + $0x960] sm:$0xff]
    %v2540 = vld [vmem:[#allocation11 + $0x968] sm:$0xff]
    %v2541 = vld [vmem:[#allocation11 + $0x970] sm:$0xff]
    %v2542 = vld [vmem:[#allocation11 + $0x978] sm:$0xff]
    %v2543 = vld [vmem:[#allocation11 + $0x980] sm:$0xff]
    %v2544 = vld [vmem:[#allocation11 + $0x988] sm:$0xff]
    %v2545 = vld [vmem:[#allocation11 + $0x990] sm:$0xff]
    %v2546 = vld [vmem:[#allocation11 + $0x998] sm:$0xff]
    %v2547 = vld [vmem:[#allocation11 + $0x9a0] sm:$0xff]
    %v2548 = vld [vmem:[#allocation11 + $0x9a8] sm:$0xff]
    %v2549 = vld [vmem:[#allocation11 + $0x9b0] sm:$0xff]
    %v2550 = vld [vmem:[#allocation11 + $0x9b8] sm:$0xff]
    %v2551 = vld [vmem:[#allocation11 + $0x9c0] sm:$0xff]
    %v2552 = vld [vmem:[#allocation11 + $0x9c8] sm:$0xff]
    %v2553 = vld [vmem:[#allocation11 + $0x9d0] sm:$0xff]
    %v2554 = vld [vmem:[#allocation11 + $0x9d8] sm:$0xff]
    %v2555 = vld [vmem:[#allocation11 + $0x9e0] sm:$0xff]
    %v2556 = vld [vmem:[#allocation11 + $0x9e8] sm:$0xff]
    %v2557 = vld [vmem:[#allocation11 + $0x9f0] sm:$0xff]
    %v2558 = vld [vmem:[#allocation11 + $0x9f8] sm:$0xff]
    %v2559 = vld [vmem:[#allocation11 + $0xa00] sm:$0xff]
    %v2560 = vld [vmem:[#allocation11 + $0xa08] sm:$0xff]
    %v2561 = vld [vmem:[#allocation11 + $0xa10] sm:$0xff]
    %v2562 = vld [vmem:[#allocation11 + $0xa18] sm:$0xff]
    %v2563 = vld [vmem:[#allocation11 + $0xa20] sm:$0xff]
    %v2564 = vld [vmem:[#allocation11 + $0xa28] sm:$0xff]
    %v2565 = vld [vmem:[#allocation11 + $0xa30] sm:$0xff]
    %v2566 = vld [vmem:[#allocation11 + $0xa38] sm:$0xff]
    %v2567 = vld [vmem:[#allocation11 + $0xa40] sm:$0xff]
    %v2568 = vld [vmem:[#allocation11 + $0xa48] sm:$0xff]
    %v2569 = vld [vmem:[#allocation11 + $0xa50] sm:$0xff]
    %v2570 = vld [vmem:[#allocation11 + $0xa58] sm:$0xff]
    %v2571 = vld [vmem:[#allocation11 + $0xa60] sm:$0xff]
    %v2572 = vld [vmem:[#allocation11 + $0xa68] sm:$0xff]
    %v2573 = vld [vmem:[#allocation11 + $0xa70] sm:$0xff]
    %v2574 = vld [vmem:[#allocation11 + $0xa78] sm:$0xff]
    %v2575 = vld [vmem:[#allocation11 + $0xa80] sm:$0xff]
    %v2576 = vld [vmem:[#allocation11 + $0xa88] sm:$0xff]
    %v2577 = vld [vmem:[#allocation11 + $0xa90] sm:$0xff]
    %v2578 = vld [vmem:[#allocation11 + $0xa98] sm:$0xff]
    %v2579 = vld [vmem:[#allocation11 + $0xaa0] sm:$0xff]
    %v2580 = vld [vmem:[#allocation11 + $0xaa8] sm:$0xff]
    %v2581 = vld [vmem:[#allocation11 + $0xab0] sm:$0xff]
    %v2582 = vld [vmem:[#allocation11 + $0xab8] sm:$0xff]
    %v2583 = vld [vmem:[#allocation11 + $0xac0] sm:$0xff]
    %v2584 = vld [vmem:[#allocation11 + $0xac8] sm:$0xff]
    %v2585 = vld [vmem:[#allocation11 + $0xad0] sm:$0xff]
    %v2586 = vld [vmem:[#allocation11 + $0xad8] sm:$0xff]
    %v2587 = vld [vmem:[#allocation11 + $0xae0] sm:$0xff]
    %v2588 = vld [vmem:[#allocation11 + $0xae8] sm:$0xff]
    %v2589 = vld [vmem:[#allocation11 + $0xaf0] sm:$0xff]
    %v2590 = vld [vmem:[#allocation11 + $0xaf8] sm:$0xff]
    %v2591 = vld [vmem:[#allocation11 + $0xb00] sm:$0xff]
    %v2592 = vld [vmem:[#allocation11 + $0xb08] sm:$0xff]
    %v2593 = vld [vmem:[#allocation11 + $0xb10] sm:$0xff]
    %v2594 = vld [vmem:[#allocation11 + $0xb18] sm:$0xff]
    %v2595 = vld [vmem:[#allocation11 + $0xb20] sm:$0xff]
    %v2596 = vld [vmem:[#allocation11 + $0xb28] sm:$0xff]
    %v2597 = vld [vmem:[#allocation11 + $0xb30] sm:$0xff]
    %v2598 = vld [vmem:[#allocation11 + $0xb38] sm:$0xff]
    %v2599 = vld [vmem:[#allocation11 + $0xb40] sm:$0xff]
    %v2600 = vld [vmem:[#allocation11 + $0xb48] sm:$0xff]
    %v2601 = vld [vmem:[#allocation11 + $0xb50] sm:$0xff]
    %v2602 = vld [vmem:[#allocation11 + $0xb58] sm:$0xff]
    %v2603 = vld [vmem:[#allocation11 + $0xb60] sm:$0xff]
    %v2604 = vld [vmem:[#allocation11 + $0xb68] sm:$0xff]
    %v2605 = vld [vmem:[#allocation11 + $0xb70] sm:$0xff]
    %v2606 = vld [vmem:[#allocation11 + $0xb78] sm:$0xff]
    %v2607 = vld [vmem:[#allocation11 + $0xb80] sm:$0xff]
    %v2608 = vld [vmem:[#allocation11 + $0xb88] sm:$0xff]
    %v2609 = vld [vmem:[#allocation11 + $0xb90] sm:$0xff]
    %v2610 = vld [vmem:[#allocation11 + $0xb98] sm:$0xff]
    %v2611 = vld [vmem:[#allocation11 + $0xba0] sm:$0xff]
    %v2612 = vld [vmem:[#allocation11 + $0xba8] sm:$0xff]
    %v2613 = vld [vmem:[#allocation11 + $0xbb0] sm:$0xff]
    %v2614 = vld [vmem:[#allocation11 + $0xbb8] sm:$0xff]
    %v2615 = vld [vmem:[#allocation11 + $0xbc0] sm:$0xff]
    %v2616 = vld [vmem:[#allocation11 + $0xbc8] sm:$0xff]
    %v2617 = vld [vmem:[#allocation11 + $0xbd0] sm:$0xff]
    %v2618 = vld [vmem:[#allocation11 + $0xbd8] sm:$0xff]
    %v2619 = vld [vmem:[#allocation11 + $0xbe0] sm:$0xff]
    %v2620 = vld [vmem:[#allocation11 + $0xbe8] sm:$0xff]
    %v2621 = vld [vmem:[#allocation11 + $0xbf0] sm:$0xff]
    %v2622 = vld [vmem:[#allocation11 + $0xbf8] sm:$0xff]
    %v2623 = vld [vmem:[#allocation11 + $0xc00] sm:$0xff]
    %v2624 = vld [vmem:[#allocation11 + $0xc08] sm:$0xff]
    %v2625 = vld [vmem:[#allocation11 + $0xc10] sm:$0xff]
    %v2626 = vld [vmem:[#allocation11 + $0xc18] sm:$0xff]
    %v2627 = vld [vmem:[#allocation11 + $0xc20] sm:$0xff]
    %v2628 = vld [vmem:[#allocation11 + $0xc28] sm:$0xff]
    %v2629 = vld [vmem:[#allocation11 + $0xc30] sm:$0xff]
    %v2630 = vld [vmem:[#allocation11 + $0xc38] sm:$0xff]
    %v2631 = vld [vmem:[#allocation11 + $0xc40] sm:$0xff]
    %v2632 = vld [vmem:[#allocation11 + $0xc48] sm:$0xff]
    %v2633 = vld [vmem:[#allocation11 + $0xc50] sm:$0xff]
    %v2634 = vld [vmem:[#allocation11 + $0xc58] sm:$0xff]
    %v2635 = vld [vmem:[#allocation11 + $0xc60] sm:$0xff]
    %v2636 = vld [vmem:[#allocation11 + $0xc68] sm:$0xff]
    %v2637 = vld [vmem:[#allocation11 + $0xc70] sm:$0xff]
    %v2638 = vld [vmem:[#allocation11 + $0xc78] sm:$0xff]
    %v2639 = vld [vmem:[#allocation11 + $0xc80] sm:$0xff]
    %v2640 = vld [vmem:[#allocation11 + $0xc88] sm:$0xff]
    %v2641 = vld [vmem:[#allocation11 + $0xc90] sm:$0xff]
    %v2642 = vld [vmem:[#allocation11 + $0xc98] sm:$0xff]
    %v2643 = vld [vmem:[#allocation11 + $0xca0] sm:$0xff]
    %v2644 = vld [vmem:[#allocation11 + $0xca8] sm:$0xff]
    %v2645 = vld [vmem:[#allocation11 + $0xcb0] sm:$0xff]
    %v2646 = vld [vmem:[#allocation11 + $0xcb8] sm:$0xff]
    %v2647 = vld [vmem:[#allocation11 + $0xcc0] sm:$0xff]
    %v2648 = vld [vmem:[#allocation11 + $0xcc8] sm:$0xff]
    %v2649 = vld [vmem:[#allocation11 + $0xcd0] sm:$0xff]
    %v2650 = vld [vmem:[#allocation11 + $0xcd8] sm:$0xff]
    %v2651 = vld [vmem:[#allocation11 + $0xce0] sm:$0xff]
    %v2652 = vld [vmem:[#allocation11 + $0xce8] sm:$0xff]
    %v2653 = vld [vmem:[#allocation11 + $0xcf0] sm:$0xff]
    %v2654 = vld [vmem:[#allocation11 + $0xcf8] sm:$0xff]
    %v2655 = vld [vmem:[#allocation11 + $0xd00] sm:$0xff]
    %v2656 = vld [vmem:[#allocation11 + $0xd08] sm:$0xff]
    %v2657 = vld [vmem:[#allocation11 + $0xd10] sm:$0xff]
    %v2658 = vld [vmem:[#allocation11 + $0xd18] sm:$0xff]
    %v2659 = vld [vmem:[#allocation11 + $0xd20] sm:$0xff]
    %v2660 = vld [vmem:[#allocation11 + $0xd28] sm:$0xff]
    %v2661 = vld [vmem:[#allocation11 + $0xd30] sm:$0xff]
    %v2662 = vld [vmem:[#allocation11 + $0xd38] sm:$0xff]
    %v2663 = vld [vmem:[#allocation11 + $0xd40] sm:$0xff]
    %v2664 = vld [vmem:[#allocation11 + $0xd48] sm:$0xff]
    %v2665 = vld [vmem:[#allocation11 + $0xd50] sm:$0xff]
    %v2666 = vld [vmem:[#allocation11 + $0xd58] sm:$0xff]
    %v2667 = vld [vmem:[#allocation11 + $0xd60] sm:$0xff]
    %v2668 = vld [vmem:[#allocation11 + $0xd68] sm:$0xff]
    %v2669 = vld [vmem:[#allocation11 + $0xd70] sm:$0xff]
    %v2670 = vld [vmem:[#allocation11 + $0xd78] sm:$0xff]
    %v2671 = vld [vmem:[#allocation11 + $0xd80] sm:$0xff]
    %v2672 = vld [vmem:[#allocation11 + $0xd88] sm:$0xff]
    %v2673 = vld [vmem:[#allocation11 + $0xd90] sm:$0xff]
    %v2674 = vld [vmem:[#allocation11 + $0xd98] sm:$0xff]
    %v2675 = vld [vmem:[#allocation11 + $0xda0] sm:$0xff]
    %v2676 = vld [vmem:[#allocation11 + $0xda8] sm:$0xff]
    %v2677 = vld [vmem:[#allocation11 + $0xdb0] sm:$0xff]
    %v2678 = vld [vmem:[#allocation11 + $0xdb8] sm:$0xff]
    %v2679 = vld [vmem:[#allocation11 + $0xdc0] sm:$0xff]
    %v2680 = vld [vmem:[#allocation11 + $0xdc8] sm:$0xff]
    %v2681 = vld [vmem:[#allocation11 + $0xdd0] sm:$0xff]
    %v2682 = vld [vmem:[#allocation11 + $0xdd8] sm:$0xff]
    %v2683 = vld [vmem:[#allocation11 + $0xde0] sm:$0xff]
    %v2684 = vld [vmem:[#allocation11 + $0xde8] sm:$0xff]
    %v2685 = vld [vmem:[#allocation11 + $0xdf0] sm:$0xff]
    %v2686 = vld [vmem:[#allocation11 + $0xdf8] sm:$0xff]
    %v2687 = vld [vmem:[#allocation11 + $0xe00] sm:$0xff]
    %v2688 = vld [vmem:[#allocation11 + $0xe08] sm:$0xff]
    %v2689 = vld [vmem:[#allocation11 + $0xe10] sm:$0xff]
    %v2690 = vld [vmem:[#allocation11 + $0xe18] sm:$0xff]
    %v2691 = vld [vmem:[#allocation11 + $0xe20] sm:$0xff]
    %v2692 = vld [vmem:[#allocation11 + $0xe28] sm:$0xff]
    %v2693 = vld [vmem:[#allocation11 + $0xe30] sm:$0xff]
    %v2694 = vld [vmem:[#allocation11 + $0xe38] sm:$0xff]
    %v2695 = vld [vmem:[#allocation11 + $0xe40] sm:$0xff]
    %v2696 = vld [vmem:[#allocation11 + $0xe48] sm:$0xff]
    %v2697 = vld [vmem:[#allocation11 + $0xe50] sm:$0xff]
    %v2698 = vld [vmem:[#allocation11 + $0xe58] sm:$0xff]
    %v2699 = vld [vmem:[#allocation11 + $0xe60] sm:$0xff]
    %v2700 = vld [vmem:[#allocation11 + $0xe68] sm:$0xff]
    %v2701 = vld [vmem:[#allocation11 + $0xe70] sm:$0xff]
    %v2702 = vld [vmem:[#allocation11 + $0xe78] sm:$0xff]
    %v2703 = vld [vmem:[#allocation11 + $0xe80] sm:$0xff]
    %v2704 = vld [vmem:[#allocation11 + $0xe88] sm:$0xff]
    %v2705 = vld [vmem:[#allocation11 + $0xe90] sm:$0xff]
    %v2706 = vld [vmem:[#allocation11 + $0xe98] sm:$0xff]
    %v2707 = vld [vmem:[#allocation11 + $0xea0] sm:$0xff]
    %v2708 = vld [vmem:[#allocation11 + $0xea8] sm:$0xff]
    %v2709 = vld [vmem:[#allocation11 + $0xeb0] sm:$0xff]
    %v2710 = vld [vmem:[#allocation11 + $0xeb8] sm:$0xff]
    %v2711 = vld [vmem:[#allocation11 + $0xec0] sm:$0xff]
    %v2712 = vld [vmem:[#allocation11 + $0xec8] sm:$0xff]
    %v2713 = vld [vmem:[#allocation11 + $0xed0] sm:$0xff]
    %v2714 = vld [vmem:[#allocation11 + $0xed8] sm:$0xff]
    %v2715 = vld [vmem:[#allocation11 + $0xee0] sm:$0xff]
    %v2716 = vld [vmem:[#allocation11 + $0xee8] sm:$0xff]
    %v2717 = vld [vmem:[#allocation11 + $0xef0] sm:$0xff]
    %v2718 = vld [vmem:[#allocation11 + $0xef8] sm:$0xff]
    %v2719 = vld [vmem:[#allocation11 + $0xf00] sm:$0xff]
    %v2720 = vld [vmem:[#allocation11 + $0xf08] sm:$0xff]
    %v2721 = vld [vmem:[#allocation11 + $0xf10] sm:$0xff]
    %v2722 = vld [vmem:[#allocation11 + $0xf18] sm:$0xff]
    %v2723 = vld [vmem:[#allocation11 + $0xf20] sm:$0xff]
    %v2724 = vld [vmem:[#allocation11 + $0xf28] sm:$0xff]
    %v2725 = vld [vmem:[#allocation11 + $0xf30] sm:$0xff]
    %v2726 = vld [vmem:[#allocation11 + $0xf38] sm:$0xff]
    %v2727 = vld [vmem:[#allocation11 + $0xf40] sm:$0xff]
    %v2728 = vld [vmem:[#allocation11 + $0xf48] sm:$0xff]
    %v2729 = vld [vmem:[#allocation13] sm:$0x1f]
    %v2731 = vlaneseq
    %v2732 = vshrl.u32 %v2731, 7
    %v2733 = vsub.s32 0, %v2732
    %v2734 = vrot.slane %v2729, %v2733
    %v2735 = vlaneseq
    %v2736 = vshrl.u32 %v2735, 7
    %v2737 = vsub.s32 1, %v2736
    %v2738 = vrot.slane %v2729, %v2737
    %v2739 = vlaneseq
    %v2740 = vshrl.u32 %v2739, 7
    %v2741 = vsub.s32 2, %v2740
    %v2742 = vrot.slane %v2729, %v2741
    %v2743 = vlaneseq
    %v2744 = vshrl.u32 %v2743, 7
    %v2745 = vsub.s32 3, %v2744
    %v2746 = vrot.slane %v2729, %v2745
    %v2747 = vlaneseq
    %v2748 = vshrl.u32 %v2747, 7
    %v2749 = vsub.s32 4, %v2748
    %v2750 = vrot.slane %v2729, %v2749
    %vm2756 = vcmask 130048
    %v2758 = vsel %vm2756, %v2238, 0
    %2760 = vmatprep.subr.mxu0 %v2240
    %2761 = vmatpush1.msra.mxu0 %v2239
    %2762 = vmatprep.subr.mxu0 %v2245
    %2763 = vmatpush1.msra.mxu0 %v2244
    %2764 = vmatprep.subr.mxu0 %v2250
    %2765 = vmatpush1.msra.mxu0 %v2249
    %2766 = vmatprep.subr.mxu0 %v2255
    %2767 = vmatpush1.msra.mxu0 %v2254
    %2768 = vmatprep.subr.mxu0 %v2260
    %2769 = vmatpush1.msra.mxu0 %v2259
    %2770 = vmatprep.subr.mxu0 %v2265
    %2771 = vmatpush1.msra.mxu0 %v2264
    %2772 = vmatprep.subr.mxu0 %v2270
    %2773 = vmatpush1.msra.mxu0 %v2269
    %2774 = vmatprep.subr.mxu0 %v2275
    %2775 = vmatpush1.msra.mxu0 %v2274
    %2776 = vmatprep.subr.mxu0 %v2280
    %2777 = vmatpush1.msra.mxu0 %v2279
    %2778 = vmatprep.subr.mxu0 %v2285
    %2779 = vmatpush1.msra.mxu0 %v2284
    %2780 = vmatprep.subr.mxu0 %v2290
    %2781 = vmatpush1.msra.mxu0 %v2289
    %2782 = vmatprep.subr.mxu0 %v2295
    %2783 = vmatpush1.msra.mxu0 %v2294
    %2784 = vmatprep.subr.mxu0 %v2300
    %2785 = vmatpush1.msra.mxu0 %v2299
    %2786 = vmatprep.subr.mxu0 %v2305
    %2787 = vmatpush1.msra.mxu0 %v2304
    %2788 = vmatprep.subr.mxu0 %v2310
    %2789 = vmatpush1.msra.mxu0 %v2309
    %2790 = vmatprep.subr.mxu0 %v2315
    %2791 = vmatpush1.msra.mxu0 %v2314
    %2792 = vmatprep.subr.mxu0 %v2320
    %2793 = vmatpush1.msra.mxu0 %v2319
    %2794 = vmatprep.subr.mxu0 %v2325
    %2795 = vmatpush1.msra.mxu0 %v2324
    %2796 = vmatprep.subr.mxu0 %v2330
    %2797 = vmatpush1.msra.mxu0 %v2329
    %2798 = vmatprep.subr.mxu0 %v2335
    %2799 = vmatpush1.msra.mxu0 %v2334
    %2800 = vmatprep.subr.mxu0 %v2340
    %2801 = vmatpush1.msra.mxu0 %v2339
    %2802 = vmatprep.subr.mxu0 %v2345
    %2803 = vmatpush1.msra.mxu0 %v2344
    %2804 = vmatprep.subr.mxu0 %v2350
    %2805 = vmatpush1.msra.mxu0 %v2349
    %2806 = vmatprep.subr.mxu0 %v2355
    %2807 = vmatpush1.msra.mxu0 %v2354
    %2808 = vmatprep.subr.mxu0 %v2360
    %2809 = vmatpush1.msra.mxu0 %v2359
    %2810 = vmatprep.subr.mxu0 %v2365
    %2811 = vmatpush1.msra.mxu0 %v2364
    %2812 = vmatprep.subr.mxu0 %v2370
    %2813 = vmatpush1.msra.mxu0 %v2369
    %2814 = vmatprep.subr.mxu0 %v2375
    %2815 = vmatpush1.msra.mxu0 %v2374
    %2816 = vmatprep.subr.mxu0 %v2380
    %2817 = vmatpush1.msra.mxu0 %v2379
    %2818 = vmatprep.subr.mxu0 %v2385
    %2819 = vmatpush1.msra.mxu0 %v2384
    %2820 = vmatprep.subr.mxu0 %v2390
    %2821 = vmatpush1.msra.mxu0 %v2389
    %2822 = vmatprep.subr.mxu0 %v2395
    %2823 = vmatpush1.msra.mxu0 %v2394
    %2824 = vmatprep.mubr.f32.mxu0 %v2233
    %2825 = vmatmul.mubr.f32.gmra.mrb[0].mxu0 %v2232
    %v2826 = vpop.f32.mrb[0].mxu0
    %v2827 = vadd.f32 %v2734, %v2826
    %v2828 = vpop.f32.mrb[0].mxu0
    %v2829 = vadd.f32 %v2738, %v2828
    %2830 = vdwg.mxu0
    %2831 = vmatprep.subr.mxu0 %v2400
    %2832 = vmatpush1.msra.mxu0 %v2399
    %2833 = vmatprep.subr.mxu0 %v2405
    %2834 = vmatpush1.msra.mxu0 %v2404
    %2835 = vmatprep.subr.mxu0 %v2410
    %2836 = vmatpush1.msra.mxu0 %v2409
    %2837 = vmatprep.subr.mxu0 %v2415
    %2838 = vmatpush1.msra.mxu0 %v2414
    %2839 = vmatprep.subr.mxu0 %v2420
    %2840 = vmatpush1.msra.mxu0 %v2419
    %2841 = vmatprep.subr.mxu0 %v2425
    %2842 = vmatpush1.msra.mxu0 %v2424
    %2843 = vmatprep.subr.mxu0 %v2430
    %2844 = vmatpush1.msra.mxu0 %v2429
    %2845 = vmatprep.subr.mxu0 %v2435
    %2846 = vmatpush1.msra.mxu0 %v2434
    %2847 = vmatprep.subr.mxu0 %v2440
    %2848 = vmatpush1.msra.mxu0 %v2439
    %2849 = vmatprep.subr.mxu0 %v2445
    %2850 = vmatpush1.msra.mxu0 %v2444
    %2851 = vmatprep.subr.mxu0 %v2450
    %2852 = vmatpush1.msra.mxu0 %v2449
    %2853 = vmatprep.subr.mxu0 %v2455
    %2854 = vmatpush1.msra.mxu0 %v2454
    %2855 = vmatprep.subr.mxu0 %v2460
    %2856 = vmatpush1.msra.mxu0 %v2459
    %2857 = vmatprep.subr.mxu0 %v2465
    %2858 = vmatpush1.msra.mxu0 %v2464
    %2859 = vmatprep.subr.mxu0 %v2470
    %2860 = vmatpush1.msra.mxu0 %v2469
    %2861 = vmatprep.subr.mxu0 %v2475
    %2862 = vmatpush1.msra.mxu0 %v2474
    %2863 = vmatprep.subr.mxu0 %v2480
    %2864 = vmatpush1.msra.mxu0 %v2479
    %2865 = vmatprep.subr.mxu0 %v2485
    %2866 = vmatpush1.msra.mxu0 %v2484
    %2867 = vmatprep.subr.mxu0 %v2490
    %2868 = vmatpush1.msra.mxu0 %v2489
    %2869 = vmatprep.subr.mxu0 %v2495
    %2870 = vmatpush1.msra.mxu0 %v2494
    %2871 = vmatprep.subr.mxu0 %v2500
    %2872 = vmatpush1.msra.mxu0 %v2499
    %2873 = vmatprep.subr.mxu0 %v2505
    %2874 = vmatpush1.msra.mxu0 %v2504
    %2875 = vmatprep.subr.mxu0 %v2510
    %2876 = vmatpush1.msra.mxu0 %v2509
    %2877 = vmatprep.subr.mxu0 %v2515
    %2878 = vmatpush1.msra.mxu0 %v2514
    %2879 = vmatprep.subr.mxu0 %v2520
    %2880 = vmatpush1.msra.mxu0 %v2519
    %2881 = vmatprep.subr.mxu0 %v2525
    %2882 = vmatpush1.msra.mxu0 %v2524
    %2883 = vmatprep.subr.mxu0 %v2530
    %2884 = vmatpush1.msra.mxu0 %v2529
    %2885 = vmatprep.subr.mxu0 %v2535
    %2886 = vmatpush1.msra.mxu0 %v2534
    %2887 = vmatprep.subr.mxu0 %v2540
    %2888 = vmatpush1.msra.mxu0 %v2539
    %2889 = vmatprep.subr.mxu0 %v2545
    %2890 = vmatpush1.msra.mxu0 %v2544
    %2891 = vmatprep.subr.mxu0 %v2550
    %2892 = vmatpush1.msra.mxu0 %v2549
    %2893 = vmatprep.subr.mxu0 %v2555
    %2894 = vmatpush1.msra.mxu0 %v2554
    %2895 = vmatprep.mubr.f32.mxu0 %v2235
    %2896 = vmatmul.mubr.f32.gmra.mrb[0].mxu0 %v2234
    %v2897 = vpop.f32.mrb[0].mxu0
    %v2898 = vadd.f32 %v2827, %v2897
    %v2899 = vpop.f32.mrb[0].mxu0
    %v2900 = vadd.f32 %v2829, %v2899
    %2901 = vdwg.mxu0
    %2902 = vmatprep.subr.mxu0 %v2560
    %2903 = vmatpush1.msra.mxu0 %v2559
    %2904 = vmatprep.subr.mxu0 %v2565
    %2905 = vmatpush1.msra.mxu0 %v2564
    %2906 = vmatprep.subr.mxu0 %v2570
    %2907 = vmatpush1.msra.mxu0 %v2569
    %2908 = vmatprep.subr.mxu0 %v2575
    %2909 = vmatpush1.msra.mxu0 %v2574
    %2910 = vmatprep.subr.mxu0 %v2580
    %2911 = vmatpush1.msra.mxu0 %v2579
    %2912 = vmatprep.subr.mxu0 %v2585
    %2913 = vmatpush1.msra.mxu0 %v2584
    %2914 = vmatprep.subr.mxu0 %v2590
    %2915 = vmatpush1.msra.mxu0 %v2589
    %2916 = vmatprep.subr.mxu0 %v2595
    %2917 = vmatpush1.msra.mxu0 %v2594
    %2918 = vmatprep.subr.mxu0 %v2600
    %2919 = vmatpush1.msra.mxu0 %v2599
    %2920 = vmatprep.subr.mxu0 %v2605
    %2921 = vmatpush1.msra.mxu0 %v2604
    %2922 = vmatprep.subr.mxu0 %v2610
    %2923 = vmatpush1.msra.mxu0 %v2609
    %2924 = vmatprep.subr.mxu0 %v2615
    %2925 = vmatpush1.msra.mxu0 %v2614
    %2926 = vmatprep.subr.mxu0 %v2620
    %2927 = vmatpush1.msra.mxu0 %v2619
    %2928 = vmatprep.subr.mxu0 %v2625
    %2929 = vmatpush1.msra.mxu0 %v2624
    %2930 = vmatprep.subr.mxu0 %v2630
    %2931 = vmatpush1.msra.mxu0 %v2629
    %2932 = vmatprep.subr.mxu0 %v2635
    %2933 = vmatpush1.msra.mxu0 %v2634
    %2934 = vmatprep.subr.mxu0 %v2640
    %2935 = vmatpush1.msra.mxu0 %v2639
    %2936 = vmatprep.subr.mxu0 %v2645
    %2937 = vmatpush1.msra.mxu0 %v2644
    %2938 = vmatprep.subr.mxu0 %v2650
    %2939 = vmatpush1.msra.mxu0 %v2649
    %2940 = vmatprep.subr.mxu0 %v2655
    %2941 = vmatpush1.msra.mxu0 %v2654
    %2942 = vmatprep.subr.mxu0 %v2660
    %2943 = vmatpush1.msra.mxu0 %v2659
    %2944 = vmatprep.subr.mxu0 %v2665
    %2945 = vmatpush1.msra.mxu0 %v2664
    %2946 = vmatprep.subr.mxu0 %v2670
    %2947 = vmatpush1.msra.mxu0 %v2669
    %2948 = vmatprep.subr.mxu0 %v2675
    %2949 = vmatpush1.msra.mxu0 %v2674
    %2950 = vmatprep.subr.mxu0 %v2680
    %2951 = vmatpush1.msra.mxu0 %v2679
    %2952 = vmatprep.subr.mxu0 %v2685
    %2953 = vmatpush1.msra.mxu0 %v2684
    %2954 = vmatprep.subr.mxu0 %v2690
    %2955 = vmatpush1.msra.mxu0 %v2689
    %2956 = vmatprep.subr.mxu0 %v2695
    %2957 = vmatpush1.msra.mxu0 %v2694
    %2958 = vmatprep.subr.mxu0 %v2700
    %2959 = vmatpush1.msra.mxu0 %v2699
    %2960 = vmatprep.subr.mxu0 %v2705
    %2961 = vmatpush1.msra.mxu0 %v2704
    %2962 = vmatprep.subr.mxu0 %v2710
    %2963 = vmatpush1.msra.mxu0 %v2709
    %2964 = vmatprep.subr.mxu0 %v2715
    %2965 = vmatpush1.msra.mxu0 %v2714
    %2966 = vmatprep.mubr.f32.mxu0 %v2237
    %2967 = vmatmul.mubr.f32.gmra.mrb[0].mxu0 %v2236
    %v2968 = vpop.f32.mrb[0].mxu0
    %v2969 = vadd.f32 %v2898, %v2968
    %v2970 = vpop.f32.mrb[0].mxu0
    %v2971 = vadd.f32 %v2900, %v2970
    %2972 = vdwg.mxu0
    %2973 = vmatprep.subr.mxu0 %v2720
    %2974 = vmatpush1.msra.mxu0 %v2719
    %2975 = vmatprep.subr.mxu0 %v2725
    %2976 = vmatpush1.msra.mxu0 %v2724
    %2977 = vmatprep.subr.mxu0 0.0
    %2978 = vmatpush1.msra.mxu0 0.0
    %2979 = vmatprep.subr.mxu0 0.0
    %2980 = vmatpush1.msra.mxu0 0.0
    %2981 = vmatprep.subr.mxu0 0.0
    %2982 = vmatpush1.msra.mxu0 0.0
    %2983 = vmatprep.subr.mxu0 0.0
    %2984 = vmatpush1.msra.mxu0 0.0
    %2985 = vmatprep.subr.mxu0 0.0
    %2986 = vmatpush1.msra.mxu0 0.0
    %2987 = vmatprep.subr.mxu0 0.0
    %2988 = vmatpush1.msra.mxu0 0.0
    %2989 = vmatprep.subr.mxu0 0.0
    %2990 = vmatpush1.msra.mxu0 0.0
    %2991 = vmatprep.subr.mxu0 0.0
    %2992 = vmatpush1.msra.mxu0 0.0
    %2993 = vmatprep.subr.mxu0 0.0
    %2994 = vmatpush1.msra.mxu0 0.0
    %2995 = vmatprep.subr.mxu0 0.0
    %2996 = vmatpush1.msra.mxu0 0.0
    %2997 = vmatprep.subr.mxu0 0.0
    %2998 = vmatpush1.msra.mxu0 0.0
    %2999 = vmatprep.subr.mxu0 0.0
    %3000 = vmatpush1.msra.mxu0 0.0
    %3001 = vmatprep.subr.mxu0 0.0
    %3002 = vmatpush1.msra.mxu0 0.0
    %3003 = vmatprep.subr.mxu0 0.0
    %3004 = vmatpush1.msra.mxu0 0.0
    %3005 = vmatprep.subr.mxu0 0.0
    %3006 = vmatpush1.msra.mxu0 0.0
    %3007 = vmatprep.subr.mxu0 0.0
    %3008 = vmatpush1.msra.mxu0 0.0
    %3009 = vmatprep.subr.mxu0 0.0
    %3010 = vmatpush1.msra.mxu0 0.0
    %3011 = vmatprep.subr.mxu0 0.0
    %3012 = vmatpush1.msra.mxu0 0.0
    %3013 = vmatprep.subr.mxu0 0.0
    %3014 = vmatpush1.msra.mxu0 0.0
    %3015 = vmatprep.subr.mxu0 0.0
    %3016 = vmatpush1.msra.mxu0 0.0
    %3017 = vmatprep.subr.mxu0 0.0
    %3018 = vmatpush1.msra.mxu0 0.0
    %3019 = vmatprep.subr.mxu0 0.0
    %3020 = vmatpush1.msra.mxu0 0.0
    %3021 = vmatprep.subr.mxu0 0.0
    %3022 = vmatpush1.msra.mxu0 0.0
    %3023 = vmatprep.subr.mxu0 0.0
    %3024 = vmatpush1.msra.mxu0 0.0
    %3025 = vmatprep.subr.mxu0 0.0
    %3026 = vmatpush1.msra.mxu0 0.0
    %3027 = vmatprep.subr.mxu0 0.0
    %3028 = vmatpush1.msra.mxu0 0.0
    %3029 = vmatprep.subr.mxu0 0.0
    %3030 = vmatpush1.msra.mxu0 0.0
    %3031 = vmatprep.subr.mxu0 0.0
    %3032 = vmatpush1.msra.mxu0 0.0
    %3033 = vmatprep.subr.mxu0 0.0
    %3034 = vmatpush1.msra.mxu0 0.0
    %3035 = vmatprep.subr.mxu0 0.0
    %3036 = vmatpush1.msra.mxu0 0.0
    %3037 = vmatprep.mubr.f32.mxu0 0.0
    %3038 = vmatmul.mubr.f32.gmra.mrb[0].mxu0 %v2758
    %v3039 = vpop.f32.mrb[0].mxu0
    %v3040 = vadd.f32 %v2969, %v3039
    %v3041 = vpop.f32.mrb[0].mxu0
    %v3042 = vadd.f32 %v2971, %v3041
    %3043 = vdwg.mxu0
    %3044 = vmatprep.subr.mxu0 %v2242
    %3045 = vmatpush1.msra.mxu0 %v2241
    %3046 = vmatprep.subr.mxu0 %v2247
    %3047 = vmatpush1.msra.mxu0 %v2246
    %3048 = vmatprep.subr.mxu0 %v2252
    %3049 = vmatpush1.msra.mxu0 %v2251
    %3050 = vmatprep.subr.mxu0 %v2257
    %3051 = vmatpush1.msra.mxu0 %v2256
    %3052 = vmatprep.subr.mxu0 %v2262
    %3053 = vmatpush1.msra.mxu0 %v2261
    %3054 = vmatprep.subr.mxu0 %v2267
    %3055 = vmatpush1.msra.mxu0 %v2266
    %3056 = vmatprep.subr.mxu0 %v2272
    %3057 = vmatpush1.msra.mxu0 %v2271
    %3058 = vmatprep.subr.mxu0 %v2277
    %3059 = vmatpush1.msra.mxu0 %v2276
    %3060 = vmatprep.subr.mxu0 %v2282
    %3061 = vmatpush1.msra.mxu0 %v2281
    %3062 = vmatprep.subr.mxu0 %v2287
    %3063 = vmatpush1.msra.mxu0 %v2286
    %3064 = vmatprep.subr.mxu0 %v2292
    %3065 = vmatpush1.msra.mxu0 %v2291
    %3066 = vmatprep.subr.mxu0 %v2297
    %3067 = vmatpush1.msra.mxu0 %v2296
    %3068 = vmatprep.subr.mxu0 %v2302
    %3069 = vmatpush1.msra.mxu0 %v2301
    %3070 = vmatprep.subr.mxu0 %v2307
    %3071 = vmatpush1.msra.mxu0 %v2306
    %3072 = vmatprep.subr.mxu0 %v2312
    %3073 = vmatpush1.msra.mxu0 %v2311
    %3074 = vmatprep.subr.mxu0 %v2317
    %3075 = vmatpush1.msra.mxu0 %v2316
    %3076 = vmatprep.subr.mxu0 %v2322
    %3077 = vmatpush1.msra.mxu0 %v2321
    %3078 = vmatprep.subr.mxu0 %v2327
    %3079 = vmatpush1.msra.mxu0 %v2326
    %3080 = vmatprep.subr.mxu0 %v2332
    %3081 = vmatpush1.msra.mxu0 %v2331
    %3082 = vmatprep.subr.mxu0 %v2337
    %3083 = vmatpush1.msra.mxu0 %v2336
    %3084 = vmatprep.subr.mxu0 %v2342
    %3085 = vmatpush1.msra.mxu0 %v2341
    %3086 = vmatprep.subr.mxu0 %v2347
    %3087 = vmatpush1.msra.mxu0 %v2346
    %3088 = vmatprep.subr.mxu0 %v2352
    %3089 = vmatpush1.msra.mxu0 %v2351
    %3090 = vmatprep.subr.mxu0 %v2357
    %3091 = vmatpush1.msra.mxu0 %v2356
    %3092 = vmatprep.subr.mxu0 %v2362
    %3093 = vmatpush1.msra.mxu0 %v2361
    %3094 = vmatprep.subr.mxu0 %v2367
    %3095 = vmatpush1.msra.mxu0 %v2366
    %3096 = vmatprep.subr.mxu0 %v2372
    %3097 = vmatpush1.msra.mxu0 %v2371
    %3098 = vmatprep.subr.mxu0 %v2377
    %3099 = vmatpush1.msra.mxu0 %v2376
    %3100 = vmatprep.subr.mxu0 %v2382
    %3101 = vmatpush1.msra.mxu0 %v2381
    %3102 = vmatprep.subr.mxu0 %v2387
    %3103 = vmatpush1.msra.mxu0 %v2386
    %3104 = vmatprep.subr.mxu0 %v2392
    %3105 = vmatpush1.msra.mxu0 %v2391
    %3106 = vmatprep.subr.mxu0 %v2397
    %3107 = vmatpush1.msra.mxu0 %v2396
    %3108 = vmatprep.mubr.f32.mxu0 %v2233
    %3109 = vmatmul.mubr.f32.gmra.mrb[0].mxu0 %v2232
    %v3110 = vpop.f32.mrb[0].mxu0
    %v3111 = vadd.f32 %v2742, %v3110
    %v3112 = vpop.f32.mrb[0].mxu0
    %v3113 = vadd.f32 %v2746, %v3112
    %3114 = vdwg.mxu0
    %3115 = vmatprep.subr.mxu0 %v2402
    %3116 = vmatpush1.msra.mxu0 %v2401
    %3117 = vmatprep.subr.mxu0 %v2407
    %3118 = vmatpush1.msra.mxu0 %v2406
    %3119 = vmatprep.subr.mxu0 %v2412
    %3120 = vmatpush1.msra.mxu0 %v2411
    %3121 = vmatprep.subr.mxu0 %v2417
    %3122 = vmatpush1.msra.mxu0 %v2416
    %3123 = vmatprep.subr.mxu0 %v2422
    %3124 = vmatpush1.msra.mxu0 %v2421
    %3125 = vmatprep.subr.mxu0 %v2427
    %3126 = vmatpush1.msra.mxu0 %v2426
    %3127 = vmatprep.subr.mxu0 %v2432
    %3128 = vmatpush1.msra.mxu0 %v2431
    %3129 = vmatprep.subr.mxu0 %v2437
    %3130 = vmatpush1.msra.mxu0 %v2436
    %3131 = vmatprep.subr.mxu0 %v2442
    %3132 = vmatpush1.msra.mxu0 %v2441
    %3133 = vmatprep.subr.mxu0 %v2447
    %3134 = vmatpush1.msra.mxu0 %v2446
    %3135 = vmatprep.subr.mxu0 %v2452
    %3136 = vmatpush1.msra.mxu0 %v2451
    %3137 = vmatprep.subr.mxu0 %v2457
    %3138 = vmatpush1.msra.mxu0 %v2456
    %3139 = vmatprep.subr.mxu0 %v2462
    %3140 = vmatpush1.msra.mxu0 %v2461
    %3141 = vmatprep.subr.mxu0 %v2467
    %3142 = vmatpush1.msra.mxu0 %v2466
    %3143 = vmatprep.subr.mxu0 %v2472
    %3144 = vmatpush1.msra.mxu0 %v2471
    %3145 = vmatprep.subr.mxu0 %v2477
    %3146 = vmatpush1.msra.mxu0 %v2476
    %3147 = vmatprep.subr.mxu0 %v2482
    %3148 = vmatpush1.msra.mxu0 %v2481
    %3149 = vmatprep.subr.mxu0 %v2487
    %3150 = vmatpush1.msra.mxu0 %v2486
    %3151 = vmatprep.subr.mxu0 %v2492
    %3152 = vmatpush1.msra.mxu0 %v2491
    %3153 = vmatprep.subr.mxu0 %v2497
    %3154 = vmatpush1.msra.mxu0 %v2496
    %3155 = vmatprep.subr.mxu0 %v2502
    %3156 = vmatpush1.msra.mxu0 %v2501
    %3157 = vmatprep.subr.mxu0 %v2507
    %3158 = vmatpush1.msra.mxu0 %v2506
    %3159 = vmatprep.subr.mxu0 %v2512
    %3160 = vmatpush1.msra.mxu0 %v2511
    %3161 = vmatprep.subr.mxu0 %v2517
    %3162 = vmatpush1.msra.mxu0 %v2516
    %3163 = vmatprep.subr.mxu0 %v2522
    %3164 = vmatpush1.msra.mxu0 %v2521
    %3165 = vmatprep.subr.mxu0 %v2527
    %3166 = vmatpush1.msra.mxu0 %v2526
    %3167 = vmatprep.subr.mxu0 %v2532
    %3168 = vmatpush1.msra.mxu0 %v2531
    %3169 = vmatprep.subr.mxu0 %v2537
    %3170 = vmatpush1.msra.mxu0 %v2536
    %3171 = vmatprep.subr.mxu0 %v2542
    %3172 = vmatpush1.msra.mxu0 %v2541
    %3173 = vmatprep.subr.mxu0 %v2547
    %3174 = vmatpush1.msra.mxu0 %v2546
    %3175 = vmatprep.subr.mxu0 %v2552
    %3176 = vmatpush1.msra.mxu0 %v2551
    %3177 = vmatprep.subr.mxu0 %v2557
    %3178 = vmatpush1.msra.mxu0 %v2556
    %3179 = vmatprep.mubr.f32.mxu0 %v2235
    %3180 = vmatmul.mubr.f32.gmra.mrb[0].mxu0 %v2234
    %v3181 = vpop.f32.mrb[0].mxu0
    %v3182 = vadd.f32 %v3111, %v3181
    %v3183 = vpop.f32.mrb[0].mxu0
    %v3184 = vadd.f32 %v3113, %v3183
    %3185 = vdwg.mxu0
    %3186 = vmatprep.subr.mxu0 %v2562
    %3187 = vmatpush1.msra.mxu0 %v2561
    %3188 = vmatprep.subr.mxu0 %v2567
    %3189 = vmatpush1.msra.mxu0 %v2566
    %3190 = vmatprep.subr.mxu0 %v2572
    %3191 = vmatpush1.msra.mxu0 %v2571
    %3192 = vmatprep.subr.mxu0 %v2577
    %3193 = vmatpush1.msra.mxu0 %v2576
    %3194 = vmatprep.subr.mxu0 %v2582
    %3195 = vmatpush1.msra.mxu0 %v2581
    %3196 = vmatprep.subr.mxu0 %v2587
    %3197 = vmatpush1.msra.mxu0 %v2586
    %3198 = vmatprep.subr.mxu0 %v2592
    %3199 = vmatpush1.msra.mxu0 %v2591
    %3200 = vmatprep.subr.mxu0 %v2597
    %3201 = vmatpush1.msra.mxu0 %v2596
    %3202 = vmatprep.subr.mxu0 %v2602
    %3203 = vmatpush1.msra.mxu0 %v2601
    %3204 = vmatprep.subr.mxu0 %v2607
    %3205 = vmatpush1.msra.mxu0 %v2606
    %3206 = vmatprep.subr.mxu0 %v2612
    %3207 = vmatpush1.msra.mxu0 %v2611
    %3208 = vmatprep.subr.mxu0 %v2617
    %3209 = vmatpush1.msra.mxu0 %v2616
    %3210 = vmatprep.subr.mxu0 %v2622
    %3211 = vmatpush1.msra.mxu0 %v2621
    %3212 = vmatprep.subr.mxu0 %v2627
    %3213 = vmatpush1.msra.mxu0 %v2626
    %3214 = vmatprep.subr.mxu0 %v2632
    %3215 = vmatpush1.msra.mxu0 %v2631
    %3216 = vmatprep.subr.mxu0 %v2637
    %3217 = vmatpush1.msra.mxu0 %v2636
    %3218 = vmatprep.subr.mxu0 %v2642
    %3219 = vmatpush1.msra.mxu0 %v2641
    %3220 = vmatprep.subr.mxu0 %v2647
    %3221 = vmatpush1.msra.mxu0 %v2646
    %3222 = vmatprep.subr.mxu0 %v2652
    %3223 = vmatpush1.msra.mxu0 %v2651
    %3224 = vmatprep.subr.mxu0 %v2657
    %3225 = vmatpush1.msra.mxu0 %v2656
    %3226 = vmatprep.subr.mxu0 %v2662
    %3227 = vmatpush1.msra.mxu0 %v2661
    %3228 = vmatprep.subr.mxu0 %v2667
    %3229 = vmatpush1.msra.mxu0 %v2666
    %3230 = vmatprep.subr.mxu0 %v2672
    %3231 = vmatpush1.msra.mxu0 %v2671
    %3232 = vmatprep.subr.mxu0 %v2677
    %3233 = vmatpush1.msra.mxu0 %v2676
    %3234 = vmatprep.subr.mxu0 %v2682
    %3235 = vmatpush1.msra.mxu0 %v2681
    %3236 = vmatprep.subr.mxu0 %v2687
    %3237 = vmatpush1.msra.mxu0 %v2686
    %3238 = vmatprep.subr.mxu0 %v2692
    %3239 = vmatpush1.msra.mxu0 %v2691
    %3240 = vmatprep.subr.mxu0 %v2697
    %3241 = vmatpush1.msra.mxu0 %v2696
    %3242 = vmatprep.subr.mxu0 %v2702
    %3243 = vmatpush1.msra.mxu0 %v2701
    %3244 = vmatprep.subr.mxu0 %v2707
    %3245 = vmatpush1.msra.mxu0 %v2706
    %3246 = vmatprep.subr.mxu0 %v2712
    %3247 = vmatpush1.msra.mxu0 %v2711
    %3248 = vmatprep.subr.mxu0 %v2717
    %3249 = vmatpush1.msra.mxu0 %v2716
    %3250 = vmatprep.mubr.f32.mxu0 %v2237
    %3251 = vmatmul.mubr.f32.gmra.mrb[0].mxu0 %v2236
    %v3252 = vpop.f32.mrb[0].mxu0
    %v3253 = vadd.f32 %v3182, %v3252
    %v3254 = vpop.f32.mrb[0].mxu0
    %v3255 = vadd.f32 %v3184, %v3254
    %3256 = vdwg.mxu0
    %3257 = vmatprep.subr.mxu0 %v2722
    %3258 = vmatpush1.msra.mxu0 %v2721
    %3259 = vmatprep.subr.mxu0 %v2727
    %3260 = vmatpush1.msra.mxu0 %v2726
    %3261 = vmatprep.subr.mxu0 0.0
    %3262 = vmatpush1.msra.mxu0 0.0
    %3263 = vmatprep.subr.mxu0 0.0
    %3264 = vmatpush1.msra.mxu0 0.0
    %3265 = vmatprep.subr.mxu0 0.0
    %3266 = vmatpush1.msra.mxu0 0.0
    %3267 = vmatprep.subr.mxu0 0.0
    %3268 = vmatpush1.msra.mxu0 0.0
    %3269 = vmatprep.subr.mxu0 0.0
    %3270 = vmatpush1.msra.mxu0 0.0
    %3271 = vmatprep.subr.mxu0 0.0
    %3272 = vmatpush1.msra.mxu0 0.0
    %3273 = vmatprep.subr.mxu0 0.0
    %3274 = vmatpush1.msra.mxu0 0.0
    %3275 = vmatprep.subr.mxu0 0.0
    %3276 = vmatpush1.msra.mxu0 0.0
    %3277 = vmatprep.subr.mxu0 0.0
    %3278 = vmatpush1.msra.mxu0 0.0
    %3279 = vmatprep.subr.mxu0 0.0
    %3280 = vmatpush1.msra.mxu0 0.0
    %3281 = vmatprep.subr.mxu0 0.0
    %3282 = vmatpush1.msra.mxu0 0.0
    %3283 = vmatprep.subr.mxu0 0.0
    %3284 = vmatpush1.msra.mxu0 0.0
    %3285 = vmatprep.subr.mxu0 0.0
    %3286 = vmatpush1.msra.mxu0 0.0
    %3287 = vmatprep.subr.mxu0 0.0
    %3288 = vmatpush1.msra.mxu0 0.0
    %3289 = vmatprep.subr.mxu0 0.0
    %3290 = vmatpush1.msra.mxu0 0.0
    %3291 = vmatprep.subr.mxu0 0.0
    %3292 = vmatpush1.msra.mxu0 0.0
    %3293 = vmatprep.subr.mxu0 0.0
    %3294 = vmatpush1.msra.mxu0 0.0
    %3295 = vmatprep.subr.mxu0 0.0
    %3296 = vmatpush1.msra.mxu0 0.0
    %3297 = vmatprep.subr.mxu0 0.0
    %3298 = vmatpush1.msra.mxu0 0.0
    %3299 = vmatprep.subr.mxu0 0.0
    %3300 = vmatpush1.msra.mxu0 0.0
    %3301 = vmatprep.subr.mxu0 0.0
    %3302 = vmatpush1.msra.mxu0 0.0
    %3303 = vmatprep.subr.mxu0 0.0
    %3304 = vmatpush1.msra.mxu0 0.0
    %3305 = vmatprep.subr.mxu0 0.0
    %3306 = vmatpush1.msra.mxu0 0.0
    %3307 = vmatprep.subr.mxu0 0.0
    %3308 = vmatpush1.msra.mxu0 0.0
    %3309 = vmatprep.subr.mxu0 0.0
    %3310 = vmatpush1.msra.mxu0 0.0
    %3311 = vmatprep.subr.mxu0 0.0
    %3312 = vmatpush1.msra.mxu0 0.0
    %3313 = vmatprep.subr.mxu0 0.0
    %3314 = vmatpush1.msra.mxu0 0.0
    %3315 = vmatprep.subr.mxu0 0.0
    %3316 = vmatpush1.msra.mxu0 0.0
    %3317 = vmatprep.subr.mxu0 0.0
    %3318 = vmatpush1.msra.mxu0 0.0
    %3319 = vmatprep.subr.mxu0 0.0
    %3320 = vmatpush1.msra.mxu0 0.0
    %3321 = vmatprep.mubr.f32.mxu0 0.0
    %3322 = vmatmul.mubr.f32.gmra.mrb[0].mxu0 %v2758
    %v3323 = vpop.f32.mrb[0].mxu0
    %v3324 = vadd.f32 %v3253, %v3323
    %v3325 = vpop.f32.mrb[0].mxu0
    %v3326 = vadd.f32 %v3255, %v3325
    %3327 = vdwg.mxu0
    %3328 = vmatprep.subr.mxu0 0.0
    %3329 = vmatpush1.msra.mxu0 %v2243
    %3330 = vmatprep.subr.mxu0 0.0
    %3331 = vmatpush1.msra.mxu0 %v2248
    %3332 = vmatprep.subr.mxu0 0.0
    %3333 = vmatpush1.msra.mxu0 %v2253
    %3334 = vmatprep.subr.mxu0 0.0
    %3335 = vmatpush1.msra.mxu0 %v2258
    %3336 = vmatprep.subr.mxu0 0.0
    %3337 = vmatpush1.msra.mxu0 %v2263
    %3338 = vmatprep.subr.mxu0 0.0
    %3339 = vmatpush1.msra.mxu0 %v2268
    %3340 = vmatprep.subr.mxu0 0.0
    %3341 = vmatpush1.msra.mxu0 %v2273
    %3342 = vmatprep.subr.mxu0 0.0
    %3343 = vmatpush1.msra.mxu0 %v2278
    %3344 = vmatprep.subr.mxu0 0.0
    %3345 = vmatpush1.msra.mxu0 %v2283
    %3346 = vmatprep.subr.mxu0 0.0
    %3347 = vmatpush1.msra.mxu0 %v2288
    %3348 = vmatprep.subr.mxu0 0.0
    %3349 = vmatpush1.msra.mxu0 %v2293
    %3350 = vmatprep.subr.mxu0 0.0
    %3351 = vmatpush1.msra.mxu0 %v2298
    %3352 = vmatprep.subr.mxu0 0.0
    %3353 = vmatpush1.msra.mxu0 %v2303
    %3354 = vmatprep.subr.mxu0 0.0
    %3355 = vmatpush1.msra.mxu0 %v2308
    %3356 = vmatprep.subr.mxu0 0.0
    %3357 = vmatpush1.msra.mxu0 %v2313
    %3358 = vmatprep.subr.mxu0 0.0
    %3359 = vmatpush1.msra.mxu0 %v2318
    %3360 = vmatprep.subr.mxu0 0.0
    %3361 = vmatpush1.msra.mxu0 %v2323
    %3362 = vmatprep.subr.mxu0 0.0
    %3363 = vmatpush1.msra.mxu0 %v2328
    %3364 = vmatprep.subr.mxu0 0.0
    %3365 = vmatpush1.msra.mxu0 %v2333
    %3366 = vmatprep.subr.mxu0 0.0
    %3367 = vmatpush1.msra.mxu0 %v2338
    %3368 = vmatprep.subr.mxu0 0.0
    %3369 = vmatpush1.msra.mxu0 %v2343
    %3370 = vmatprep.subr.mxu0 0.0
    %3371 = vmatpush1.msra.mxu0 %v2348
    %3372 = vmatprep.subr.mxu0 0.0
    %3373 = vmatpush1.msra.mxu0 %v2353
    %3374 = vmatprep.subr.mxu0 0.0
    %3375 = vmatpush1.msra.mxu0 %v2358
    %3376 = vmatprep.subr.mxu0 0.0
    %3377 = vmatpush1.msra.mxu0 %v2363
    %3378 = vmatprep.subr.mxu0 0.0
    %3379 = vmatpush1.msra.mxu0 %v2368
    %3380 = vmatprep.subr.mxu0 0.0
    %3381 = vmatpush1.msra.mxu0 %v2373
    %3382 = vmatprep.subr.mxu0 0.0
    %3383 = vmatpush1.msra.mxu0 %v2378
    %3384 = vmatprep.subr.mxu0 0.0
    %3385 = vmatpush1.msra.mxu0 %v2383
    %3386 = vmatprep.subr.mxu0 0.0
    %3387 = vmatpush1.msra.mxu0 %v2388
    %3388 = vmatprep.subr.mxu0 0.0
    %3389 = vmatpush1.msra.mxu0 %v2393
    %3390 = vmatprep.subr.mxu0 0.0
    %3391 = vmatpush1.msra.mxu0 %v2398
    %3392 = vmatprep.mubr.f32.mxu0 %v2233
    %3393 = vmatmul.mubr.f32.gmra.mrb[0].mxu0 %v2232
    %v3394 = vpop.f32.mrb[0].mxu0
    %v3395 = vadd.f32 %v2750, %v3394
    %v3396 = vpop.f32.mrb[0].mxu0
    %3397 = vdwg.mxu0
    %3398 = vmatprep.subr.mxu0 0.0
    %3399 = vmatpush1.msra.mxu0 %v2403
    %3400 = vmatprep.subr.mxu0 0.0
    %3401 = vmatpush1.msra.mxu0 %v2408
    %3402 = vmatprep.subr.mxu0 0.0
    %3403 = vmatpush1.msra.mxu0 %v2413
    %3404 = vmatprep.subr.mxu0 0.0
    %3405 = vmatpush1.msra.mxu0 %v2418
    %3406 = vmatprep.subr.mxu0 0.0
    %3407 = vmatpush1.msra.mxu0 %v2423
    %3408 = vmatprep.subr.mxu0 0.0
    %3409 = vmatpush1.msra.mxu0 %v2428
    %3410 = vmatprep.subr.mxu0 0.0
    %3411 = vmatpush1.msra.mxu0 %v2433
    %3412 = vmatprep.subr.mxu0 0.0
    %3413 = vmatpush1.msra.mxu0 %v2438
    %3414 = vmatprep.subr.mxu0 0.0
    %3415 = vmatpush1.msra.mxu0 %v2443
    %3416 = vmatprep.subr.mxu0 0.0
    %3417 = vmatpush1.msra.mxu0 %v2448
    %3418 = vmatprep.subr.mxu0 0.0
    %3419 = vmatpush1.msra.mxu0 %v2453
    %3420 = vmatprep.subr.mxu0 0.0
    %3421 = vmatpush1.msra.mxu0 %v2458
    %3422 = vmatprep.subr.mxu0 0.0
    %3423 = vmatpush1.msra.mxu0 %v2463
    %3424 = vmatprep.subr.mxu0 0.0
    %3425 = vmatpush1.msra.mxu0 %v2468
    %3426 = vmatprep.subr.mxu0 0.0
    %3427 = vmatpush1.msra.mxu0 %v2473
    %3428 = vmatprep.subr.mxu0 0.0
    %3429 = vmatpush1.msra.mxu0 %v2478
    %3430 = vmatprep.subr.mxu0 0.0
    %3431 = vmatpush1.msra.mxu0 %v2483
    %3432 = vmatprep.subr.mxu0 0.0
    %3433 = vmatpush1.msra.mxu0 %v2488
    %3434 = vmatprep.subr.mxu0 0.0
    %3435 = vmatpush1.msra.mxu0 %v2493
    %3436 = vmatprep.subr.mxu0 0.0
    %3437 = vmatpush1.msra.mxu0 %v2498
    %3438 = vmatprep.subr.mxu0 0.0
    %3439 = vmatpush1.msra.mxu0 %v2503
    %3440 = vmatprep.subr.mxu0 0.0
    %3441 = vmatpush1.msra.mxu0 %v2508
    %3442 = vmatprep.subr.mxu0 0.0
    %3443 = vmatpush1.msra.mxu0 %v2513
    %3444 = vmatprep.subr.mxu0 0.0
    %3445 = vmatpush1.msra.mxu0 %v2518
    %3446 = vmatprep.subr.mxu0 0.0
    %3447 = vmatpush1.msra.mxu0 %v2523
    %3448 = vmatprep.subr.mxu0 0.0
    %3449 = vmatpush1.msra.mxu0 %v2528
    %3450 = vmatprep.subr.mxu0 0.0
    %3451 = vmatpush1.msra.mxu0 %v2533
    %3452 = vmatprep.subr.mxu0 0.0
    %3453 = vmatpush1.msra.mxu0 %v2538
    %3454 = vmatprep.subr.mxu0 0.0
    %3455 = vmatpush1.msra.mxu0 %v2543
    %3456 = vmatprep.subr.mxu0 0.0
    %3457 = vmatpush1.msra.mxu0 %v2548
    %3458 = vmatprep.subr.mxu0 0.0
    %3459 = vmatpush1.msra.mxu0 %v2553
    %3460 = vmatprep.subr.mxu0 0.0
    %3461 = vmatpush1.msra.mxu0 %v2558
    %3462 = vmatprep.mubr.f32.mxu0 %v2235
    %3463 = vmatmul.mubr.f32.gmra.mrb[0].mxu0 %v2234
    %v3464 = vpop.f32.mrb[0].mxu0
    %v3465 = vadd.f32 %v3395, %v3464
    %v3466 = vpop.f32.mrb[0].mxu0
    %3467 = vdwg.mxu0
    %3468 = vmatprep.subr.mxu0 0.0
    %3469 = vmatpush1.msra.mxu0 %v2563
    %3470 = vmatprep.subr.mxu0 0.0
    %3471 = vmatpush1.msra.mxu0 %v2568
    %3472 = vmatprep.subr.mxu0 0.0
    %3473 = vmatpush1.msra.mxu0 %v2573
    %3474 = vmatprep.subr.mxu0 0.0
    %3475 = vmatpush1.msra.mxu0 %v2578
    %3476 = vmatprep.subr.mxu0 0.0
    %3477 = vmatpush1.msra.mxu0 %v2583
    %3478 = vmatprep.subr.mxu0 0.0
    %3479 = vmatpush1.msra.mxu0 %v2588
    %3480 = vmatprep.subr.mxu0 0.0
    %3481 = vmatpush1.msra.mxu0 %v2593
    %3482 = vmatprep.subr.mxu0 0.0
    %3483 = vmatpush1.msra.mxu0 %v2598
    %3484 = vmatprep.subr.mxu0 0.0
    %3485 = vmatpush1.msra.mxu0 %v2603
    %3486 = vmatprep.subr.mxu0 0.0
    %3487 = vmatpush1.msra.mxu0 %v2608
    %3488 = vmatprep.subr.mxu0 0.0
    %3489 = vmatpush1.msra.mxu0 %v2613
    %3490 = vmatprep.subr.mxu0 0.0
    %3491 = vmatpush1.msra.mxu0 %v2618
    %3492 = vmatprep.subr.mxu0 0.0
    %3493 = vmatpush1.msra.mxu0 %v2623
    %3494 = vmatprep.subr.mxu0 0.0
    %3495 = vmatpush1.msra.mxu0 %v2628
    %3496 = vmatprep.subr.mxu0 0.0
    %3497 = vmatpush1.msra.mxu0 %v2633
    %3498 = vmatprep.subr.mxu0 0.0
    %3499 = vmatpush1.msra.mxu0 %v2638
    %3500 = vmatprep.subr.mxu0 0.0
    %3501 = vmatpush1.msra.mxu0 %v2643
    %3502 = vmatprep.subr.mxu0 0.0
    %3503 = vmatpush1.msra.mxu0 %v2648
    %3504 = vmatprep.subr.mxu0 0.0
    %3505 = vmatpush1.msra.mxu0 %v2653
    %3506 = vmatprep.subr.mxu0 0.0
    %3507 = vmatpush1.msra.mxu0 %v2658
    %3508 = vmatprep.subr.mxu0 0.0
    %3509 = vmatpush1.msra.mxu0 %v2663
    %3510 = vmatprep.subr.mxu0 0.0
    %3511 = vmatpush1.msra.mxu0 %v2668
    %3512 = vmatprep.subr.mxu0 0.0
    %3513 = vmatpush1.msra.mxu0 %v2673
    %3514 = vmatprep.subr.mxu0 0.0
    %3515 = vmatpush1.msra.mxu0 %v2678
    %3516 = vmatprep.subr.mxu0 0.0
    %3517 = vmatpush1.msra.mxu0 %v2683
    %3518 = vmatprep.subr.mxu0 0.0
    %3519 = vmatpush1.msra.mxu0 %v2688
    %3520 = vmatprep.subr.mxu0 0.0
    %3521 = vmatpush1.msra.mxu0 %v2693
    %3522 = vmatprep.subr.mxu0 0.0
    %3523 = vmatpush1.msra.mxu0 %v2698
    %3524 = vmatprep.subr.mxu0 0.0
    %3525 = vmatpush1.msra.mxu0 %v2703
    %3526 = vmatprep.subr.mxu0 0.0
    %3527 = vmatpush1.msra.mxu0 %v2708
    %3528 = vmatprep.subr.mxu0 0.0
    %3529 = vmatpush1.msra.mxu0 %v2713
    %3530 = vmatprep.subr.mxu0 0.0
    %3531 = vmatpush1.msra.mxu0 %v2718
    %3532 = vmatprep.mubr.f32.mxu0 %v2237
    %3533 = vmatmul.mubr.f32.gmra.mrb[0].mxu0 %v2236
    %v3534 = vpop.f32.mrb[0].mxu0
    %v3535 = vadd.f32 %v3465, %v3534
    %v3536 = vpop.f32.mrb[0].mxu0
    %3537 = vdwg.mxu0
    %3538 = vmatprep.subr.mxu0 0.0
    %3539 = vmatpush1.msra.mxu0 %v2723
    %3540 = vmatprep.subr.mxu0 0.0
    %3541 = vmatpush1.msra.mxu0 %v2728
    %3542 = vmatprep.subr.mxu0 0.0
    %3543 = vmatpush1.msra.mxu0 0.0
    %3544 = vmatprep.subr.mxu0 0.0
    %3545 = vmatpush1.msra.mxu0 0.0
    %3546 = vmatprep.subr.mxu0 0.0
    %3547 = vmatpush1.msra.mxu0 0.0
    %3548 = vmatprep.subr.mxu0 0.0
    %3549 = vmatpush1.msra.mxu0 0.0
    %3550 = vmatprep.subr.mxu0 0.0
    %3551 = vmatpush1.msra.mxu0 0.0
    %3552 = vmatprep.subr.mxu0 0.0
    %3553 = vmatpush1.msra.mxu0 0.0
    %3554 = vmatprep.subr.mxu0 0.0
    %3555 = vmatpush1.msra.mxu0 0.0
    %3556 = vmatprep.subr.mxu0 0.0
    %3557 = vmatpush1.msra.mxu0 0.0
    %3558 = vmatprep.subr.mxu0 0.0
    %3559 = vmatpush1.msra.mxu0 0.0
    %3560 = vmatprep.subr.mxu0 0.0
    %3561 = vmatpush1.msra.mxu0 0.0
    %3562 = vmatprep.subr.mxu0 0.0
    %3563 = vmatpush1.msra.mxu0 0.0
    %3564 = vmatprep.subr.mxu0 0.0
    %3565 = vmatpush1.msra.mxu0 0.0
    %3566 = vmatprep.subr.mxu0 0.0
    %3567 = vmatpush1.msra.mxu0 0.0
    %3568 = vmatprep.subr.mxu0 0.0
    %3569 = vmatpush1.msra.mxu0 0.0
    %3570 = vmatprep.subr.mxu0 0.0
    %3571 = vmatpush1.msra.mxu0 0.0
    %3572 = vmatprep.subr.mxu0 0.0
    %3573 = vmatpush1.msra.mxu0 0.0
    %3574 = vmatprep.subr.mxu0 0.0
    %3575 = vmatpush1.msra.mxu0 0.0
    %3576 = vmatprep.subr.mxu0 0.0
    %3577 = vmatpush1.msra.mxu0 0.0
    %3578 = vmatprep.subr.mxu0 0.0
    %3579 = vmatpush1.msra.mxu0 0.0
    %3580 = vmatprep.subr.mxu0 0.0
    %3581 = vmatpush1.msra.mxu0 0.0
    %3582 = vmatprep.subr.mxu0 0.0
    %3583 = vmatpush1.msra.mxu0 0.0
    %3584 = vmatprep.subr.mxu0 0.0
    %3585 = vmatpush1.msra.mxu0 0.0
    %3586 = vmatprep.subr.mxu0 0.0
    %3587 = vmatpush1.msra.mxu0 0.0
    %3588 = vmatprep.subr.mxu0 0.0
    %3589 = vmatpush1.msra.mxu0 0.0
    %3590 = vmatprep.subr.mxu0 0.0
    %3591 = vmatpush1.msra.mxu0 0.0
    %3592 = vmatprep.subr.mxu0 0.0
    %3593 = vmatpush1.msra.mxu0 0.0
    %3594 = vmatprep.subr.mxu0 0.0
    %3595 = vmatpush1.msra.mxu0 0.0
    %3596 = vmatprep.subr.mxu0 0.0
    %3597 = vmatpush1.msra.mxu0 0.0
    %3598 = vmatprep.subr.mxu0 0.0
    %3599 = vmatpush1.msra.mxu0 0.0
    %3600 = vmatprep.subr.mxu0 0.0
    %3601 = vmatpush1.msra.mxu0 0.0
    %3602 = vmatprep.mubr.f32.mxu0 0.0
    %3603 = vmatmul.mubr.f32.gmra.mrb[0].mxu0 %v2758
    %v3604 = vpop.f32.mrb[0].mxu0
    %v3605 = vadd.f32 %v3535, %v3604
    %v3606 = vpop.f32.mrb[0].mxu0
    %3607 = vdwg.mxu0
    %v3608 = vmax.f32 %v3040, 0.0
    %v3609 = vmax.f32 %v3042, 0.0
    %v3610 = vmax.f32 %v3324, 0.0
    %v3611 = vmax.f32 %v3326, 0.0
    %v3612 = vmax.f32 %v3605, 0.0
    %v3618 = vcombine.low %v3608, %v3609
    %v3619 = vcombine.low %v3610, %v3611
    %v3621 = vunpack.c.l.s4 1983009808
    %v3622 = vunpack.c.0.s8 %v3621
    %v3623 = vlaneseq
    %v3624 = vshrl.u32 %v3623, 7
    %v3625 = vsub.s32 %v3622, %v3624
    %v3626 = vrot.slane %v3618, %v3625
    %v3628 = vunpack.c.l.s4 1983009808
    %v3629 = vunpack.c.0.s8 %v3628
    %v3630 = vlaneseq
    %v3631 = vshrl.u32 %v3630, 7
    %v3632 = vsub.s32 %v3629, %v3631
    %v3633 = vrot.slane %v3619, %v3632
    %v3634 = vcombine.low %v3626, %v3633
    %v3636 = vunpack.c.l.s4 1983009808
    %v3637 = vunpack.c.0.s8 %v3636
    %v3638 = vlaneseq
    %v3639 = vshrl.u32 %v3638, 7
    %v3640 = vsub.s32 %v3637, %v3639
    %v3641 = vrot.slane %v3612, %v3640
    %3644 = vst [vmem:[#allocation14] sm:$0xff] %v3634
    %vm3645 = vcmask 517120
    %3646 = vst.msk [vmem:[#allocation14 + $0x8] sm:$0x3] %vm3645, %v3641
    // Predicated region
    $region58: #{tpu_custom_call.1} parent=1 // pred_check
      _
    $region59: #{tpu_custom_call.1} parent=1 // pred_check_branch
      %3648 = sbr.rel (0) target = $region61
    $region60: #{tpu_custom_call.1} parent=1 // pred_region
      %s3650 = ssub.s32 160, 160
      %3651 = vsyncadd [#allocation4], %s3650
      %s3653 = sshll.u32 [#allocation14], 4
      %s3654 = int_to_ptr.vmem [resolvable:$true] %s3653
      %3656 = dma.vmem_to_hbm [thread:$0]  %s3654, 160, %s7, [#allocation4]
    $region61: #{tpu_custom_call.1} parent=1 // pred_fallthru
      _
    // Predicated region
    $region62: #{tpu_custom_call.1} parent=1 // pred_check
      _
    $region63: #{tpu_custom_call.1} parent=1 // pred_check_branch
      %3658 = sbr.rel (0) target = $region65
    $region64: #{tpu_custom_call.1} parent=1 // pred_region
      %3659 = dma.done [#allocation4], 160
    $region65: #{tpu_custom_call.1} parent=1 // pred_fallthru
      _
    %3660 = vsyncpa [#allocation3], 1
    %3661 = vsyncpa [#allocation6], 1
    %3662 = vsyncpa [#allocation9], 1
    %3663 = vsyncpa [#allocation12], 1
    %3664 = vsyncpa [#allocation4], 1

</llo_original>
